<compile_context>
chip_gen: v6e
topology: v6e:2x2x1
jax: 0.10.0
libtpu: 0.0.40
codegen_flags: <defaults>
</compile_context>

<pallas_src>
import jax
import jax.numpy as jnp
from jax.experimental import pallas as pl
from jax.experimental.pallas import tpu as pltpu


def _round_up(n, m):
    return ((n + m - 1) // m) * m


def _fcnet_kernel(x_ref, w1_ref, b1_ref, w2_ref, b2_ref, w3_ref, b3_ref, o_ref):
    # x_ref: (TB, 784) bf16 activation tile; weights bf16; biases f32.
    x = x_ref[...]

    # layer1: Linear(784 -> 1024) + ReLU   (bf16 MXU matmul, f32 accumulation)
    h1 = jnp.dot(x, w1_ref[...], preferred_element_type=jnp.float32)
    h1 = jnp.maximum(h1 + b1_ref[...], 0.0)

    # layer2: Linear(1024 -> 1024) + ReLU
    h2 = jnp.dot(h1.astype(jnp.bfloat16), w2_ref[...],
                 preferred_element_type=jnp.float32)
    h2 = jnp.maximum(h2 + b2_ref[...], 0.0)

    # layer3: Linear(1024 -> 10, zero-padded to 128 lanes) + ReLU
    h3 = jnp.dot(h2.astype(jnp.bfloat16), w3_ref[...],
                 preferred_element_type=jnp.float32)
    o_ref[...] = jnp.maximum(h3 + b3_ref[...], 0.0).astype(o_ref.dtype)


def init_params(key, d_in=784, hidden=1024, d_out=10):
    """Deterministic synthetic params in logical layout: weights (in, out) = torch W.T, f32."""
    k1, k2, k3, k4, k5, k6 = jax.random.split(key, 6)
    w1 = jax.random.normal(k1, (d_in, hidden), jnp.float32) * 0.02
    b1 = jax.random.normal(k2, (hidden,), jnp.float32) * 0.02
    w2 = jax.random.normal(k3, (hidden, hidden), jnp.float32) * 0.02
    b2 = jax.random.normal(k4, (hidden,), jnp.float32) * 0.02
    w3 = jax.random.normal(k5, (hidden, d_out), jnp.float32) * 0.02
    b3 = jax.random.normal(k6, (d_out,), jnp.float32) * 0.02
    return (w1, b1, w2, b2, w3, b3)


def prepare_params(params, lane=128):
    """ONE-TIME conversion to kernel layout (hoisted out of the forward pass):
    bf16 weights (MXU-native), f32 (1, out) biases, last-layer out dim zero-padded
    to a multiple of 128 lanes for unmasked lane-dense output stores."""
    w1, b1, w2, b2, w3, b3 = params
    d_out = w3.shape[1]
    d_out_p = _round_up(d_out, lane)
    w3_p = jnp.zeros((w3.shape[0], d_out_p), jnp.bfloat16).at[:, :d_out].set(
        w3.astype(jnp.bfloat16))
    b3_p = jnp.zeros((1, d_out_p), jnp.float32).at[:, :d_out].set(
        b3.reshape(1, -1).astype(jnp.float32))
    return (w1.astype(jnp.bfloat16), b1.reshape(1, -1).astype(jnp.float32),
            w2.astype(jnp.bfloat16), b2.reshape(1, -1).astype(jnp.float32),
            w3_p, b3_p)


def fcnet_forward(x, prepared, d_out=10, tb=512):
    """x: (B, C, H, W) float32 (NCHW). prepared: output of prepare_params().
    Returns (B, d_out) float32."""
    w1, b1, w2, b2, w3_p, b3_p = prepared
    B = x.shape[0]
    d_in = x.shape[1] * x.shape[2] * x.shape[3]
    d_out_p = w3_p.shape[1]

    # Flatten (same as torch .view(B, -1)) and cast to bf16 once in the wrapper
    # -> halves the streamed activation bytes; no in-kernel cast.
    x_flat = x.reshape(B, d_in).astype(jnp.bfloat16)

    # Adaptive batch tiling: snug single tile for small/awkward B, 512-row
    # (256-multiple) tiles for large B.  Rows padded with zeros; padded rows
    # compute ReLU(bias) and are sliced off below.
    b_pad = _round_up(B, 16)
    TB = b_pad if b_pad <= tb else tb
    grid_b = pl.cdiv(b_pad, TB)
    b_p = grid_b * TB
    if b_p == B:
        x_p = x_flat
    else:
        x_p = jnp.zeros((b_p, d_in), jnp.bfloat16).at[:B, :].set(x_flat)

    # Weights / biases: VMEM-resident across all batch tiles (constant index_map).
    resident = lambda arr: pl.BlockSpec(arr.shape, lambda i: (0,) * arr.ndim)

    out_p = pl.pallas_call(
        _fcnet_kernel,
        out_shape=jax.ShapeDtypeStruct((b_p, d_out_p), jnp.float32),
        grid_spec=pltpu.PrefetchScalarGridSpec(
            num_scalar_prefetch=0,
            grid=(grid_b,),
            in_specs=[
                pl.BlockSpec((TB, d_in), lambda i: (i, 0)),  # activations: batch-tiled
                resident(w1), resident(b1),
                resident(w2), resident(b2),
                resident(w3_p), resident(b3_p),
            ],
            out_specs=pl.BlockSpec((TB, d_out_p), lambda i: (i, 0)),
        ),
        compiler_params=pltpu.CompilerParams(
            dimension_semantics=("parallel",),   # batch tiles shard across TCs (v7x)
            vmem_limit_bytes=48 << 20,           # dbl-buffered bf16 weights + TB=512 tiles; v7x-safe
        ),
    )(x_p, w1, b1, w2, b2, w3_p, b3_p)

    return out_p[:B, :d_out]


if __name__ == "__main__":
    key = jax.random.PRNGKey(0)
    kx, kp = jax.random.split(key)

    # Module default inputShape=[1, 28, 28]; small batch=2.
    B, C, H, W = 2, 1, 28, 28
    x = jax.random.normal(kx, (B, C, H, W), jnp.float32)

    raw_params = init_params(kp, d_in=C * H * W, hidden=1024, d_out=10)
    prepared = prepare_params(raw_params)     # one-time, outside the forward pass

    fwd = jax.jit(fcnet_forward, static_argnames=("d_out", "tb"))
    out = jax.block_until_ready(fwd(x, prepared))

    # Reference in plain JAX with the same bf16-weight / bf16-activation /
    # f32-accumulate math, from the unpadded raw params.
    w1, b1, w2, b2, w3, b3 = raw_params
    xf = x.reshape(B, -1).astype(jnp.bfloat16)
    r = jnp.maximum(jnp.dot(xf, w1.astype(jnp.bfloat16),
                            preferred_element_type=jnp.float32) + b1, 0.0)
    r = jnp.maximum(jnp.dot(r.astype(jnp.bfloat16), w2.astype(jnp.bfloat16),
                            preferred_element_type=jnp.float32) + b2, 0.0)
    r = jnp.maximum(jnp.dot(r.astype(jnp.bfloat16), w3.astype(jnp.bfloat16),
                            preferred_element_type=jnp.float32) + b3, 0.0)

    assert out.shape == (B, 10)
    assert jnp.allclose(out, r, atol=2e-3, rtol=2e-3), float(jnp.max(jnp.abs(out - r)))

    print("KERNEL_OK")
</pallas_src>

<mosaic_0001>
module attributes {stable_mosaic.version = 11 : i64} {
  func.func @_fcnet_kernel(%arg0: i32, %arg1: memref<16x784xbf16, #tpu.memory_space<vmem>>, %arg2: memref<784x1024xbf16, #tpu.memory_space<vmem>>, %arg3: memref<1x1024xf32, #tpu.memory_space<vmem>>, %arg4: memref<1024x1024xbf16, #tpu.memory_space<vmem>>, %arg5: memref<1x1024xf32, #tpu.memory_space<vmem>>, %arg6: memref<1024x128xbf16, #tpu.memory_space<vmem>>, %arg7: memref<1x128xf32, #tpu.memory_space<vmem>>, %arg8: memref<16x128xf32, #tpu.memory_space<vmem>>) attributes {dimension_semantics = [#tpu.dimension_semantics<parallel>], iteration_bounds = array<i64: 1>, scalar_prefetch = 0 : i64, scratch_operands = 0 : i64, tpu.core_type = #tpu.core_type<tc>, window_params = [{transform_indices = @transform_0, window_bounds = array<i64: 16, 784>}, {pipeline_mode = #tpu.pipeline_mode<synchronous>, transform_indices = @transform_1, window_bounds = array<i64: 784, 1024>}, {pipeline_mode = #tpu.pipeline_mode<synchronous>, transform_indices = @transform_2, window_bounds = array<i64: 1, 1024>}, {pipeline_mode = #tpu.pipeline_mode<synchronous>, transform_indices = @transform_3, window_bounds = array<i64: 1024, 1024>}, {pipeline_mode = #tpu.pipeline_mode<synchronous>, transform_indices = @transform_4, window_bounds = array<i64: 1, 1024>}, {pipeline_mode = #tpu.pipeline_mode<synchronous>, transform_indices = @transform_5, window_bounds = array<i64: 1024, 128>}, {pipeline_mode = #tpu.pipeline_mode<synchronous>, transform_indices = @transform_6, window_bounds = array<i64: 1, 128>}, {transform_indices = @transform_7, window_bounds = array<i64: 16, 128>}]} {
    %c0 = arith.constant 0 : index
    %c0_0 = arith.constant 0 : index
    %0 = vector.load %arg1[%c0, %c0_0] : memref<16x784xbf16, #tpu.memory_space<vmem>>, vector<16x784xbf16>
    %c0_1 = arith.constant 0 : index
    %c0_2 = arith.constant 0 : index
    %1 = vector.load %arg2[%c0_1, %c0_2] : memref<784x1024xbf16, #tpu.memory_space<vmem>>, vector<784x1024xbf16>
    %cst = arith.constant dense<0.000000e+00> : vector<16x1024xf32>
    %2 = tpu.matmul %0, %1, %cst {dimension_numbers = #tpu.dot_dimension_numbers<[1], [0], [0], [1], [0, 0, 1, 1], [], []>} : vector<16x784xbf16>, vector<784x1024xbf16>, vector<16x1024xf32> -> vector<16x1024xf32>
    %c0_3 = arith.constant 0 : index
    %c0_4 = arith.constant 0 : index
    %3 = vector.load %arg3[%c0_3, %c0_4] : memref<1x1024xf32, #tpu.memory_space<vmem>>, vector<1x1024xf32>
    %4 = vector.broadcast %3 : vector<1x1024xf32> to vector<16x1024xf32>
    %5 = arith.addf %2, %4 : vector<16x1024xf32>
    %cst_5 = arith.constant 0.000000e+00 : f32
    %6 = vector.broadcast %cst_5 : f32 to vector<16x1024xf32>
    %7 = arith.maximumf %5, %6 : vector<16x1024xf32>
    %8 = arith.truncf %7 : vector<16x1024xf32> to vector<16x1024xbf16>
    %c0_6 = arith.constant 0 : index
    %c0_7 = arith.constant 0 : index
    %9 = vector.load %arg4[%c0_6, %c0_7] : memref<1024x1024xbf16, #tpu.memory_space<vmem>>, vector<1024x1024xbf16>
    %cst_8 = arith.constant dense<0.000000e+00> : vector<16x1024xf32>
    %10 = tpu.matmul %8, %9, %cst_8 {dimension_numbers = #tpu.dot_dimension_numbers<[1], [0], [0], [1], [0, 0, 1, 1], [], []>} : vector<16x1024xbf16>, vector<1024x1024xbf16>, vector<16x1024xf32> -> vector<16x1024xf32>
    %c0_9 = arith.constant 0 : index
    %c0_10 = arith.constant 0 : index
    %11 = vector.load %arg5[%c0_9, %c0_10] : memref<1x1024xf32, #tpu.memory_space<vmem>>, vector<1x1024xf32>
    %12 = vector.broadcast %11 : vector<1x1024xf32> to vector<16x1024xf32>
    %13 = arith.addf %10, %12 : vector<16x1024xf32>
    %cst_11 = arith.constant 0.000000e+00 : f32
    %14 = vector.broadcast %cst_11 : f32 to vector<16x1024xf32>
    %15 = arith.maximumf %13, %14 : vector<16x1024xf32>
    %16 = arith.truncf %15 : vector<16x1024xf32> to vector<16x1024xbf16>
    %c0_12 = arith.constant 0 : index
    %c0_13 = arith.constant 0 : index
    %17 = vector.load %arg6[%c0_12, %c0_13] : memref<1024x128xbf16, #tpu.memory_space<vmem>>, vector<1024x128xbf16>
    %cst_14 = arith.constant dense<0.000000e+00> : vector<16x128xf32>
    %18 = tpu.matmul %16, %17, %cst_14 {dimension_numbers = #tpu.dot_dimension_numbers<[1], [0], [0], [1], [0, 0, 1, 1], [], []>} : vector<16x1024xbf16>, vector<1024x128xbf16>, vector<16x128xf32> -> vector<16x128xf32>
    %c0_15 = arith.constant 0 : index
    %c0_16 = arith.constant 0 : index
    %19 = vector.load %arg7[%c0_15, %c0_16] : memref<1x128xf32, #tpu.memory_space<vmem>>, vector<1x128xf32>
    %20 = vector.broadcast %19 : vector<1x128xf32> to vector<16x128xf32>
    %21 = arith.addf %18, %20 : vector<16x128xf32>
    %cst_17 = arith.constant 0.000000e+00 : f32
    %22 = vector.broadcast %cst_17 : f32 to vector<16x128xf32>
    %23 = arith.maximumf %21, %22 : vector<16x128xf32>
    %c0_18 = arith.constant 0 : index
    %c0_19 = arith.constant 0 : index
    %24 = vector.load %arg8[%c0_18, %c0_19] : memref<16x128xf32, #tpu.memory_space<vmem>>, vector<16x128xf32>
    tpu.vector_store %arg8[%c0_18, %c0_19], %23 {strides = array<i32>} : memref<16x128xf32, #tpu.memory_space<vmem>>, vector<16x128xf32>,
    return
  }
  func.func @transform_0(%arg0: i32) -> (i32, i32) {
    %c0_i32 = arith.constant 0 : i32
    %c0_i32_0 = arith.constant 0 : i32
    return %arg0, %c0_i32 : i32, i32
  }
  func.func @transform_1(%arg0: i32) -> (i32, i32) {
    %c0_i32 = arith.constant 0 : i32
    %c0_i32_0 = arith.constant 0 : i32
    %c0_i32_1 = arith.constant 0 : i32
    return %c0_i32, %c0_i32_0 : i32, i32
  }
  func.func @transform_2(%arg0: i32) -> (i32, i32) {
    %c0_i32 = arith.constant 0 : i32
    %c0_i32_0 = arith.constant 0 : i32
    %c0_i32_1 = arith.constant 0 : i32
    return %c0_i32, %c0_i32_0 : i32, i32
  }
  func.func @transform_3(%arg0: i32) -> (i32, i32) {
    %c0_i32 = arith.constant 0 : i32
    %c0_i32_0 = arith.constant 0 : i32
    %c0_i32_1 = arith.constant 0 : i32
    return %c0_i32, %c0_i32_0 : i32, i32
  }
  func.func @transform_4(%arg0: i32) -> (i32, i32) {
    %c0_i32 = arith.constant 0 : i32
    %c0_i32_0 = arith.constant 0 : i32
    %c0_i32_1 = arith.constant 0 : i32
    return %c0_i32, %c0_i32_0 : i32, i32
  }
  func.func @transform_5(%arg0: i32) -> (i32, i32) {
    %c0_i32 = arith.constant 0 : i32
    %c0_i32_0 = arith.constant 0 : i32
    %c0_i32_1 = arith.constant 0 : i32
    return %c0_i32, %c0_i32_0 : i32, i32
  }
  func.func @transform_6(%arg0: i32) -> (i32, i32) {
    %c0_i32 = arith.constant 0 : i32
    %c0_i32_0 = arith.constant 0 : i32
    %c0_i32_1 = arith.constant 0 : i32
    return %c0_i32, %c0_i32_0 : i32, i32
  }
  func.func @transform_7(%arg0: i32) -> (i32, i32) {
    %c0_i32 = arith.constant 0 : i32
    %c0_i32_0 = arith.constant 0 : i32
    return %arg0, %c0_i32 : i32, i32
  }
}

</mosaic_0001>

<llo_original>
// kernel: fcnet_forward.1
$region0: #{fcnet_forward.1}
  #allocation0 [shape = 'u32[]', space=smem, size = 0x4, offset = 0x4, fixed_abs, tag = 'smem constant byte address 0x4 - core index']
  #allocation1 [shape = 'u32[144,128]{1,0:T(1,128)}', space=vmem, size = 0x12000, scoped, tag = 'internal scratch']
  %s0 = inlined_call_operand.vmem [shape: bf16[16,784], index: 0, kind: input, shape index: {}]
  %s1 = inlined_call_operand.hbm [shape: bf16[784,1024], index: 1, kind: input, shape index: {}]
  %s2 = inlined_call_operand.hbm [shape: f32[1,1024], index: 2, kind: input, shape index: {}]
  %s3 = inlined_call_operand.hbm [shape: bf16[1024,1024], index: 3, kind: input, shape index: {}]
  %s4 = inlined_call_operand.hbm [shape: f32[1,1024], index: 4, kind: input, shape index: {}]
  %s5 = inlined_call_operand.hbm [shape: bf16[1024,128], index: 5, kind: input, shape index: {}]
  %s6 = inlined_call_operand.hbm [shape: f32[1,128], index: 6, kind: input, shape index: {}]
  %s7 = inlined_call_operand.vmem [shape: f32[16,128], index: 7, kind: output, shape index: {}]
  %s8 = sld [smem:[#allocation0]]
  $region62: #{fcnet_forward.1} parent=0
    _
  %s10 = ssub.s32 1, %s8
  %s11 = scalar_select 0, %s10, %s8
  $region1: #{fcnet_forward.1} parent=0
    #allocation2 [shape = 'u8[1605632]{0}', space=vmem, size = 0x188000, scoped, tag = 'input window, operand 1, single buffered']
    #allocation3 [shape = 's32[1]{0}', space=sflag, size = 0x4, scoped, tag = 'scoped memory for fcnet_forward.1']
    #allocation4 [shape = 'u8[4096]{0}', space=vmem, size = 0x1000, scoped, tag = 'input window, operand 2, single buffered']
    #allocation5 [shape = 's32[1]{0}', space=sflag, size = 0x4, scoped, tag = 'scoped memory for fcnet_forward.1']
    #allocation6 [shape = 'u8[2097152]{0}', space=vmem, size = 0x200000, scoped, tag = 'input window, operand 3, single buffered']
    #allocation7 [shape = 'u8[4096]{0}', space=vmem, size = 0x1000, scoped, tag = 'input window, operand 4, single buffered']
    #allocation8 [shape = 's32[1]{0}', space=sflag, size = 0x4, scoped, tag = 'scoped memory for fcnet_forward.1']
    #allocation9 [shape = 'u8[262144]{0}', space=vmem, size = 0x40000, scoped, tag = 'input window, operand 5, single buffered']
    #allocation10 [shape = 'u8[512]{0}', space=vmem, size = 0x400, scoped, tag = 'input window, operand 6, single buffered']
    #allocation11 [shape = 's32[1]{0}', space=sflag, size = 0x4, scoped, tag = 'scoped memory for fcnet_forward.1']
    %12 = vsyncpa [#allocation3], 0
    %13 = vsyncpa [#allocation5], 0
    %14 = vsyncpa [#allocation8], 0
    %15 = vsyncpa [#allocation11], 0
    // Predicated region
    $region2: #{fcnet_forward.1} parent=1 // pred_check
      _
    $region3: #{fcnet_forward.1} parent=1 // pred_check_branch
      %17 = sbr.rel (0) target = $region5
    $region4: #{fcnet_forward.1} parent=1 // pred_region
      _
    $region5: #{fcnet_forward.1} parent=1 // pred_fallthru
      _
    // Predicated region
    $region6: #{fcnet_forward.1} parent=1 // pred_check
      _
    $region7: #{fcnet_forward.1} parent=1 // pred_check_branch
      %19 = sbr.rel (0) target = $region9
    $region8: #{fcnet_forward.1} parent=1 // pred_region
      %s21 = ssub.s32 50176, 50176
      %22 = vsyncadd [#allocation3], %s21
      %s23 = sshll.u32 [#allocation2], 4
      %s24 = int_to_ptr.vmem [resolvable:$true] %s23
      %29 = dma.hbm_to_vmem [thread:$0]  %s1, 50176, %s24, [#allocation3], 512, 512, 32
    $region9: #{fcnet_forward.1} parent=1 // pred_fallthru
      _
    // Predicated region
    $region10: #{fcnet_forward.1} parent=1 // pred_check
      _
    $region11: #{fcnet_forward.1} parent=1 // pred_check_branch
      %31 = sbr.rel (0) target = $region13
    $region12: #{fcnet_forward.1} parent=1 // pred_region
      %s33 = ssub.s32 128, 128
      %34 = vsyncadd [#allocation5], %s33
      %s36 = sshll.u32 [#allocation4], 4
      %s37 = int_to_ptr.vmem [resolvable:$true] %s36
      %39 = dma.hbm_to_vmem [thread:$0]  %s2, 128, %s37, [#allocation5]
    $region13: #{fcnet_forward.1} parent=1 // pred_fallthru
      _
    // Predicated region
    $region14: #{fcnet_forward.1} parent=1 // pred_check
      _
    $region15: #{fcnet_forward.1} parent=1 // pred_check_branch
      %41 = sbr.rel (0) target = $region17
    $region16: #{fcnet_forward.1} parent=1 // pred_region
      %s43 = ssub.s32 65536, 65536
      %44 = vsyncadd [#allocation5], %s43
      %s45 = sshll.u32 [#allocation6], 4
      %s46 = int_to_ptr.vmem [resolvable:$true] %s45
      %51 = dma.hbm_to_vmem [thread:$0]  %s3, 65536, %s46, [#allocation5], 512, 512, 32
    $region17: #{fcnet_forward.1} parent=1 // pred_fallthru
      _
    // Predicated region
    $region18: #{fcnet_forward.1} parent=1 // pred_check
      _
    $region19: #{fcnet_forward.1} parent=1 // pred_check_branch
      %53 = sbr.rel (0) target = $region21
    $region20: #{fcnet_forward.1} parent=1 // pred_region
      %s55 = ssub.s32 128, 128
      %56 = vsyncadd [#allocation8], %s55
      %s58 = sshll.u32 [#allocation7], 4
      %s59 = int_to_ptr.vmem [resolvable:$true] %s58
      %61 = dma.hbm_to_vmem [thread:$0]  %s4, 128, %s59, [#allocation8]
    $region21: #{fcnet_forward.1} parent=1 // pred_fallthru
      _
    // Predicated region
    $region22: #{fcnet_forward.1} parent=1 // pred_check
      _
    $region23: #{fcnet_forward.1} parent=1 // pred_check_branch
      %63 = sbr.rel (0) target = $region25
    $region24: #{fcnet_forward.1} parent=1 // pred_region
      %s65 = ssub.s32 8192, 8192
      %66 = vsyncadd [#allocation8], %s65
      %s67 = sshll.u32 [#allocation9], 4
      %s68 = int_to_ptr.vmem [resolvable:$true] %s67
      %73 = dma.hbm_to_vmem [thread:$0]  %s5, 8192, %s68, [#allocation8], 64, 64, 4
    $region25: #{fcnet_forward.1} parent=1 // pred_fallthru
      _
    // Predicated region
    $region26: #{fcnet_forward.1} parent=1 // pred_check
      _
    $region27: #{fcnet_forward.1} parent=1 // pred_check_branch
      %75 = sbr.rel (0) target = $region29
    $region28: #{fcnet_forward.1} parent=1 // pred_region
      %s77 = ssub.s32 16, 16
      %78 = vsyncadd [#allocation11], %s77
      %s80 = sshll.u32 [#allocation10], 4
      %s81 = int_to_ptr.vmem [resolvable:$true] %s80
      %83 = dma.hbm_to_vmem [thread:$0]  %s6, 16, %s81, [#allocation11]
    $region29: #{fcnet_forward.1} parent=1 // pred_fallthru
      _
    // Predicated region
    $region30: #{fcnet_forward.1} parent=1 // pred_check
      _
    $region31: #{fcnet_forward.1} parent=1 // pred_check_branch
      %85 = sbr.rel (0) target = $region33
    $region32: #{fcnet_forward.1} parent=1 // pred_region
      %86 = dma.done [#allocation3], 50176
    $region33: #{fcnet_forward.1} parent=1 // pred_fallthru
      _
    // Predicated region
    $region34: #{fcnet_forward.1} parent=1 // pred_check
      _
    $region35: #{fcnet_forward.1} parent=1 // pred_check_branch
      %88 = sbr.rel (0) target = $region37
    $region36: #{fcnet_forward.1} parent=1 // pred_region
      %89 = dma.done [#allocation5], 128
    $region37: #{fcnet_forward.1} parent=1 // pred_fallthru
      _
    // Predicated region
    $region38: #{fcnet_forward.1} parent=1 // pred_check
      _
    $region39: #{fcnet_forward.1} parent=1 // pred_check_branch
      %91 = sbr.rel (0) target = $region41
    $region40: #{fcnet_forward.1} parent=1 // pred_region
      %92 = dma.done [#allocation5], 65536
    $region41: #{fcnet_forward.1} parent=1 // pred_fallthru
      _
    // Predicated region
    $region42: #{fcnet_forward.1} parent=1 // pred_check
      _
    $region43: #{fcnet_forward.1} parent=1 // pred_check_branch
      %94 = sbr.rel (0) target = $region45
    $region44: #{fcnet_forward.1} parent=1 // pred_region
      %95 = dma.done [#allocation8], 128
    $region45: #{fcnet_forward.1} parent=1 // pred_fallthru
      _
    // Predicated region
    $region46: #{fcnet_forward.1} parent=1 // pred_check
      _
    $region47: #{fcnet_forward.1} parent=1 // pred_check_branch
      %97 = sbr.rel (0) target = $region49
    $region48: #{fcnet_forward.1} parent=1 // pred_region
      %98 = dma.done [#allocation8], 8192
    $region49: #{fcnet_forward.1} parent=1 // pred_fallthru
      _
    // Predicated region
    $region50: #{fcnet_forward.1} parent=1 // pred_check
      _
    $region51: #{fcnet_forward.1} parent=1 // pred_check_branch
      %100 = sbr.rel (0) target = $region53
    $region52: #{fcnet_forward.1} parent=1 // pred_region
      %101 = dma.done [#allocation11], 16
    $region53: #{fcnet_forward.1} parent=1 // pred_fallthru
      _
    %v103 = vld [vmem:[%s0] sm:$0xff]
    %v104 = vld [vmem:[%s0 + $0x8] sm:$0xff]
    %v105 = vld [vmem:[%s0 + $0x10] sm:$0xff]
    %v106 = vld [vmem:[%s0 + $0x18] sm:$0xf]
    %v107 = vld [vmem:[%s0 + $0x1c] sm:$0xff]
    %v108 = vld [vmem:[%s0 + $0x24] sm:$0xff]
    %v109 = vld [vmem:[%s0 + $0x2c] sm:$0xff]
    %v110 = vld [vmem:[%s0 + $0x34] sm:$0xf]
    %v111 = vld [vmem:[#allocation2] sm:$0xff]
    %v112 = vld [vmem:[#allocation2 + $0x8] sm:$0xff]
    %v113 = vld [vmem:[#allocation2 + $0x10] sm:$0xff]
    %v114 = vld [vmem:[#allocation2 + $0x18] sm:$0xff]
    %v115 = vld [vmem:[#allocation2 + $0x20] sm:$0xff]
    %v116 = vld [vmem:[#allocation2 + $0x28] sm:$0xff]
    %v117 = vld [vmem:[#allocation2 + $0x30] sm:$0xff]
    %v118 = vld [vmem:[#allocation2 + $0x38] sm:$0xff]
    %v119 = vld [vmem:[#allocation2 + $0x40] sm:$0xff]
    %v120 = vld [vmem:[#allocation2 + $0x48] sm:$0xff]
    %v121 = vld [vmem:[#allocation2 + $0x50] sm:$0xff]
    %v122 = vld [vmem:[#allocation2 + $0x58] sm:$0xff]
    %v123 = vld [vmem:[#allocation2 + $0x60] sm:$0xff]
    %v124 = vld [vmem:[#allocation2 + $0x68] sm:$0xff]
    %v125 = vld [vmem:[#allocation2 + $0x70] sm:$0xff]
    %v126 = vld [vmem:[#allocation2 + $0x78] sm:$0xff]
    %v127 = vld [vmem:[#allocation2 + $0x80] sm:$0xff]
    %v128 = vld [vmem:[#allocation2 + $0x88] sm:$0xff]
    %v129 = vld [vmem:[#allocation2 + $0x90] sm:$0xff]
    %v130 = vld [vmem:[#allocation2 + $0x98] sm:$0xff]
    %v131 = vld [vmem:[#allocation2 + $0xa0] sm:$0xff]
    %v132 = vld [vmem:[#allocation2 + $0xa8] sm:$0xff]
    %v133 = vld [vmem:[#allocation2 + $0xb0] sm:$0xff]
    %v134 = vld [vmem:[#allocation2 + $0xb8] sm:$0xff]
    %v135 = vld [vmem:[#allocation2 + $0xc0] sm:$0xff]
    %v136 = vld [vmem:[#allocation2 + $0xc8] sm:$0xff]
    %v137 = vld [vmem:[#allocation2 + $0xd0] sm:$0xff]
    %v138 = vld [vmem:[#allocation2 + $0xd8] sm:$0xff]
    %v139 = vld [vmem:[#allocation2 + $0xe0] sm:$0xff]
    %v140 = vld [vmem:[#allocation2 + $0xe8] sm:$0xff]
    %v141 = vld [vmem:[#allocation2 + $0xf0] sm:$0xff]
    %v142 = vld [vmem:[#allocation2 + $0xf8] sm:$0xff]
    %v143 = vld [vmem:[#allocation2 + $0x100] sm:$0xff]
    %v144 = vld [vmem:[#allocation2 + $0x108] sm:$0xff]
    %v145 = vld [vmem:[#allocation2 + $0x110] sm:$0xff]
    %v146 = vld [vmem:[#allocation2 + $0x118] sm:$0xff]
    %v147 = vld [vmem:[#allocation2 + $0x120] sm:$0xff]
    %v148 = vld [vmem:[#allocation2 + $0x128] sm:$0xff]
    %v149 = vld [vmem:[#allocation2 + $0x130] sm:$0xff]
    %v150 = vld [vmem:[#allocation2 + $0x138] sm:$0xff]
    %v151 = vld [vmem:[#allocation2 + $0x140] sm:$0xff]
    %v152 = vld [vmem:[#allocation2 + $0x148] sm:$0xff]
    %v153 = vld [vmem:[#allocation2 + $0x150] sm:$0xff]
    %v154 = vld [vmem:[#allocation2 + $0x158] sm:$0xff]
    %v155 = vld [vmem:[#allocation2 + $0x160] sm:$0xff]
    %v156 = vld [vmem:[#allocation2 + $0x168] sm:$0xff]
    %v157 = vld [vmem:[#allocation2 + $0x170] sm:$0xff]
    %v158 = vld [vmem:[#allocation2 + $0x178] sm:$0xff]
    %v159 = vld [vmem:[#allocation2 + $0x180] sm:$0xff]
    %v160 = vld [vmem:[#allocation2 + $0x188] sm:$0xff]
    %v161 = vld [vmem:[#allocation2 + $0x190] sm:$0xff]
    %v162 = vld [vmem:[#allocation2 + $0x198] sm:$0xff]
    %v163 = vld [vmem:[#allocation2 + $0x1a0] sm:$0xff]
    %v164 = vld [vmem:[#allocation2 + $0x1a8] sm:$0xff]
    %v165 = vld [vmem:[#allocation2 + $0x1b0] sm:$0xff]
    %v166 = vld [vmem:[#allocation2 + $0x1b8] sm:$0xff]
    %v167 = vld [vmem:[#allocation2 + $0x1c0] sm:$0xff]
    %v168 = vld [vmem:[#allocation2 + $0x1c8] sm:$0xff]
    %v169 = vld [vmem:[#allocation2 + $0x1d0] sm:$0xff]
    %v170 = vld [vmem:[#allocation2 + $0x1d8] sm:$0xff]
    %v171 = vld [vmem:[#allocation2 + $0x1e0] sm:$0xff]
    %v172 = vld [vmem:[#allocation2 + $0x1e8] sm:$0xff]
    %v173 = vld [vmem:[#allocation2 + $0x1f0] sm:$0xff]
    %v174 = vld [vmem:[#allocation2 + $0x1f8] sm:$0xff]
    %v175 = vld [vmem:[#allocation2 + $0x200] sm:$0xff]
    %v176 = vld [vmem:[#allocation2 + $0x208] sm:$0xff]
    %v177 = vld [vmem:[#allocation2 + $0x210] sm:$0xff]
    %v178 = vld [vmem:[#allocation2 + $0x218] sm:$0xff]
    %v179 = vld [vmem:[#allocation2 + $0x220] sm:$0xff]
    %v180 = vld [vmem:[#allocation2 + $0x228] sm:$0xff]
    %v181 = vld [vmem:[#allocation2 + $0x230] sm:$0xff]
    %v182 = vld [vmem:[#allocation2 + $0x238] sm:$0xff]
    %v183 = vld [vmem:[#allocation2 + $0x240] sm:$0xff]
    %v184 = vld [vmem:[#allocation2 + $0x248] sm:$0xff]
    %v185 = vld [vmem:[#allocation2 + $0x250] sm:$0xff]
    %v186 = vld [vmem:[#allocation2 + $0x258] sm:$0xff]
    %v187 = vld [vmem:[#allocation2 + $0x260] sm:$0xff]
    %v188 = vld [vmem:[#allocation2 + $0x268] sm:$0xff]
    %v189 = vld [vmem:[#allocation2 + $0x270] sm:$0xff]
    %v190 = vld [vmem:[#allocation2 + $0x278] sm:$0xff]
    %v191 = vld [vmem:[#allocation2 + $0x280] sm:$0xff]
    %v192 = vld [vmem:[#allocation2 + $0x288] sm:$0xff]
    %v193 = vld [vmem:[#allocation2 + $0x290] sm:$0xff]
    %v194 = vld [vmem:[#allocation2 + $0x298] sm:$0xff]
    %v195 = vld [vmem:[#allocation2 + $0x2a0] sm:$0xff]
    %v196 = vld [vmem:[#allocation2 + $0x2a8] sm:$0xff]
    %v197 = vld [vmem:[#allocation2 + $0x2b0] sm:$0xff]
    %v198 = vld [vmem:[#allocation2 + $0x2b8] sm:$0xff]
    %v199 = vld [vmem:[#allocation2 + $0x2c0] sm:$0xff]
    %v200 = vld [vmem:[#allocation2 + $0x2c8] sm:$0xff]
    %v201 = vld [vmem:[#allocation2 + $0x2d0] sm:$0xff]
    %v202 = vld [vmem:[#allocation2 + $0x2d8] sm:$0xff]
    %v203 = vld [vmem:[#allocation2 + $0x2e0] sm:$0xff]
    %v204 = vld [vmem:[#allocation2 + $0x2e8] sm:$0xff]
    %v205 = vld [vmem:[#allocation2 + $0x2f0] sm:$0xff]
    %v206 = vld [vmem:[#allocation2 + $0x2f8] sm:$0xff]
    %v207 = vld [vmem:[#allocation2 + $0x300] sm:$0xff]
    %v208 = vld [vmem:[#allocation2 + $0x308] sm:$0xff]
    %v209 = vld [vmem:[#allocation2 + $0x310] sm:$0xff]
    %v210 = vld [vmem:[#allocation2 + $0x318] sm:$0xff]
    %v211 = vld [vmem:[#allocation2 + $0x320] sm:$0xff]
    %v212 = vld [vmem:[#allocation2 + $0x328] sm:$0xff]
    %v213 = vld [vmem:[#allocation2 + $0x330] sm:$0xff]
    %v214 = vld [vmem:[#allocation2 + $0x338] sm:$0xff]
    %v215 = vld [vmem:[#allocation2 + $0x340] sm:$0xff]
    %v216 = vld [vmem:[#allocation2 + $0x348] sm:$0xff]
    %v217 = vld [vmem:[#allocation2 + $0x350] sm:$0xff]
    %v218 = vld [vmem:[#allocation2 + $0x358] sm:$0xff]
    %v219 = vld [vmem:[#allocation2 + $0x360] sm:$0xff]
    %v220 = vld [vmem:[#allocation2 + $0x368] sm:$0xff]
    %v221 = vld [vmem:[#allocation2 + $0x370] sm:$0xff]
    %v222 = vld [vmem:[#allocation2 + $0x378] sm:$0xff]
    %v223 = vld [vmem:[#allocation2 + $0x380] sm:$0xff]
    %v224 = vld [vmem:[#allocation2 + $0x388] sm:$0xff]
    %v225 = vld [vmem:[#allocation2 + $0x390] sm:$0xff]
    %v226 = vld [vmem:[#allocation2 + $0x398] sm:$0xff]
    %v227 = vld [vmem:[#allocation2 + $0x3a0] sm:$0xff]
    %v228 = vld [vmem:[#allocation2 + $0x3a8] sm:$0xff]
    %v229 = vld [vmem:[#allocation2 + $0x3b0] sm:$0xff]
    %v230 = vld [vmem:[#allocation2 + $0x3b8] sm:$0xff]
    %v231 = vld [vmem:[#allocation2 + $0x3c0] sm:$0xff]
    %v232 = vld [vmem:[#allocation2 + $0x3c8] sm:$0xff]
    %v233 = vld [vmem:[#allocation2 + $0x3d0] sm:$0xff]
    %v234 = vld [vmem:[#allocation2 + $0x3d8] sm:$0xff]
    %v235 = vld [vmem:[#allocation2 + $0x3e0] sm:$0xff]
    %v236 = vld [vmem:[#allocation2 + $0x3e8] sm:$0xff]
    %v237 = vld [vmem:[#allocation2 + $0x3f0] sm:$0xff]
    %v238 = vld [vmem:[#allocation2 + $0x3f8] sm:$0xff]
    %v239 = vld [vmem:[#allocation2 + $0x400] sm:$0xff]
    %v240 = vld [vmem:[#allocation2 + $0x408] sm:$0xff]
    %v241 = vld [vmem:[#allocation2 + $0x410] sm:$0xff]
    %v242 = vld [vmem:[#allocation2 + $0x418] sm:$0xff]
    %v243 = vld [vmem:[#allocation2 + $0x420] sm:$0xff]
    %v244 = vld [vmem:[#allocation2 + $0x428] sm:$0xff]
    %v245 = vld [vmem:[#allocation2 + $0x430] sm:$0xff]
    %v246 = vld [vmem:[#allocation2 + $0x438] sm:$0xff]
    %v247 = vld [vmem:[#allocation2 + $0x440] sm:$0xff]
    %v248 = vld [vmem:[#allocation2 + $0x448] sm:$0xff]
    %v249 = vld [vmem:[#allocation2 + $0x450] sm:$0xff]
    %v250 = vld [vmem:[#allocation2 + $0x458] sm:$0xff]
    %v251 = vld [vmem:[#allocation2 + $0x460] sm:$0xff]
    %v252 = vld [vmem:[#allocation2 + $0x468] sm:$0xff]
    %v253 = vld [vmem:[#allocation2 + $0x470] sm:$0xff]
    %v254 = vld [vmem:[#allocation2 + $0x478] sm:$0xff]
    %v255 = vld [vmem:[#allocation2 + $0x480] sm:$0xff]
    %v256 = vld [vmem:[#allocation2 + $0x488] sm:$0xff]
    %v257 = vld [vmem:[#allocation2 + $0x490] sm:$0xff]
    %v258 = vld [vmem:[#allocation2 + $0x498] sm:$0xff]
    %v259 = vld [vmem:[#allocation2 + $0x4a0] sm:$0xff]
    %v260 = vld [vmem:[#allocation2 + $0x4a8] sm:$0xff]
    %v261 = vld [vmem:[#allocation2 + $0x4b0] sm:$0xff]
    %v262 = vld [vmem:[#allocation2 + $0x4b8] sm:$0xff]
    %v263 = vld [vmem:[#allocation2 + $0x4c0] sm:$0xff]
    %v264 = vld [vmem:[#allocation2 + $0x4c8] sm:$0xff]
    %v265 = vld [vmem:[#allocation2 + $0x4d0] sm:$0xff]
    %v266 = vld [vmem:[#allocation2 + $0x4d8] sm:$0xff]
    %v267 = vld [vmem:[#allocation2 + $0x4e0] sm:$0xff]
    %v268 = vld [vmem:[#allocation2 + $0x4e8] sm:$0xff]
    %v269 = vld [vmem:[#allocation2 + $0x4f0] sm:$0xff]
    %v270 = vld [vmem:[#allocation2 + $0x4f8] sm:$0xff]
    %v271 = vld [vmem:[#allocation2 + $0x500] sm:$0xff]
    %v272 = vld [vmem:[#allocation2 + $0x508] sm:$0xff]
    %v273 = vld [vmem:[#allocation2 + $0x510] sm:$0xff]
    %v274 = vld [vmem:[#allocation2 + $0x518] sm:$0xff]
    %v275 = vld [vmem:[#allocation2 + $0x520] sm:$0xff]
    %v276 = vld [vmem:[#allocation2 + $0x528] sm:$0xff]
    %v277 = vld [vmem:[#allocation2 + $0x530] sm:$0xff]
    %v278 = vld [vmem:[#allocation2 + $0x538] sm:$0xff]
    %v279 = vld [vmem:[#allocation2 + $0x540] sm:$0xff]
    %v280 = vld [vmem:[#allocation2 + $0x548] sm:$0xff]
    %v281 = vld [vmem:[#allocation2 + $0x550] sm:$0xff]
    %v282 = vld [vmem:[#allocation2 + $0x558] sm:$0xff]
    %v283 = vld [vmem:[#allocation2 + $0x560] sm:$0xff]
    %v284 = vld [vmem:[#allocation2 + $0x568] sm:$0xff]
    %v285 = vld [vmem:[#allocation2 + $0x570] sm:$0xff]
    %v286 = vld [vmem:[#allocation2 + $0x578] sm:$0xff]
    %v287 = vld [vmem:[#allocation2 + $0x580] sm:$0xff]
    %v288 = vld [vmem:[#allocation2 + $0x588] sm:$0xff]
    %v289 = vld [vmem:[#allocation2 + $0x590] sm:$0xff]
    %v290 = vld [vmem:[#allocation2 + $0x598] sm:$0xff]
    %v291 = vld [vmem:[#allocation2 + $0x5a0] sm:$0xff]
    %v292 = vld [vmem:[#allocation2 + $0x5a8] sm:$0xff]
    %v293 = vld [vmem:[#allocation2 + $0x5b0] sm:$0xff]
    %v294 = vld [vmem:[#allocation2 + $0x5b8] sm:$0xff]
    %v295 = vld [vmem:[#allocation2 + $0x5c0] sm:$0xff]
    %v296 = vld [vmem:[#allocation2 + $0x5c8] sm:$0xff]
    %v297 = vld [vmem:[#allocation2 + $0x5d0] sm:$0xff]
    %v298 = vld [vmem:[#allocation2 + $0x5d8] sm:$0xff]
    %v299 = vld [vmem:[#allocation2 + $0x5e0] sm:$0xff]
    %v300 = vld [vmem:[#allocation2 + $0x5e8] sm:$0xff]
    %v301 = vld [vmem:[#allocation2 + $0x5f0] sm:$0xff]
    %v302 = vld [vmem:[#allocation2 + $0x5f8] sm:$0xff]
    %v303 = vld [vmem:[#allocation2 + $0x600] sm:$0xff]
    %v304 = vld [vmem:[#allocation2 + $0x608] sm:$0xff]
    %v305 = vld [vmem:[#allocation2 + $0x610] sm:$0xff]
    %v306 = vld [vmem:[#allocation2 + $0x618] sm:$0xff]
    %v307 = vld [vmem:[#allocation2 + $0x620] sm:$0xff]
    %v308 = vld [vmem:[#allocation2 + $0x628] sm:$0xff]
    %v309 = vld [vmem:[#allocation2 + $0x630] sm:$0xff]
    %v310 = vld [vmem:[#allocation2 + $0x638] sm:$0xff]
    %v311 = vld [vmem:[#allocation2 + $0x640] sm:$0xff]
    %v312 = vld [vmem:[#allocation2 + $0x648] sm:$0xff]
    %v313 = vld [vmem:[#allocation2 + $0x650] sm:$0xff]
    %v314 = vld [vmem:[#allocation2 + $0x658] sm:$0xff]
    %v315 = vld [vmem:[#allocation2 + $0x660] sm:$0xff]
    %v316 = vld [vmem:[#allocation2 + $0x668] sm:$0xff]
    %v317 = vld [vmem:[#allocation2 + $0x670] sm:$0xff]
    %v318 = vld [vmem:[#allocation2 + $0x678] sm:$0xff]
    %v319 = vld [vmem:[#allocation2 + $0x680] sm:$0xff]
    %v320 = vld [vmem:[#allocation2 + $0x688] sm:$0xff]
    %v321 = vld [vmem:[#allocation2 + $0x690] sm:$0xff]
    %v322 = vld [vmem:[#allocation2 + $0x698] sm:$0xff]
    %v323 = vld [vmem:[#allocation2 + $0x6a0] sm:$0xff]
    %v324 = vld [vmem:[#allocation2 + $0x6a8] sm:$0xff]
    %v325 = vld [vmem:[#allocation2 + $0x6b0] sm:$0xff]
    %v326 = vld [vmem:[#allocation2 + $0x6b8] sm:$0xff]
    %v327 = vld [vmem:[#allocation2 + $0x6c0] sm:$0xff]
    %v328 = vld [vmem:[#allocation2 + $0x6c8] sm:$0xff]
    %v329 = vld [vmem:[#allocation2 + $0x6d0] sm:$0xff]
    %v330 = vld [vmem:[#allocation2 + $0x6d8] sm:$0xff]
    %v331 = vld [vmem:[#allocation2 + $0x6e0] sm:$0xff]
    %v332 = vld [vmem:[#allocation2 + $0x6e8] sm:$0xff]
    %v333 = vld [vmem:[#allocation2 + $0x6f0] sm:$0xff]
    %v334 = vld [vmem:[#allocation2 + $0x6f8] sm:$0xff]
    %v335 = vld [vmem:[#allocation2 + $0x700] sm:$0xff]
    %v336 = vld [vmem:[#allocation2 + $0x708] sm:$0xff]
    %v337 = vld [vmem:[#allocation2 + $0x710] sm:$0xff]
    %v338 = vld [vmem:[#allocation2 + $0x718] sm:$0xff]
    %v339 = vld [vmem:[#allocation2 + $0x720] sm:$0xff]
    %v340 = vld [vmem:[#allocation2 + $0x728] sm:$0xff]
    %v341 = vld [vmem:[#allocation2 + $0x730] sm:$0xff]
    %v342 = vld [vmem:[#allocation2 + $0x738] sm:$0xff]
    %v343 = vld [vmem:[#allocation2 + $0x740] sm:$0xff]
    %v344 = vld [vmem:[#allocation2 + $0x748] sm:$0xff]
    %v345 = vld [vmem:[#allocation2 + $0x750] sm:$0xff]
    %v346 = vld [vmem:[#allocation2 + $0x758] sm:$0xff]
    %v347 = vld [vmem:[#allocation2 + $0x760] sm:$0xff]
    %v348 = vld [vmem:[#allocation2 + $0x768] sm:$0xff]
    %v349 = vld [vmem:[#allocation2 + $0x770] sm:$0xff]
    %v350 = vld [vmem:[#allocation2 + $0x778] sm:$0xff]
    %v351 = vld [vmem:[#allocation2 + $0x780] sm:$0xff]
    %v352 = vld [vmem:[#allocation2 + $0x788] sm:$0xff]
    %v353 = vld [vmem:[#allocation2 + $0x790] sm:$0xff]
    %v354 = vld [vmem:[#allocation2 + $0x798] sm:$0xff]
    %v355 = vld [vmem:[#allocation2 + $0x7a0] sm:$0xff]
    %v356 = vld [vmem:[#allocation2 + $0x7a8] sm:$0xff]
    %v357 = vld [vmem:[#allocation2 + $0x7b0] sm:$0xff]
    %v358 = vld [vmem:[#allocation2 + $0x7b8] sm:$0xff]
    %v359 = vld [vmem:[#allocation2 + $0x7c0] sm:$0xff]
    %v360 = vld [vmem:[#allocation2 + $0x7c8] sm:$0xff]
    %v361 = vld [vmem:[#allocation2 + $0x7d0] sm:$0xff]
    %v362 = vld [vmem:[#allocation2 + $0x7d8] sm:$0xff]
    %v363 = vld [vmem:[#allocation2 + $0x7e0] sm:$0xff]
    %v364 = vld [vmem:[#allocation2 + $0x7e8] sm:$0xff]
    %v365 = vld [vmem:[#allocation2 + $0x7f0] sm:$0xff]
    %v366 = vld [vmem:[#allocation2 + $0x7f8] sm:$0xff]
    %v367 = vld [vmem:[#allocation2 + $0x800] sm:$0xff]
    %v368 = vld [vmem:[#allocation2 + $0x808] sm:$0xff]
    %v369 = vld [vmem:[#allocation2 + $0x810] sm:$0xff]
    %v370 = vld [vmem:[#allocation2 + $0x818] sm:$0xff]
    %v371 = vld [vmem:[#allocation2 + $0x820] sm:$0xff]
    %v372 = vld [vmem:[#allocation2 + $0x828] sm:$0xff]
    %v373 = vld [vmem:[#allocation2 + $0x830] sm:$0xff]
    %v374 = vld [vmem:[#allocation2 + $0x838] sm:$0xff]
    %v375 = vld [vmem:[#allocation2 + $0x840] sm:$0xff]
    %v376 = vld [vmem:[#allocation2 + $0x848] sm:$0xff]
    %v377 = vld [vmem:[#allocation2 + $0x850] sm:$0xff]
    %v378 = vld [vmem:[#allocation2 + $0x858] sm:$0xff]
    %v379 = vld [vmem:[#allocation2 + $0x860] sm:$0xff]
    %v380 = vld [vmem:[#allocation2 + $0x868] sm:$0xff]
    %v381 = vld [vmem:[#allocation2 + $0x870] sm:$0xff]
    %v382 = vld [vmem:[#allocation2 + $0x878] sm:$0xff]
    %v383 = vld [vmem:[#allocation2 + $0x880] sm:$0xff]
    %v384 = vld [vmem:[#allocation2 + $0x888] sm:$0xff]
    %v385 = vld [vmem:[#allocation2 + $0x890] sm:$0xff]
    %v386 = vld [vmem:[#allocation2 + $0x898] sm:$0xff]
    %v387 = vld [vmem:[#allocation2 + $0x8a0] sm:$0xff]
    %v388 = vld [vmem:[#allocation2 + $0x8a8] sm:$0xff]
    %v389 = vld [vmem:[#allocation2 + $0x8b0] sm:$0xff]
    %v390 = vld [vmem:[#allocation2 + $0x8b8] sm:$0xff]
    %v391 = vld [vmem:[#allocation2 + $0x8c0] sm:$0xff]
    %v392 = vld [vmem:[#allocation2 + $0x8c8] sm:$0xff]
    %v393 = vld [vmem:[#allocation2 + $0x8d0] sm:$0xff]
    %v394 = vld [vmem:[#allocation2 + $0x8d8] sm:$0xff]
    %v395 = vld [vmem:[#allocation2 + $0x8e0] sm:$0xff]
    %v396 = vld [vmem:[#allocation2 + $0x8e8] sm:$0xff]
    %v397 = vld [vmem:[#allocation2 + $0x8f0] sm:$0xff]
    %v398 = vld [vmem:[#allocation2 + $0x8f8] sm:$0xff]
    %v399 = vld [vmem:[#allocation2 + $0x900] sm:$0xff]
    %v400 = vld [vmem:[#allocation2 + $0x908] sm:$0xff]
    %v401 = vld [vmem:[#allocation2 + $0x910] sm:$0xff]
    %v402 = vld [vmem:[#allocation2 + $0x918] sm:$0xff]
    %v403 = vld [vmem:[#allocation2 + $0x920] sm:$0xff]
    %v404 = vld [vmem:[#allocation2 + $0x928] sm:$0xff]
    %v405 = vld [vmem:[#allocation2 + $0x930] sm:$0xff]
    %v406 = vld [vmem:[#allocation2 + $0x938] sm:$0xff]
    %v407 = vld [vmem:[#allocation2 + $0x940] sm:$0xff]
    %v408 = vld [vmem:[#allocation2 + $0x948] sm:$0xff]
    %v409 = vld [vmem:[#allocation2 + $0x950] sm:$0xff]
    %v410 = vld [vmem:[#allocation2 + $0x958] sm:$0xff]
    %v411 = vld [vmem:[#allocation2 + $0x960] sm:$0xff]
    %v412 = vld [vmem:[#allocation2 + $0x968] sm:$0xff]
    %v413 = vld [vmem:[#allocation2 + $0x970] sm:$0xff]
    %v414 = vld [vmem:[#allocation2 + $0x978] sm:$0xff]
    %v415 = vld [vmem:[#allocation2 + $0x980] sm:$0xff]
    %v416 = vld [vmem:[#allocation2 + $0x988] sm:$0xff]
    %v417 = vld [vmem:[#allocation2 + $0x990] sm:$0xff]
    %v418 = vld [vmem:[#allocation2 + $0x998] sm:$0xff]
    %v419 = vld [vmem:[#allocation2 + $0x9a0] sm:$0xff]
    %v420 = vld [vmem:[#allocation2 + $0x9a8] sm:$0xff]
    %v421 = vld [vmem:[#allocation2 + $0x9b0] sm:$0xff]
    %v422 = vld [vmem:[#allocation2 + $0x9b8] sm:$0xff]
    %v423 = vld [vmem:[#allocation2 + $0x9c0] sm:$0xff]
    %v424 = vld [vmem:[#allocation2 + $0x9c8] sm:$0xff]
    %v425 = vld [vmem:[#allocation2 + $0x9d0] sm:$0xff]
    %v426 = vld [vmem:[#allocation2 + $0x9d8] sm:$0xff]
    %v427 = vld [vmem:[#allocation2 + $0x9e0] sm:$0xff]
    %v428 = vld [vmem:[#allocation2 + $0x9e8] sm:$0xff]
    %v429 = vld [vmem:[#allocation2 + $0x9f0] sm:$0xff]
    %v430 = vld [vmem:[#allocation2 + $0x9f8] sm:$0xff]
    %v431 = vld [vmem:[#allocation2 + $0xa00] sm:$0xff]
    %v432 = vld [vmem:[#allocation2 + $0xa08] sm:$0xff]
    %v433 = vld [vmem:[#allocation2 + $0xa10] sm:$0xff]
    %v434 = vld [vmem:[#allocation2 + $0xa18] sm:$0xff]
    %v435 = vld [vmem:[#allocation2 + $0xa20] sm:$0xff]
    %v436 = vld [vmem:[#allocation2 + $0xa28] sm:$0xff]
    %v437 = vld [vmem:[#allocation2 + $0xa30] sm:$0xff]
    %v438 = vld [vmem:[#allocation2 + $0xa38] sm:$0xff]
    %v439 = vld [vmem:[#allocation2 + $0xa40] sm:$0xff]
    %v440 = vld [vmem:[#allocation2 + $0xa48] sm:$0xff]
    %v441 = vld [vmem:[#allocation2 + $0xa50] sm:$0xff]
    %v442 = vld [vmem:[#allocation2 + $0xa58] sm:$0xff]
    %v443 = vld [vmem:[#allocation2 + $0xa60] sm:$0xff]
    %v444 = vld [vmem:[#allocation2 + $0xa68] sm:$0xff]
    %v445 = vld [vmem:[#allocation2 + $0xa70] sm:$0xff]
    %v446 = vld [vmem:[#allocation2 + $0xa78] sm:$0xff]
    %v447 = vld [vmem:[#allocation2 + $0xa80] sm:$0xff]
    %v448 = vld [vmem:[#allocation2 + $0xa88] sm:$0xff]
    %v449 = vld [vmem:[#allocation2 + $0xa90] sm:$0xff]
    %v450 = vld [vmem:[#allocation2 + $0xa98] sm:$0xff]
    %v451 = vld [vmem:[#allocation2 + $0xaa0] sm:$0xff]
    %v452 = vld [vmem:[#allocation2 + $0xaa8] sm:$0xff]
    %v453 = vld [vmem:[#allocation2 + $0xab0] sm:$0xff]
    %v454 = vld [vmem:[#allocation2 + $0xab8] sm:$0xff]
    %v455 = vld [vmem:[#allocation2 + $0xac0] sm:$0xff]
    %v456 = vld [vmem:[#allocation2 + $0xac8] sm:$0xff]
    %v457 = vld [vmem:[#allocation2 + $0xad0] sm:$0xff]
    %v458 = vld [vmem:[#allocation2 + $0xad8] sm:$0xff]
    %v459 = vld [vmem:[#allocation2 + $0xae0] sm:$0xff]
    %v460 = vld [vmem:[#allocation2 + $0xae8] sm:$0xff]
    %v461 = vld [vmem:[#allocation2 + $0xaf0] sm:$0xff]
    %v462 = vld [vmem:[#allocation2 + $0xaf8] sm:$0xff]
    %v463 = vld [vmem:[#allocation2 + $0xb00] sm:$0xff]
    %v464 = vld [vmem:[#allocation2 + $0xb08] sm:$0xff]
    %v465 = vld [vmem:[#allocation2 + $0xb10] sm:$0xff]
    %v466 = vld [vmem:[#allocation2 + $0xb18] sm:$0xff]
    %v467 = vld [vmem:[#allocation2 + $0xb20] sm:$0xff]
    %v468 = vld [vmem:[#allocation2 + $0xb28] sm:$0xff]
    %v469 = vld [vmem:[#allocation2 + $0xb30] sm:$0xff]
    %v470 = vld [vmem:[#allocation2 + $0xb38] sm:$0xff]
    %v471 = vld [vmem:[#allocation2 + $0xb40] sm:$0xff]
    %v472 = vld [vmem:[#allocation2 + $0xb48] sm:$0xff]
    %v473 = vld [vmem:[#allocation2 + $0xb50] sm:$0xff]
    %v474 = vld [vmem:[#allocation2 + $0xb58] sm:$0xff]
    %v475 = vld [vmem:[#allocation2 + $0xb60] sm:$0xff]
    %v476 = vld [vmem:[#allocation2 + $0xb68] sm:$0xff]
    %v477 = vld [vmem:[#allocation2 + $0xb70] sm:$0xff]
    %v478 = vld [vmem:[#allocation2 + $0xb78] sm:$0xff]
    %v479 = vld [vmem:[#allocation2 + $0xb80] sm:$0xff]
    %v480 = vld [vmem:[#allocation2 + $0xb88] sm:$0xff]
    %v481 = vld [vmem:[#allocation2 + $0xb90] sm:$0xff]
    %v482 = vld [vmem:[#allocation2 + $0xb98] sm:$0xff]
    %v483 = vld [vmem:[#allocation2 + $0xba0] sm:$0xff]
    %v484 = vld [vmem:[#allocation2 + $0xba8] sm:$0xff]
    %v485 = vld [vmem:[#allocation2 + $0xbb0] sm:$0xff]
    %v486 = vld [vmem:[#allocation2 + $0xbb8] sm:$0xff]
    %v487 = vld [vmem:[#allocation2 + $0xbc0] sm:$0xff]
    %v488 = vld [vmem:[#allocation2 + $0xbc8] sm:$0xff]
    %v489 = vld [vmem:[#allocation2 + $0xbd0] sm:$0xff]
    %v490 = vld [vmem:[#allocation2 + $0xbd8] sm:$0xff]
    %v491 = vld [vmem:[#allocation2 + $0xbe0] sm:$0xff]
    %v492 = vld [vmem:[#allocation2 + $0xbe8] sm:$0xff]
    %v493 = vld [vmem:[#allocation2 + $0xbf0] sm:$0xff]
    %v494 = vld [vmem:[#allocation2 + $0xbf8] sm:$0xff]
    %v495 = vld [vmem:[#allocation2 + $0xc00] sm:$0xff]
    %v496 = vld [vmem:[#allocation2 + $0xc08] sm:$0xff]
    %v497 = vld [vmem:[#allocation2 + $0xc10] sm:$0xff]
    %v498 = vld [vmem:[#allocation2 + $0xc18] sm:$0xff]
    %v499 = vld [vmem:[#allocation2 + $0xc20] sm:$0xff]
    %v500 = vld [vmem:[#allocation2 + $0xc28] sm:$0xff]
    %v501 = vld [vmem:[#allocation2 + $0xc30] sm:$0xff]
    %v502 = vld [vmem:[#allocation2 + $0xc38] sm:$0xff]
    %v503 = vld [vmem:[#allocation4] sm:$0xff]
    %v505 = vlaneseq
    %v506 = vshrl.u32 %v505, 7
    %v507 = vsub.s32 0, %v506
    %v508 = vrot.slane %v503, %v507
    %v509 = vlaneseq
    %v510 = vshrl.u32 %v509, 7
    %v511 = vsub.s32 1, %v510
    %v512 = vrot.slane %v503, %v511
    %v513 = vlaneseq
    %v514 = vshrl.u32 %v513, 7
    %v515 = vsub.s32 2, %v514
    %v516 = vrot.slane %v503, %v515
    %v517 = vlaneseq
    %v518 = vshrl.u32 %v517, 7
    %v519 = vsub.s32 3, %v518
    %v520 = vrot.slane %v503, %v519
    %v521 = vlaneseq
    %v522 = vshrl.u32 %v521, 7
    %v523 = vsub.s32 4, %v522
    %v524 = vrot.slane %v503, %v523
    %v525 = vlaneseq
    %v526 = vshrl.u32 %v525, 7
    %v527 = vsub.s32 5, %v526
    %v528 = vrot.slane %v503, %v527
    %v529 = vlaneseq
    %v530 = vshrl.u32 %v529, 7
    %v531 = vsub.s32 6, %v530
    %v532 = vrot.slane %v503, %v531
    %v533 = vlaneseq
    %v534 = vshrl.u32 %v533, 7
    %v535 = vsub.s32 7, %v534
    %v536 = vrot.slane %v503, %v535
    %v553 = vunpack.c.l.b16 %v103
    %v554 = vunpack.c.h.b16 %v103
    %v555 = vunpack.c.l.b16 %v104
    %v556 = vunpack.c.h.b16 %v104
    %v557 = vunpack.c.l.b16 %v105
    %v558 = vunpack.c.h.b16 %v105
    %v559 = vunpack.c.l.b16 %v106
    %v560 = vunpack.c.l.b16 %v107
    %v561 = vunpack.c.h.b16 %v107
    %v562 = vunpack.c.l.b16 %v108
    %v563 = vunpack.c.h.b16 %v108
    %v564 = vunpack.c.l.b16 %v109
    %v565 = vunpack.c.h.b16 %v109
    %v566 = vunpack.c.l.b16 %v110
    %v567 = vpack.c.b16 %v560, %v553
    %v568 = vpack.c.b16 %v561, %v554
    %v569 = vpack.c.b16 %v562, %v555
    %v570 = vpack.c.b16 %v563, %v556
    %v571 = vpack.c.b16 %v564, %v557
    %v572 = vpack.c.b16 %v565, %v558
    %v573 = vpack.c.b16 %v566, %v559
    %v972 = vunpack.c.l.b16 %v111
    %v973 = vunpack.c.h.b16 %v111
    %v974 = vunpack.c.l.b16 %v112
    %v975 = vunpack.c.h.b16 %v112
    %v976 = vunpack.c.l.b16 %v113
    %v977 = vunpack.c.h.b16 %v113
    %v978 = vunpack.c.l.b16 %v114
    %v979 = vunpack.c.h.b16 %v114
    %v980 = vunpack.c.l.b16 %v115
    %v981 = vunpack.c.h.b16 %v115
    %v982 = vunpack.c.l.b16 %v116
    %v983 = vunpack.c.h.b16 %v116
    %v984 = vunpack.c.l.b16 %v117
    %v985 = vunpack.c.h.b16 %v117
    %v986 = vunpack.c.l.b16 %v118
    %v987 = vunpack.c.h.b16 %v118
    %v988 = vunpack.c.l.b16 %v119
    %v989 = vunpack.c.h.b16 %v119
    %v990 = vunpack.c.l.b16 %v120
    %v991 = vunpack.c.h.b16 %v120
    %v992 = vunpack.c.l.b16 %v121
    %v993 = vunpack.c.h.b16 %v121
    %v994 = vunpack.c.l.b16 %v122
    %v995 = vunpack.c.h.b16 %v122
    %v996 = vunpack.c.l.b16 %v123
    %v997 = vunpack.c.h.b16 %v123
    %v998 = vunpack.c.l.b16 %v124
    %v999 = vunpack.c.h.b16 %v124
    %v1000 = vunpack.c.l.b16 %v125
    %v1001 = vunpack.c.h.b16 %v125
    %v1002 = vunpack.c.l.b16 %v126
    %v1003 = vunpack.c.h.b16 %v126
    %v1004 = vunpack.c.l.b16 %v127
    %v1005 = vunpack.c.h.b16 %v127
    %v1006 = vunpack.c.l.b16 %v128
    %v1007 = vunpack.c.h.b16 %v128
    %v1008 = vunpack.c.l.b16 %v129
    %v1009 = vunpack.c.h.b16 %v129
    %v1010 = vunpack.c.l.b16 %v130
    %v1011 = vunpack.c.h.b16 %v130
    %v1012 = vunpack.c.l.b16 %v131
    %v1013 = vunpack.c.h.b16 %v131
    %v1014 = vunpack.c.l.b16 %v132
    %v1015 = vunpack.c.h.b16 %v132
    %v1016 = vunpack.c.l.b16 %v133
    %v1017 = vunpack.c.h.b16 %v133
    %v1018 = vunpack.c.l.b16 %v134
    %v1019 = vunpack.c.h.b16 %v134
    %v1020 = vunpack.c.l.b16 %v135
    %v1021 = vunpack.c.h.b16 %v135
    %v1022 = vunpack.c.l.b16 %v136
    %v1023 = vunpack.c.h.b16 %v136
    %v1024 = vunpack.c.l.b16 %v137
    %v1025 = vunpack.c.h.b16 %v137
    %v1026 = vunpack.c.l.b16 %v138
    %v1027 = vunpack.c.h.b16 %v138
    %v1028 = vunpack.c.l.b16 %v139
    %v1029 = vunpack.c.h.b16 %v139
    %v1030 = vunpack.c.l.b16 %v140
    %v1031 = vunpack.c.h.b16 %v140
    %v1032 = vunpack.c.l.b16 %v141
    %v1033 = vunpack.c.h.b16 %v141
    %v1034 = vunpack.c.l.b16 %v142
    %v1035 = vunpack.c.h.b16 %v142
    %v1036 = vunpack.c.l.b16 %v143
    %v1037 = vunpack.c.h.b16 %v143
    %v1038 = vunpack.c.l.b16 %v144
    %v1039 = vunpack.c.h.b16 %v144
    %v1040 = vunpack.c.l.b16 %v145
    %v1041 = vunpack.c.h.b16 %v145
    %v1042 = vunpack.c.l.b16 %v146
    %v1043 = vunpack.c.h.b16 %v146
    %v1044 = vunpack.c.l.b16 %v147
    %v1045 = vunpack.c.h.b16 %v147
    %v1046 = vunpack.c.l.b16 %v148
    %v1047 = vunpack.c.h.b16 %v148
    %v1048 = vunpack.c.l.b16 %v149
    %v1049 = vunpack.c.h.b16 %v149
    %v1050 = vunpack.c.l.b16 %v150
    %v1051 = vunpack.c.h.b16 %v150
    %v1052 = vunpack.c.l.b16 %v151
    %v1053 = vunpack.c.h.b16 %v151
    %v1054 = vunpack.c.l.b16 %v152
    %v1055 = vunpack.c.h.b16 %v152
    %v1056 = vunpack.c.l.b16 %v153
    %v1057 = vunpack.c.h.b16 %v153
    %v1058 = vunpack.c.l.b16 %v154
    %v1059 = vunpack.c.h.b16 %v154
    %v1060 = vunpack.c.l.b16 %v155
    %v1061 = vunpack.c.h.b16 %v155
    %v1062 = vunpack.c.l.b16 %v156
    %v1063 = vunpack.c.h.b16 %v156
    %v1064 = vunpack.c.l.b16 %v157
    %v1065 = vunpack.c.h.b16 %v157
    %v1066 = vunpack.c.l.b16 %v158
    %v1067 = vunpack.c.h.b16 %v158
    %v1068 = vunpack.c.l.b16 %v159
    %v1069 = vunpack.c.h.b16 %v159
    %v1070 = vunpack.c.l.b16 %v160
    %v1071 = vunpack.c.h.b16 %v160
    %v1072 = vunpack.c.l.b16 %v161
    %v1073 = vunpack.c.h.b16 %v161
    %v1074 = vunpack.c.l.b16 %v162
    %v1075 = vunpack.c.h.b16 %v162
    %v1076 = vunpack.c.l.b16 %v163
    %v1077 = vunpack.c.h.b16 %v163
    %v1078 = vunpack.c.l.b16 %v164
    %v1079 = vunpack.c.h.b16 %v164
    %v1080 = vunpack.c.l.b16 %v165
    %v1081 = vunpack.c.h.b16 %v165
    %v1082 = vunpack.c.l.b16 %v166
    %v1083 = vunpack.c.h.b16 %v166
    %v1084 = vunpack.c.l.b16 %v167
    %v1085 = vunpack.c.h.b16 %v167
    %v1086 = vunpack.c.l.b16 %v168
    %v1087 = vunpack.c.h.b16 %v168
    %v1088 = vunpack.c.l.b16 %v169
    %v1089 = vunpack.c.h.b16 %v169
    %v1090 = vunpack.c.l.b16 %v170
    %v1091 = vunpack.c.h.b16 %v170
    %v1092 = vunpack.c.l.b16 %v171
    %v1093 = vunpack.c.h.b16 %v171
    %v1094 = vunpack.c.l.b16 %v172
    %v1095 = vunpack.c.h.b16 %v172
    %v1096 = vunpack.c.l.b16 %v173
    %v1097 = vunpack.c.h.b16 %v173
    %v1098 = vunpack.c.l.b16 %v174
    %v1099 = vunpack.c.h.b16 %v174
    %v1100 = vunpack.c.l.b16 %v175
    %v1101 = vunpack.c.h.b16 %v175
    %v1102 = vunpack.c.l.b16 %v176
    %v1103 = vunpack.c.h.b16 %v176
    %v1104 = vunpack.c.l.b16 %v177
    %v1105 = vunpack.c.h.b16 %v177
    %v1106 = vunpack.c.l.b16 %v178
    %v1107 = vunpack.c.h.b16 %v178
    %v1108 = vunpack.c.l.b16 %v179
    %v1109 = vunpack.c.h.b16 %v179
    %v1110 = vunpack.c.l.b16 %v180
    %v1111 = vunpack.c.h.b16 %v180
    %v1112 = vunpack.c.l.b16 %v181
    %v1113 = vunpack.c.h.b16 %v181
    %v1114 = vunpack.c.l.b16 %v182
    %v1115 = vunpack.c.h.b16 %v182
    %v1116 = vunpack.c.l.b16 %v183
    %v1117 = vunpack.c.h.b16 %v183
    %v1118 = vunpack.c.l.b16 %v184
    %v1119 = vunpack.c.h.b16 %v184
    %v1120 = vunpack.c.l.b16 %v185
    %v1121 = vunpack.c.h.b16 %v185
    %v1122 = vunpack.c.l.b16 %v186
    %v1123 = vunpack.c.h.b16 %v186
    %v1124 = vunpack.c.l.b16 %v187
    %v1125 = vunpack.c.h.b16 %v187
    %v1126 = vunpack.c.l.b16 %v188
    %v1127 = vunpack.c.h.b16 %v188
    %v1128 = vunpack.c.l.b16 %v189
    %v1129 = vunpack.c.h.b16 %v189
    %v1130 = vunpack.c.l.b16 %v190
    %v1131 = vunpack.c.h.b16 %v190
    %v1132 = vunpack.c.l.b16 %v191
    %v1133 = vunpack.c.h.b16 %v191
    %v1134 = vunpack.c.l.b16 %v192
    %v1135 = vunpack.c.h.b16 %v192
    %v1136 = vunpack.c.l.b16 %v193
    %v1137 = vunpack.c.h.b16 %v193
    %v1138 = vunpack.c.l.b16 %v194
    %v1139 = vunpack.c.h.b16 %v194
    %v1140 = vunpack.c.l.b16 %v195
    %v1141 = vunpack.c.h.b16 %v195
    %v1142 = vunpack.c.l.b16 %v196
    %v1143 = vunpack.c.h.b16 %v196
    %v1144 = vunpack.c.l.b16 %v197
    %v1145 = vunpack.c.h.b16 %v197
    %v1146 = vunpack.c.l.b16 %v198
    %v1147 = vunpack.c.h.b16 %v198
    %v1148 = vunpack.c.l.b16 %v199
    %v1149 = vunpack.c.h.b16 %v199
    %v1150 = vunpack.c.l.b16 %v200
    %v1151 = vunpack.c.h.b16 %v200
    %v1152 = vunpack.c.l.b16 %v201
    %v1153 = vunpack.c.h.b16 %v201
    %v1154 = vunpack.c.l.b16 %v202
    %v1155 = vunpack.c.h.b16 %v202
    %v1156 = vunpack.c.l.b16 %v203
    %v1157 = vunpack.c.h.b16 %v203
    %v1158 = vunpack.c.l.b16 %v204
    %v1159 = vunpack.c.h.b16 %v204
    %v1160 = vunpack.c.l.b16 %v205
    %v1161 = vunpack.c.h.b16 %v205
    %v1162 = vunpack.c.l.b16 %v206
    %v1163 = vunpack.c.h.b16 %v206
    %v1164 = vunpack.c.l.b16 %v207
    %v1165 = vunpack.c.h.b16 %v207
    %v1166 = vunpack.c.l.b16 %v208
    %v1167 = vunpack.c.h.b16 %v208
    %v1168 = vunpack.c.l.b16 %v209
    %v1169 = vunpack.c.h.b16 %v209
    %v1170 = vunpack.c.l.b16 %v210
    %v1171 = vunpack.c.h.b16 %v210
    %v1172 = vunpack.c.l.b16 %v211
    %v1173 = vunpack.c.h.b16 %v211
    %v1174 = vunpack.c.l.b16 %v212
    %v1175 = vunpack.c.h.b16 %v212
    %v1176 = vunpack.c.l.b16 %v213
    %v1177 = vunpack.c.h.b16 %v213
    %v1178 = vunpack.c.l.b16 %v214
    %v1179 = vunpack.c.h.b16 %v214
    %v1180 = vunpack.c.l.b16 %v215
    %v1181 = vunpack.c.h.b16 %v215
    %v1182 = vunpack.c.l.b16 %v216
    %v1183 = vunpack.c.h.b16 %v216
    %v1184 = vunpack.c.l.b16 %v217
    %v1185 = vunpack.c.h.b16 %v217
    %v1186 = vunpack.c.l.b16 %v218
    %v1187 = vunpack.c.h.b16 %v218
    %v1188 = vunpack.c.l.b16 %v219
    %v1189 = vunpack.c.h.b16 %v219
    %v1190 = vunpack.c.l.b16 %v220
    %v1191 = vunpack.c.h.b16 %v220
    %v1192 = vunpack.c.l.b16 %v221
    %v1193 = vunpack.c.h.b16 %v221
    %v1194 = vunpack.c.l.b16 %v222
    %v1195 = vunpack.c.h.b16 %v222
    %v1196 = vunpack.c.l.b16 %v223
    %v1197 = vunpack.c.h.b16 %v223
    %v1198 = vunpack.c.l.b16 %v224
    %v1199 = vunpack.c.h.b16 %v224
    %v1200 = vunpack.c.l.b16 %v225
    %v1201 = vunpack.c.h.b16 %v225
    %v1202 = vunpack.c.l.b16 %v226
    %v1203 = vunpack.c.h.b16 %v226
    %v1204 = vunpack.c.l.b16 %v227
    %v1205 = vunpack.c.h.b16 %v227
    %v1206 = vunpack.c.l.b16 %v228
    %v1207 = vunpack.c.h.b16 %v228
    %v1208 = vunpack.c.l.b16 %v229
    %v1209 = vunpack.c.h.b16 %v229
    %v1210 = vunpack.c.l.b16 %v230
    %v1211 = vunpack.c.h.b16 %v230
    %v1212 = vunpack.c.l.b16 %v231
    %v1213 = vunpack.c.h.b16 %v231
    %v1214 = vunpack.c.l.b16 %v232
    %v1215 = vunpack.c.h.b16 %v232
    %v1216 = vunpack.c.l.b16 %v233
    %v1217 = vunpack.c.h.b16 %v233
    %v1218 = vunpack.c.l.b16 %v234
    %v1219 = vunpack.c.h.b16 %v234
    %v1220 = vunpack.c.l.b16 %v235
    %v1221 = vunpack.c.h.b16 %v235
    %v1222 = vunpack.c.l.b16 %v236
    %v1223 = vunpack.c.h.b16 %v236
    %v1224 = vunpack.c.l.b16 %v237
    %v1225 = vunpack.c.h.b16 %v237
    %v1226 = vunpack.c.l.b16 %v238
    %v1227 = vunpack.c.h.b16 %v238
    %v1228 = vunpack.c.l.b16 %v239
    %v1229 = vunpack.c.h.b16 %v239
    %v1230 = vunpack.c.l.b16 %v240
    %v1231 = vunpack.c.h.b16 %v240
    %v1232 = vunpack.c.l.b16 %v241
    %v1233 = vunpack.c.h.b16 %v241
    %v1234 = vunpack.c.l.b16 %v242
    %v1235 = vunpack.c.h.b16 %v242
    %v1236 = vunpack.c.l.b16 %v243
    %v1237 = vunpack.c.h.b16 %v243
    %v1238 = vunpack.c.l.b16 %v244
    %v1239 = vunpack.c.h.b16 %v244
    %v1240 = vunpack.c.l.b16 %v245
    %v1241 = vunpack.c.h.b16 %v245
    %v1242 = vunpack.c.l.b16 %v246
    %v1243 = vunpack.c.h.b16 %v246
    %v1244 = vunpack.c.l.b16 %v247
    %v1245 = vunpack.c.h.b16 %v247
    %v1246 = vunpack.c.l.b16 %v248
    %v1247 = vunpack.c.h.b16 %v248
    %v1248 = vunpack.c.l.b16 %v249
    %v1249 = vunpack.c.h.b16 %v249
    %v1250 = vunpack.c.l.b16 %v250
    %v1251 = vunpack.c.h.b16 %v250
    %v1252 = vunpack.c.l.b16 %v251
    %v1253 = vunpack.c.h.b16 %v251
    %v1254 = vunpack.c.l.b16 %v252
    %v1255 = vunpack.c.h.b16 %v252
    %v1256 = vunpack.c.l.b16 %v253
    %v1257 = vunpack.c.h.b16 %v253
    %v1258 = vunpack.c.l.b16 %v254
    %v1259 = vunpack.c.h.b16 %v254
    %v1260 = vunpack.c.l.b16 %v255
    %v1261 = vunpack.c.h.b16 %v255
    %v1262 = vunpack.c.l.b16 %v256
    %v1263 = vunpack.c.h.b16 %v256
    %v1264 = vunpack.c.l.b16 %v257
    %v1265 = vunpack.c.h.b16 %v257
    %v1266 = vunpack.c.l.b16 %v258
    %v1267 = vunpack.c.h.b16 %v258
    %v1268 = vunpack.c.l.b16 %v259
    %v1269 = vunpack.c.h.b16 %v259
    %v1270 = vunpack.c.l.b16 %v260
    %v1271 = vunpack.c.h.b16 %v260
    %v1272 = vunpack.c.l.b16 %v261
    %v1273 = vunpack.c.h.b16 %v261
    %v1274 = vunpack.c.l.b16 %v262
    %v1275 = vunpack.c.h.b16 %v262
    %v1276 = vunpack.c.l.b16 %v263
    %v1277 = vunpack.c.h.b16 %v263
    %v1278 = vunpack.c.l.b16 %v264
    %v1279 = vunpack.c.h.b16 %v264
    %v1280 = vunpack.c.l.b16 %v265
    %v1281 = vunpack.c.h.b16 %v265
    %v1282 = vunpack.c.l.b16 %v266
    %v1283 = vunpack.c.h.b16 %v266
    %v1284 = vunpack.c.l.b16 %v267
    %v1285 = vunpack.c.h.b16 %v267
    %v1286 = vunpack.c.l.b16 %v268
    %v1287 = vunpack.c.h.b16 %v268
    %v1288 = vunpack.c.l.b16 %v269
    %v1289 = vunpack.c.h.b16 %v269
    %v1290 = vunpack.c.l.b16 %v270
    %v1291 = vunpack.c.h.b16 %v270
    %v1292 = vunpack.c.l.b16 %v271
    %v1293 = vunpack.c.h.b16 %v271
    %v1294 = vunpack.c.l.b16 %v272
    %v1295 = vunpack.c.h.b16 %v272
    %v1296 = vunpack.c.l.b16 %v273
    %v1297 = vunpack.c.h.b16 %v273
    %v1298 = vunpack.c.l.b16 %v274
    %v1299 = vunpack.c.h.b16 %v274
    %v1300 = vunpack.c.l.b16 %v275
    %v1301 = vunpack.c.h.b16 %v275
    %v1302 = vunpack.c.l.b16 %v276
    %v1303 = vunpack.c.h.b16 %v276
    %v1304 = vunpack.c.l.b16 %v277
    %v1305 = vunpack.c.h.b16 %v277
    %v1306 = vunpack.c.l.b16 %v278
    %v1307 = vunpack.c.h.b16 %v278
    %v1308 = vunpack.c.l.b16 %v279
    %v1309 = vunpack.c.h.b16 %v279
    %v1310 = vunpack.c.l.b16 %v280
    %v1311 = vunpack.c.h.b16 %v280
    %v1312 = vunpack.c.l.b16 %v281
    %v1313 = vunpack.c.h.b16 %v281
    %v1314 = vunpack.c.l.b16 %v282
    %v1315 = vunpack.c.h.b16 %v282
    %v1316 = vunpack.c.l.b16 %v283
    %v1317 = vunpack.c.h.b16 %v283
    %v1318 = vunpack.c.l.b16 %v284
    %v1319 = vunpack.c.h.b16 %v284
    %v1320 = vunpack.c.l.b16 %v285
    %v1321 = vunpack.c.h.b16 %v285
    %v1322 = vunpack.c.l.b16 %v286
    %v1323 = vunpack.c.h.b16 %v286
    %v1324 = vunpack.c.l.b16 %v287
    %v1325 = vunpack.c.h.b16 %v287
    %v1326 = vunpack.c.l.b16 %v288
    %v1327 = vunpack.c.h.b16 %v288
    %v1328 = vunpack.c.l.b16 %v289
    %v1329 = vunpack.c.h.b16 %v289
    %v1330 = vunpack.c.l.b16 %v290
    %v1331 = vunpack.c.h.b16 %v290
    %v1332 = vunpack.c.l.b16 %v291
    %v1333 = vunpack.c.h.b16 %v291
    %v1334 = vunpack.c.l.b16 %v292
    %v1335 = vunpack.c.h.b16 %v292
    %v1336 = vunpack.c.l.b16 %v293
    %v1337 = vunpack.c.h.b16 %v293
    %v1338 = vunpack.c.l.b16 %v294
    %v1339 = vunpack.c.h.b16 %v294
    %v1340 = vunpack.c.l.b16 %v295
    %v1341 = vunpack.c.h.b16 %v295
    %v1342 = vunpack.c.l.b16 %v296
    %v1343 = vunpack.c.h.b16 %v296
    %v1344 = vunpack.c.l.b16 %v297
    %v1345 = vunpack.c.h.b16 %v297
    %v1346 = vunpack.c.l.b16 %v298
    %v1347 = vunpack.c.h.b16 %v298
    %v1348 = vunpack.c.l.b16 %v299
    %v1349 = vunpack.c.h.b16 %v299
    %v1350 = vunpack.c.l.b16 %v300
    %v1351 = vunpack.c.h.b16 %v300
    %v1352 = vunpack.c.l.b16 %v301
    %v1353 = vunpack.c.h.b16 %v301
    %v1354 = vunpack.c.l.b16 %v302
    %v1355 = vunpack.c.h.b16 %v302
    %v1356 = vunpack.c.l.b16 %v303
    %v1357 = vunpack.c.h.b16 %v303
    %v1358 = vunpack.c.l.b16 %v304
    %v1359 = vunpack.c.h.b16 %v304
    %v1360 = vunpack.c.l.b16 %v305
    %v1361 = vunpack.c.h.b16 %v305
    %v1362 = vunpack.c.l.b16 %v306
    %v1363 = vunpack.c.h.b16 %v306
    %v1364 = vunpack.c.l.b16 %v307
    %v1365 = vunpack.c.h.b16 %v307
    %v1366 = vunpack.c.l.b16 %v308
    %v1367 = vunpack.c.h.b16 %v308
    %v1368 = vunpack.c.l.b16 %v309
    %v1369 = vunpack.c.h.b16 %v309
    %v1370 = vunpack.c.l.b16 %v310
    %v1371 = vunpack.c.h.b16 %v310
    %v1372 = vunpack.c.l.b16 %v311
    %v1373 = vunpack.c.h.b16 %v311
    %v1374 = vunpack.c.l.b16 %v312
    %v1375 = vunpack.c.h.b16 %v312
    %v1376 = vunpack.c.l.b16 %v313
    %v1377 = vunpack.c.h.b16 %v313
    %v1378 = vunpack.c.l.b16 %v314
    %v1379 = vunpack.c.h.b16 %v314
    %v1380 = vunpack.c.l.b16 %v315
    %v1381 = vunpack.c.h.b16 %v315
    %v1382 = vunpack.c.l.b16 %v316
    %v1383 = vunpack.c.h.b16 %v316
    %v1384 = vunpack.c.l.b16 %v317
    %v1385 = vunpack.c.h.b16 %v317
    %v1386 = vunpack.c.l.b16 %v318
    %v1387 = vunpack.c.h.b16 %v318
    %v1388 = vunpack.c.l.b16 %v319
    %v1389 = vunpack.c.h.b16 %v319
    %v1390 = vunpack.c.l.b16 %v320
    %v1391 = vunpack.c.h.b16 %v320
    %v1392 = vunpack.c.l.b16 %v321
    %v1393 = vunpack.c.h.b16 %v321
    %v1394 = vunpack.c.l.b16 %v322
    %v1395 = vunpack.c.h.b16 %v322
    %v1396 = vunpack.c.l.b16 %v323
    %v1397 = vunpack.c.h.b16 %v323
    %v1398 = vunpack.c.l.b16 %v324
    %v1399 = vunpack.c.h.b16 %v324
    %v1400 = vunpack.c.l.b16 %v325
    %v1401 = vunpack.c.h.b16 %v325
    %v1402 = vunpack.c.l.b16 %v326
    %v1403 = vunpack.c.h.b16 %v326
    %v1404 = vunpack.c.l.b16 %v327
    %v1405 = vunpack.c.h.b16 %v327
    %v1406 = vunpack.c.l.b16 %v328
    %v1407 = vunpack.c.h.b16 %v328
    %v1408 = vunpack.c.l.b16 %v329
    %v1409 = vunpack.c.h.b16 %v329
    %v1410 = vunpack.c.l.b16 %v330
    %v1411 = vunpack.c.h.b16 %v330
    %v1412 = vunpack.c.l.b16 %v331
    %v1413 = vunpack.c.h.b16 %v331
    %v1414 = vunpack.c.l.b16 %v332
    %v1415 = vunpack.c.h.b16 %v332
    %v1416 = vunpack.c.l.b16 %v333
    %v1417 = vunpack.c.h.b16 %v333
    %v1418 = vunpack.c.l.b16 %v334
    %v1419 = vunpack.c.h.b16 %v334
    %v1420 = vunpack.c.l.b16 %v335
    %v1421 = vunpack.c.h.b16 %v335
    %v1422 = vunpack.c.l.b16 %v336
    %v1423 = vunpack.c.h.b16 %v336
    %v1424 = vunpack.c.l.b16 %v337
    %v1425 = vunpack.c.h.b16 %v337
    %v1426 = vunpack.c.l.b16 %v338
    %v1427 = vunpack.c.h.b16 %v338
    %v1428 = vunpack.c.l.b16 %v339
    %v1429 = vunpack.c.h.b16 %v339
    %v1430 = vunpack.c.l.b16 %v340
    %v1431 = vunpack.c.h.b16 %v340
    %v1432 = vunpack.c.l.b16 %v341
    %v1433 = vunpack.c.h.b16 %v341
    %v1434 = vunpack.c.l.b16 %v342
    %v1435 = vunpack.c.h.b16 %v342
    %v1436 = vunpack.c.l.b16 %v343
    %v1437 = vunpack.c.h.b16 %v343
    %v1438 = vunpack.c.l.b16 %v344
    %v1439 = vunpack.c.h.b16 %v344
    %v1440 = vunpack.c.l.b16 %v345
    %v1441 = vunpack.c.h.b16 %v345
    %v1442 = vunpack.c.l.b16 %v346
    %v1443 = vunpack.c.h.b16 %v346
    %v1444 = vunpack.c.l.b16 %v347
    %v1445 = vunpack.c.h.b16 %v347
    %v1446 = vunpack.c.l.b16 %v348
    %v1447 = vunpack.c.h.b16 %v348
    %v1448 = vunpack.c.l.b16 %v349
    %v1449 = vunpack.c.h.b16 %v349
    %v1450 = vunpack.c.l.b16 %v350
    %v1451 = vunpack.c.h.b16 %v350
    %v1452 = vunpack.c.l.b16 %v351
    %v1453 = vunpack.c.h.b16 %v351
    %v1454 = vunpack.c.l.b16 %v352
    %v1455 = vunpack.c.h.b16 %v352
    %v1456 = vunpack.c.l.b16 %v353
    %v1457 = vunpack.c.h.b16 %v353
    %v1458 = vunpack.c.l.b16 %v354
    %v1459 = vunpack.c.h.b16 %v354
    %v1460 = vunpack.c.l.b16 %v355
    %v1461 = vunpack.c.h.b16 %v355
    %v1462 = vunpack.c.l.b16 %v356
    %v1463 = vunpack.c.h.b16 %v356
    %v1464 = vunpack.c.l.b16 %v357
    %v1465 = vunpack.c.h.b16 %v357
    %v1466 = vunpack.c.l.b16 %v358
    %v1467 = vunpack.c.h.b16 %v358
    %v1468 = vunpack.c.l.b16 %v359
    %v1469 = vunpack.c.h.b16 %v359
    %v1470 = vunpack.c.l.b16 %v360
    %v1471 = vunpack.c.h.b16 %v360
    %v1472 = vunpack.c.l.b16 %v361
    %v1473 = vunpack.c.h.b16 %v361
    %v1474 = vunpack.c.l.b16 %v362
    %v1475 = vunpack.c.h.b16 %v362
    %v1476 = vunpack.c.l.b16 %v363
    %v1477 = vunpack.c.h.b16 %v363
    %v1478 = vunpack.c.l.b16 %v364
    %v1479 = vunpack.c.h.b16 %v364
    %v1480 = vunpack.c.l.b16 %v365
    %v1481 = vunpack.c.h.b16 %v365
    %v1482 = vunpack.c.l.b16 %v366
    %v1483 = vunpack.c.h.b16 %v366
    %v1484 = vunpack.c.l.b16 %v367
    %v1485 = vunpack.c.h.b16 %v367
    %v1486 = vunpack.c.l.b16 %v368
    %v1487 = vunpack.c.h.b16 %v368
    %v1488 = vunpack.c.l.b16 %v369
    %v1489 = vunpack.c.h.b16 %v369
    %v1490 = vunpack.c.l.b16 %v370
    %v1491 = vunpack.c.h.b16 %v370
    %v1492 = vunpack.c.l.b16 %v371
    %v1493 = vunpack.c.h.b16 %v371
    %v1494 = vunpack.c.l.b16 %v372
    %v1495 = vunpack.c.h.b16 %v372
    %v1496 = vunpack.c.l.b16 %v373
    %v1497 = vunpack.c.h.b16 %v373
    %v1498 = vunpack.c.l.b16 %v374
    %v1499 = vunpack.c.h.b16 %v374
    %v1500 = vunpack.c.l.b16 %v375
    %v1501 = vunpack.c.h.b16 %v375
    %v1502 = vunpack.c.l.b16 %v376
    %v1503 = vunpack.c.h.b16 %v376
    %v1504 = vunpack.c.l.b16 %v377
    %v1505 = vunpack.c.h.b16 %v377
    %v1506 = vunpack.c.l.b16 %v378
    %v1507 = vunpack.c.h.b16 %v378
    %v1508 = vunpack.c.l.b16 %v379
    %v1509 = vunpack.c.h.b16 %v379
    %v1510 = vunpack.c.l.b16 %v380
    %v1511 = vunpack.c.h.b16 %v380
    %v1512 = vunpack.c.l.b16 %v381
    %v1513 = vunpack.c.h.b16 %v381
    %v1514 = vunpack.c.l.b16 %v382
    %v1515 = vunpack.c.h.b16 %v382
    %v1516 = vunpack.c.l.b16 %v383
    %v1517 = vunpack.c.h.b16 %v383
    %v1518 = vunpack.c.l.b16 %v384
    %v1519 = vunpack.c.h.b16 %v384
    %v1520 = vunpack.c.l.b16 %v385
    %v1521 = vunpack.c.h.b16 %v385
    %v1522 = vunpack.c.l.b16 %v386
    %v1523 = vunpack.c.h.b16 %v386
    %v1524 = vunpack.c.l.b16 %v387
    %v1525 = vunpack.c.h.b16 %v387
    %v1526 = vunpack.c.l.b16 %v388
    %v1527 = vunpack.c.h.b16 %v388
    %v1528 = vunpack.c.l.b16 %v389
    %v1529 = vunpack.c.h.b16 %v389
    %v1530 = vunpack.c.l.b16 %v390
    %v1531 = vunpack.c.h.b16 %v390
    %v1532 = vunpack.c.l.b16 %v391
    %v1533 = vunpack.c.h.b16 %v391
    %v1534 = vunpack.c.l.b16 %v392
    %v1535 = vunpack.c.h.b16 %v392
    %v1536 = vunpack.c.l.b16 %v393
    %v1537 = vunpack.c.h.b16 %v393
    %v1538 = vunpack.c.l.b16 %v394
    %v1539 = vunpack.c.h.b16 %v394
    %v1540 = vunpack.c.l.b16 %v395
    %v1541 = vunpack.c.h.b16 %v395
    %v1542 = vunpack.c.l.b16 %v396
    %v1543 = vunpack.c.h.b16 %v396
    %v1544 = vunpack.c.l.b16 %v397
    %v1545 = vunpack.c.h.b16 %v397
    %v1546 = vunpack.c.l.b16 %v398
    %v1547 = vunpack.c.h.b16 %v398
    %v1548 = vunpack.c.l.b16 %v399
    %v1549 = vunpack.c.h.b16 %v399
    %v1550 = vunpack.c.l.b16 %v400
    %v1551 = vunpack.c.h.b16 %v400
    %v1552 = vunpack.c.l.b16 %v401
    %v1553 = vunpack.c.h.b16 %v401
    %v1554 = vunpack.c.l.b16 %v402
    %v1555 = vunpack.c.h.b16 %v402
    %v1556 = vunpack.c.l.b16 %v403
    %v1557 = vunpack.c.h.b16 %v403
    %v1558 = vunpack.c.l.b16 %v404
    %v1559 = vunpack.c.h.b16 %v404
    %v1560 = vunpack.c.l.b16 %v405
    %v1561 = vunpack.c.h.b16 %v405
    %v1562 = vunpack.c.l.b16 %v406
    %v1563 = vunpack.c.h.b16 %v406
    %v1564 = vunpack.c.l.b16 %v407
    %v1565 = vunpack.c.h.b16 %v407
    %v1566 = vunpack.c.l.b16 %v408
    %v1567 = vunpack.c.h.b16 %v408
    %v1568 = vunpack.c.l.b16 %v409
    %v1569 = vunpack.c.h.b16 %v409
    %v1570 = vunpack.c.l.b16 %v410
    %v1571 = vunpack.c.h.b16 %v410
    %v1572 = vunpack.c.l.b16 %v411
    %v1573 = vunpack.c.h.b16 %v411
    %v1574 = vunpack.c.l.b16 %v412
    %v1575 = vunpack.c.h.b16 %v412
    %v1576 = vunpack.c.l.b16 %v413
    %v1577 = vunpack.c.h.b16 %v413
    %v1578 = vunpack.c.l.b16 %v414
    %v1579 = vunpack.c.h.b16 %v414
    %v1580 = vunpack.c.l.b16 %v415
    %v1581 = vunpack.c.h.b16 %v415
    %v1582 = vunpack.c.l.b16 %v416
    %v1583 = vunpack.c.h.b16 %v416
    %v1584 = vunpack.c.l.b16 %v417
    %v1585 = vunpack.c.h.b16 %v417
    %v1586 = vunpack.c.l.b16 %v418
    %v1587 = vunpack.c.h.b16 %v418
    %v1588 = vunpack.c.l.b16 %v419
    %v1589 = vunpack.c.h.b16 %v419
    %v1590 = vunpack.c.l.b16 %v420
    %v1591 = vunpack.c.h.b16 %v420
    %v1592 = vunpack.c.l.b16 %v421
    %v1593 = vunpack.c.h.b16 %v421
    %v1594 = vunpack.c.l.b16 %v422
    %v1595 = vunpack.c.h.b16 %v422
    %v1596 = vunpack.c.l.b16 %v423
    %v1597 = vunpack.c.h.b16 %v423
    %v1598 = vunpack.c.l.b16 %v424
    %v1599 = vunpack.c.h.b16 %v424
    %v1600 = vunpack.c.l.b16 %v425
    %v1601 = vunpack.c.h.b16 %v425
    %v1602 = vunpack.c.l.b16 %v426
    %v1603 = vunpack.c.h.b16 %v426
    %v1604 = vunpack.c.l.b16 %v427
    %v1605 = vunpack.c.h.b16 %v427
    %v1606 = vunpack.c.l.b16 %v428
    %v1607 = vunpack.c.h.b16 %v428
    %v1608 = vunpack.c.l.b16 %v429
    %v1609 = vunpack.c.h.b16 %v429
    %v1610 = vunpack.c.l.b16 %v430
    %v1611 = vunpack.c.h.b16 %v430
    %v1612 = vunpack.c.l.b16 %v431
    %v1613 = vunpack.c.h.b16 %v431
    %v1614 = vunpack.c.l.b16 %v432
    %v1615 = vunpack.c.h.b16 %v432
    %v1616 = vunpack.c.l.b16 %v433
    %v1617 = vunpack.c.h.b16 %v433
    %v1618 = vunpack.c.l.b16 %v434
    %v1619 = vunpack.c.h.b16 %v434
    %v1620 = vunpack.c.l.b16 %v435
    %v1621 = vunpack.c.h.b16 %v435
    %v1622 = vunpack.c.l.b16 %v436
    %v1623 = vunpack.c.h.b16 %v436
    %v1624 = vunpack.c.l.b16 %v437
    %v1625 = vunpack.c.h.b16 %v437
    %v1626 = vunpack.c.l.b16 %v438
    %v1627 = vunpack.c.h.b16 %v438
    %v1628 = vunpack.c.l.b16 %v439
    %v1629 = vunpack.c.h.b16 %v439
    %v1630 = vunpack.c.l.b16 %v440
    %v1631 = vunpack.c.h.b16 %v440
    %v1632 = vunpack.c.l.b16 %v441
    %v1633 = vunpack.c.h.b16 %v441
    %v1634 = vunpack.c.l.b16 %v442
    %v1635 = vunpack.c.h.b16 %v442
    %v1636 = vunpack.c.l.b16 %v443
    %v1637 = vunpack.c.h.b16 %v443
    %v1638 = vunpack.c.l.b16 %v444
    %v1639 = vunpack.c.h.b16 %v444
    %v1640 = vunpack.c.l.b16 %v445
    %v1641 = vunpack.c.h.b16 %v445
    %v1642 = vunpack.c.l.b16 %v446
    %v1643 = vunpack.c.h.b16 %v446
    %v1644 = vunpack.c.l.b16 %v447
    %v1645 = vunpack.c.h.b16 %v447
    %v1646 = vunpack.c.l.b16 %v448
    %v1647 = vunpack.c.h.b16 %v448
    %v1648 = vunpack.c.l.b16 %v449
    %v1649 = vunpack.c.h.b16 %v449
    %v1650 = vunpack.c.l.b16 %v450
    %v1651 = vunpack.c.h.b16 %v450
    %v1652 = vunpack.c.l.b16 %v451
    %v1653 = vunpack.c.h.b16 %v451
    %v1654 = vunpack.c.l.b16 %v452
    %v1655 = vunpack.c.h.b16 %v452
    %v1656 = vunpack.c.l.b16 %v453
    %v1657 = vunpack.c.h.b16 %v453
    %v1658 = vunpack.c.l.b16 %v454
    %v1659 = vunpack.c.h.b16 %v454
    %v1660 = vunpack.c.l.b16 %v455
    %v1661 = vunpack.c.h.b16 %v455
    %v1662 = vunpack.c.l.b16 %v456
    %v1663 = vunpack.c.h.b16 %v456
    %v1664 = vunpack.c.l.b16 %v457
    %v1665 = vunpack.c.h.b16 %v457
    %v1666 = vunpack.c.l.b16 %v458
    %v1667 = vunpack.c.h.b16 %v458
    %v1668 = vunpack.c.l.b16 %v459
    %v1669 = vunpack.c.h.b16 %v459
    %v1670 = vunpack.c.l.b16 %v460
    %v1671 = vunpack.c.h.b16 %v460
    %v1672 = vunpack.c.l.b16 %v461
    %v1673 = vunpack.c.h.b16 %v461
    %v1674 = vunpack.c.l.b16 %v462
    %v1675 = vunpack.c.h.b16 %v462
    %v1676 = vunpack.c.l.b16 %v463
    %v1677 = vunpack.c.h.b16 %v463
    %v1678 = vunpack.c.l.b16 %v464
    %v1679 = vunpack.c.h.b16 %v464
    %v1680 = vunpack.c.l.b16 %v465
    %v1681 = vunpack.c.h.b16 %v465
    %v1682 = vunpack.c.l.b16 %v466
    %v1683 = vunpack.c.h.b16 %v466
    %v1684 = vunpack.c.l.b16 %v467
    %v1685 = vunpack.c.h.b16 %v467
    %v1686 = vunpack.c.l.b16 %v468
    %v1687 = vunpack.c.h.b16 %v468
    %v1688 = vunpack.c.l.b16 %v469
    %v1689 = vunpack.c.h.b16 %v469
    %v1690 = vunpack.c.l.b16 %v470
    %v1691 = vunpack.c.h.b16 %v470
    %v1692 = vunpack.c.l.b16 %v471
    %v1693 = vunpack.c.h.b16 %v471
    %v1694 = vunpack.c.l.b16 %v472
    %v1695 = vunpack.c.h.b16 %v472
    %v1696 = vunpack.c.l.b16 %v473
    %v1697 = vunpack.c.h.b16 %v473
    %v1698 = vunpack.c.l.b16 %v474
    %v1699 = vunpack.c.h.b16 %v474
    %v1700 = vunpack.c.l.b16 %v475
    %v1701 = vunpack.c.h.b16 %v475
    %v1702 = vunpack.c.l.b16 %v476
    %v1703 = vunpack.c.h.b16 %v476
    %v1704 = vunpack.c.l.b16 %v477
    %v1705 = vunpack.c.h.b16 %v477
    %v1706 = vunpack.c.l.b16 %v478
    %v1707 = vunpack.c.h.b16 %v478
    %v1708 = vunpack.c.l.b16 %v479
    %v1709 = vunpack.c.h.b16 %v479
    %v1710 = vunpack.c.l.b16 %v480
    %v1711 = vunpack.c.h.b16 %v480
    %v1712 = vunpack.c.l.b16 %v481
    %v1713 = vunpack.c.h.b16 %v481
    %v1714 = vunpack.c.l.b16 %v482
    %v1715 = vunpack.c.h.b16 %v482
    %v1716 = vunpack.c.l.b16 %v483
    %v1717 = vunpack.c.h.b16 %v483
    %v1718 = vunpack.c.l.b16 %v484
    %v1719 = vunpack.c.h.b16 %v484
    %v1720 = vunpack.c.l.b16 %v485
    %v1721 = vunpack.c.h.b16 %v485
    %v1722 = vunpack.c.l.b16 %v486
    %v1723 = vunpack.c.h.b16 %v486
    %v1724 = vunpack.c.l.b16 %v487
    %v1725 = vunpack.c.h.b16 %v487
    %v1726 = vunpack.c.l.b16 %v488
    %v1727 = vunpack.c.h.b16 %v488
    %v1728 = vunpack.c.l.b16 %v489
    %v1729 = vunpack.c.h.b16 %v489
    %v1730 = vunpack.c.l.b16 %v490
    %v1731 = vunpack.c.h.b16 %v490
    %v1732 = vunpack.c.l.b16 %v491
    %v1733 = vunpack.c.h.b16 %v491
    %v1734 = vunpack.c.l.b16 %v492
    %v1735 = vunpack.c.h.b16 %v492
    %v1736 = vunpack.c.l.b16 %v493
    %v1737 = vunpack.c.h.b16 %v493
    %v1738 = vunpack.c.l.b16 %v494
    %v1739 = vunpack.c.h.b16 %v494
    %v1740 = vunpack.c.l.b16 %v495
    %v1741 = vunpack.c.h.b16 %v495
    %v1742 = vunpack.c.l.b16 %v496
    %v1743 = vunpack.c.h.b16 %v496
    %v1744 = vunpack.c.l.b16 %v497
    %v1745 = vunpack.c.h.b16 %v497
    %v1746 = vunpack.c.l.b16 %v498
    %v1747 = vunpack.c.h.b16 %v498
    %v1748 = vunpack.c.l.b16 %v499
    %v1749 = vunpack.c.h.b16 %v499
    %v1750 = vunpack.c.l.b16 %v500
    %v1751 = vunpack.c.h.b16 %v500
    %v1752 = vunpack.c.l.b16 %v501
    %v1753 = vunpack.c.h.b16 %v501
    %v1754 = vunpack.c.l.b16 %v502
    %v1755 = vunpack.c.h.b16 %v502
    %v1756 = vpack.c.b16 %v980, %v972
    %v1757 = vpack.c.b16 %v981, %v973
    %v1758 = vpack.c.b16 %v982, %v974
    %v1759 = vpack.c.b16 %v983, %v975
    %v1760 = vpack.c.b16 %v984, %v976
    %v1761 = vpack.c.b16 %v985, %v977
    %v1762 = vpack.c.b16 %v986, %v978
    %v1763 = vpack.c.b16 %v987, %v979
    %v1764 = vpack.c.b16 %v996, %v988
    %v1765 = vpack.c.b16 %v997, %v989
    %v1766 = vpack.c.b16 %v998, %v990
    %v1767 = vpack.c.b16 %v999, %v991
    %v1768 = vpack.c.b16 %v1000, %v992
    %v1769 = vpack.c.b16 %v1001, %v993
    %v1770 = vpack.c.b16 %v1002, %v994
    %v1771 = vpack.c.b16 %v1003, %v995
    %v1772 = vpack.c.b16 %v1012, %v1004
    %v1773 = vpack.c.b16 %v1013, %v1005
    %v1774 = vpack.c.b16 %v1014, %v1006
    %v1775 = vpack.c.b16 %v1015, %v1007
    %v1776 = vpack.c.b16 %v1016, %v1008
    %v1777 = vpack.c.b16 %v1017, %v1009
    %v1778 = vpack.c.b16 %v1018, %v1010
    %v1779 = vpack.c.b16 %v1019, %v1011
    %v1780 = vpack.c.b16 %v1028, %v1020
    %v1781 = vpack.c.b16 %v1029, %v1021
    %v1782 = vpack.c.b16 %v1030, %v1022
    %v1783 = vpack.c.b16 %v1031, %v1023
    %v1784 = vpack.c.b16 %v1032, %v1024
    %v1785 = vpack.c.b16 %v1033, %v1025
    %v1786 = vpack.c.b16 %v1034, %v1026
    %v1787 = vpack.c.b16 %v1035, %v1027
    %v1788 = vpack.c.b16 %v1044, %v1036
    %v1789 = vpack.c.b16 %v1045, %v1037
    %v1790 = vpack.c.b16 %v1046, %v1038
    %v1791 = vpack.c.b16 %v1047, %v1039
    %v1792 = vpack.c.b16 %v1048, %v1040
    %v1793 = vpack.c.b16 %v1049, %v1041
    %v1794 = vpack.c.b16 %v1050, %v1042
    %v1795 = vpack.c.b16 %v1051, %v1043
    %v1796 = vpack.c.b16 %v1060, %v1052
    %v1797 = vpack.c.b16 %v1061, %v1053
    %v1798 = vpack.c.b16 %v1062, %v1054
    %v1799 = vpack.c.b16 %v1063, %v1055
    %v1800 = vpack.c.b16 %v1064, %v1056
    %v1801 = vpack.c.b16 %v1065, %v1057
    %v1802 = vpack.c.b16 %v1066, %v1058
    %v1803 = vpack.c.b16 %v1067, %v1059
    %v1804 = vpack.c.b16 %v1076, %v1068
    %v1805 = vpack.c.b16 %v1077, %v1069
    %v1806 = vpack.c.b16 %v1078, %v1070
    %v1807 = vpack.c.b16 %v1079, %v1071
    %v1808 = vpack.c.b16 %v1080, %v1072
    %v1809 = vpack.c.b16 %v1081, %v1073
    %v1810 = vpack.c.b16 %v1082, %v1074
    %v1811 = vpack.c.b16 %v1083, %v1075
    %v1812 = vpack.c.b16 %v1092, %v1084
    %v1813 = vpack.c.b16 %v1093, %v1085
    %v1814 = vpack.c.b16 %v1094, %v1086
    %v1815 = vpack.c.b16 %v1095, %v1087
    %v1816 = vpack.c.b16 %v1096, %v1088
    %v1817 = vpack.c.b16 %v1097, %v1089
    %v1818 = vpack.c.b16 %v1098, %v1090
    %v1819 = vpack.c.b16 %v1099, %v1091
    %v1820 = vpack.c.b16 %v1108, %v1100
    %v1821 = vpack.c.b16 %v1109, %v1101
    %v1822 = vpack.c.b16 %v1110, %v1102
    %v1823 = vpack.c.b16 %v1111, %v1103
    %v1824 = vpack.c.b16 %v1112, %v1104
    %v1825 = vpack.c.b16 %v1113, %v1105
    %v1826 = vpack.c.b16 %v1114, %v1106
    %v1827 = vpack.c.b16 %v1115, %v1107
    %v1828 = vpack.c.b16 %v1124, %v1116
    %v1829 = vpack.c.b16 %v1125, %v1117
    %v1830 = vpack.c.b16 %v1126, %v1118
    %v1831 = vpack.c.b16 %v1127, %v1119
    %v1832 = vpack.c.b16 %v1128, %v1120
    %v1833 = vpack.c.b16 %v1129, %v1121
    %v1834 = vpack.c.b16 %v1130, %v1122
    %v1835 = vpack.c.b16 %v1131, %v1123
    %v1836 = vpack.c.b16 %v1140, %v1132
    %v1837 = vpack.c.b16 %v1141, %v1133
    %v1838 = vpack.c.b16 %v1142, %v1134
    %v1839 = vpack.c.b16 %v1143, %v1135
    %v1840 = vpack.c.b16 %v1144, %v1136
    %v1841 = vpack.c.b16 %v1145, %v1137
    %v1842 = vpack.c.b16 %v1146, %v1138
    %v1843 = vpack.c.b16 %v1147, %v1139
    %v1844 = vpack.c.b16 %v1156, %v1148
    %v1845 = vpack.c.b16 %v1157, %v1149
    %v1846 = vpack.c.b16 %v1158, %v1150
    %v1847 = vpack.c.b16 %v1159, %v1151
    %v1848 = vpack.c.b16 %v1160, %v1152
    %v1849 = vpack.c.b16 %v1161, %v1153
    %v1850 = vpack.c.b16 %v1162, %v1154
    %v1851 = vpack.c.b16 %v1163, %v1155
    %v1852 = vpack.c.b16 %v1172, %v1164
    %v1853 = vpack.c.b16 %v1173, %v1165
    %v1854 = vpack.c.b16 %v1174, %v1166
    %v1855 = vpack.c.b16 %v1175, %v1167
    %v1856 = vpack.c.b16 %v1176, %v1168
    %v1857 = vpack.c.b16 %v1177, %v1169
    %v1858 = vpack.c.b16 %v1178, %v1170
    %v1859 = vpack.c.b16 %v1179, %v1171
    %v1860 = vpack.c.b16 %v1188, %v1180
    %v1861 = vpack.c.b16 %v1189, %v1181
    %v1862 = vpack.c.b16 %v1190, %v1182
    %v1863 = vpack.c.b16 %v1191, %v1183
    %v1864 = vpack.c.b16 %v1192, %v1184
    %v1865 = vpack.c.b16 %v1193, %v1185
    %v1866 = vpack.c.b16 %v1194, %v1186
    %v1867 = vpack.c.b16 %v1195, %v1187
    %v1868 = vpack.c.b16 %v1204, %v1196
    %v1869 = vpack.c.b16 %v1205, %v1197
    %v1870 = vpack.c.b16 %v1206, %v1198
    %v1871 = vpack.c.b16 %v1207, %v1199
    %v1872 = vpack.c.b16 %v1208, %v1200
    %v1873 = vpack.c.b16 %v1209, %v1201
    %v1874 = vpack.c.b16 %v1210, %v1202
    %v1875 = vpack.c.b16 %v1211, %v1203
    %v1876 = vpack.c.b16 %v1220, %v1212
    %v1877 = vpack.c.b16 %v1221, %v1213
    %v1878 = vpack.c.b16 %v1222, %v1214
    %v1879 = vpack.c.b16 %v1223, %v1215
    %v1880 = vpack.c.b16 %v1224, %v1216
    %v1881 = vpack.c.b16 %v1225, %v1217
    %v1882 = vpack.c.b16 %v1226, %v1218
    %v1883 = vpack.c.b16 %v1227, %v1219
    %v1884 = vpack.c.b16 %v1236, %v1228
    %v1885 = vpack.c.b16 %v1237, %v1229
    %v1886 = vpack.c.b16 %v1238, %v1230
    %v1887 = vpack.c.b16 %v1239, %v1231
    %v1888 = vpack.c.b16 %v1240, %v1232
    %v1889 = vpack.c.b16 %v1241, %v1233
    %v1890 = vpack.c.b16 %v1242, %v1234
    %v1891 = vpack.c.b16 %v1243, %v1235
    %v1892 = vpack.c.b16 %v1252, %v1244
    %v1893 = vpack.c.b16 %v1253, %v1245
    %v1894 = vpack.c.b16 %v1254, %v1246
    %v1895 = vpack.c.b16 %v1255, %v1247
    %v1896 = vpack.c.b16 %v1256, %v1248
    %v1897 = vpack.c.b16 %v1257, %v1249
    %v1898 = vpack.c.b16 %v1258, %v1250
    %v1899 = vpack.c.b16 %v1259, %v1251
    %v1900 = vpack.c.b16 %v1268, %v1260
    %v1901 = vpack.c.b16 %v1269, %v1261
    %v1902 = vpack.c.b16 %v1270, %v1262
    %v1903 = vpack.c.b16 %v1271, %v1263
    %v1904 = vpack.c.b16 %v1272, %v1264
    %v1905 = vpack.c.b16 %v1273, %v1265
    %v1906 = vpack.c.b16 %v1274, %v1266
    %v1907 = vpack.c.b16 %v1275, %v1267
    %v1908 = vpack.c.b16 %v1284, %v1276
    %v1909 = vpack.c.b16 %v1285, %v1277
    %v1910 = vpack.c.b16 %v1286, %v1278
    %v1911 = vpack.c.b16 %v1287, %v1279
    %v1912 = vpack.c.b16 %v1288, %v1280
    %v1913 = vpack.c.b16 %v1289, %v1281
    %v1914 = vpack.c.b16 %v1290, %v1282
    %v1915 = vpack.c.b16 %v1291, %v1283
    %v1916 = vpack.c.b16 %v1300, %v1292
    %v1917 = vpack.c.b16 %v1301, %v1293
    %v1918 = vpack.c.b16 %v1302, %v1294
    %v1919 = vpack.c.b16 %v1303, %v1295
    %v1920 = vpack.c.b16 %v1304, %v1296
    %v1921 = vpack.c.b16 %v1305, %v1297
    %v1922 = vpack.c.b16 %v1306, %v1298
    %v1923 = vpack.c.b16 %v1307, %v1299
    %v1924 = vpack.c.b16 %v1316, %v1308
    %v1925 = vpack.c.b16 %v1317, %v1309
    %v1926 = vpack.c.b16 %v1318, %v1310
    %v1927 = vpack.c.b16 %v1319, %v1311
    %v1928 = vpack.c.b16 %v1320, %v1312
    %v1929 = vpack.c.b16 %v1321, %v1313
    %v1930 = vpack.c.b16 %v1322, %v1314
    %v1931 = vpack.c.b16 %v1323, %v1315
    %v1932 = vpack.c.b16 %v1332, %v1324
    %v1933 = vpack.c.b16 %v1333, %v1325
    %v1934 = vpack.c.b16 %v1334, %v1326
    %v1935 = vpack.c.b16 %v1335, %v1327
    %v1936 = vpack.c.b16 %v1336, %v1328
    %v1937 = vpack.c.b16 %v1337, %v1329
    %v1938 = vpack.c.b16 %v1338, %v1330
    %v1939 = vpack.c.b16 %v1339, %v1331
    %v1940 = vpack.c.b16 %v1348, %v1340
    %v1941 = vpack.c.b16 %v1349, %v1341
    %v1942 = vpack.c.b16 %v1350, %v1342
    %v1943 = vpack.c.b16 %v1351, %v1343
    %v1944 = vpack.c.b16 %v1352, %v1344
    %v1945 = vpack.c.b16 %v1353, %v1345
    %v1946 = vpack.c.b16 %v1354, %v1346
    %v1947 = vpack.c.b16 %v1355, %v1347
    %v1948 = vpack.c.b16 %v1364, %v1356
    %v1949 = vpack.c.b16 %v1365, %v1357
    %v1950 = vpack.c.b16 %v1366, %v1358
    %v1951 = vpack.c.b16 %v1367, %v1359
    %v1952 = vpack.c.b16 %v1368, %v1360
    %v1953 = vpack.c.b16 %v1369, %v1361
    %v1954 = vpack.c.b16 %v1370, %v1362
    %v1955 = vpack.c.b16 %v1371, %v1363
    %v1956 = vpack.c.b16 %v1380, %v1372
    %v1957 = vpack.c.b16 %v1381, %v1373
    %v1958 = vpack.c.b16 %v1382, %v1374
    %v1959 = vpack.c.b16 %v1383, %v1375
    %v1960 = vpack.c.b16 %v1384, %v1376
    %v1961 = vpack.c.b16 %v1385, %v1377
    %v1962 = vpack.c.b16 %v1386, %v1378
    %v1963 = vpack.c.b16 %v1387, %v1379
    %v1964 = vpack.c.b16 %v1396, %v1388
    %v1965 = vpack.c.b16 %v1397, %v1389
    %v1966 = vpack.c.b16 %v1398, %v1390
    %v1967 = vpack.c.b16 %v1399, %v1391
    %v1968 = vpack.c.b16 %v1400, %v1392
    %v1969 = vpack.c.b16 %v1401, %v1393
    %v1970 = vpack.c.b16 %v1402, %v1394
    %v1971 = vpack.c.b16 %v1403, %v1395
    %v1972 = vpack.c.b16 %v1412, %v1404
    %v1973 = vpack.c.b16 %v1413, %v1405
    %v1974 = vpack.c.b16 %v1414, %v1406
    %v1975 = vpack.c.b16 %v1415, %v1407
    %v1976 = vpack.c.b16 %v1416, %v1408
    %v1977 = vpack.c.b16 %v1417, %v1409
    %v1978 = vpack.c.b16 %v1418, %v1410
    %v1979 = vpack.c.b16 %v1419, %v1411
    %v1980 = vpack.c.b16 %v1428, %v1420
    %v1981 = vpack.c.b16 %v1429, %v1421
    %v1982 = vpack.c.b16 %v1430, %v1422
    %v1983 = vpack.c.b16 %v1431, %v1423
    %v1984 = vpack.c.b16 %v1432, %v1424
    %v1985 = vpack.c.b16 %v1433, %v1425
    %v1986 = vpack.c.b16 %v1434, %v1426
    %v1987 = vpack.c.b16 %v1435, %v1427
    %v1988 = vpack.c.b16 %v1444, %v1436
    %v1989 = vpack.c.b16 %v1445, %v1437
    %v1990 = vpack.c.b16 %v1446, %v1438
    %v1991 = vpack.c.b16 %v1447, %v1439
    %v1992 = vpack.c.b16 %v1448, %v1440
    %v1993 = vpack.c.b16 %v1449, %v1441
    %v1994 = vpack.c.b16 %v1450, %v1442
    %v1995 = vpack.c.b16 %v1451, %v1443
    %v1996 = vpack.c.b16 %v1460, %v1452
    %v1997 = vpack.c.b16 %v1461, %v1453
    %v1998 = vpack.c.b16 %v1462, %v1454
    %v1999 = vpack.c.b16 %v1463, %v1455
    %v2000 = vpack.c.b16 %v1464, %v1456
    %v2001 = vpack.c.b16 %v1465, %v1457
    %v2002 = vpack.c.b16 %v1466, %v1458
    %v2003 = vpack.c.b16 %v1467, %v1459
    %v2004 = vpack.c.b16 %v1476, %v1468
    %v2005 = vpack.c.b16 %v1477, %v1469
    %v2006 = vpack.c.b16 %v1478, %v1470
    %v2007 = vpack.c.b16 %v1479, %v1471
    %v2008 = vpack.c.b16 %v1480, %v1472
    %v2009 = vpack.c.b16 %v1481, %v1473
    %v2010 = vpack.c.b16 %v1482, %v1474
    %v2011 = vpack.c.b16 %v1483, %v1475
    %v2012 = vpack.c.b16 %v1492, %v1484
    %v2013 = vpack.c.b16 %v1493, %v1485
    %v2014 = vpack.c.b16 %v1494, %v1486
    %v2015 = vpack.c.b16 %v1495, %v1487
    %v2016 = vpack.c.b16 %v1496, %v1488
    %v2017 = vpack.c.b16 %v1497, %v1489
    %v2018 = vpack.c.b16 %v1498, %v1490
    %v2019 = vpack.c.b16 %v1499, %v1491
    %v2020 = vpack.c.b16 %v1508, %v1500
    %v2021 = vpack.c.b16 %v1509, %v1501
    %v2022 = vpack.c.b16 %v1510, %v1502
    %v2023 = vpack.c.b16 %v1511, %v1503
    %v2024 = vpack.c.b16 %v1512, %v1504
    %v2025 = vpack.c.b16 %v1513, %v1505
    %v2026 = vpack.c.b16 %v1514, %v1506
    %v2027 = vpack.c.b16 %v1515, %v1507
    %v2028 = vpack.c.b16 %v1524, %v1516
    %v2029 = vpack.c.b16 %v1525, %v1517
    %v2030 = vpack.c.b16 %v1526, %v1518
    %v2031 = vpack.c.b16 %v1527, %v1519
    %v2032 = vpack.c.b16 %v1528, %v1520
    %v2033 = vpack.c.b16 %v1529, %v1521
    %v2034 = vpack.c.b16 %v1530, %v1522
    %v2035 = vpack.c.b16 %v1531, %v1523
    %v2036 = vpack.c.b16 %v1540, %v1532
    %v2037 = vpack.c.b16 %v1541, %v1533
    %v2038 = vpack.c.b16 %v1542, %v1534
    %v2039 = vpack.c.b16 %v1543, %v1535
    %v2040 = vpack.c.b16 %v1544, %v1536
    %v2041 = vpack.c.b16 %v1545, %v1537
    %v2042 = vpack.c.b16 %v1546, %v1538
    %v2043 = vpack.c.b16 %v1547, %v1539
    %v2044 = vpack.c.b16 %v1556, %v1548
    %v2045 = vpack.c.b16 %v1557, %v1549
    %v2046 = vpack.c.b16 %v1558, %v1550
    %v2047 = vpack.c.b16 %v1559, %v1551
    %v2048 = vpack.c.b16 %v1560, %v1552
    %v2049 = vpack.c.b16 %v1561, %v1553
    %v2050 = vpack.c.b16 %v1562, %v1554
    %v2051 = vpack.c.b16 %v1563, %v1555
    %v2052 = vpack.c.b16 %v1572, %v1564
    %v2053 = vpack.c.b16 %v1573, %v1565
    %v2054 = vpack.c.b16 %v1574, %v1566
    %v2055 = vpack.c.b16 %v1575, %v1567
    %v2056 = vpack.c.b16 %v1576, %v1568
    %v2057 = vpack.c.b16 %v1577, %v1569
    %v2058 = vpack.c.b16 %v1578, %v1570
    %v2059 = vpack.c.b16 %v1579, %v1571
    %v2060 = vpack.c.b16 %v1588, %v1580
    %v2061 = vpack.c.b16 %v1589, %v1581
    %v2062 = vpack.c.b16 %v1590, %v1582
    %v2063 = vpack.c.b16 %v1591, %v1583
    %v2064 = vpack.c.b16 %v1592, %v1584
    %v2065 = vpack.c.b16 %v1593, %v1585
    %v2066 = vpack.c.b16 %v1594, %v1586
    %v2067 = vpack.c.b16 %v1595, %v1587
    %v2068 = vpack.c.b16 %v1604, %v1596
    %v2069 = vpack.c.b16 %v1605, %v1597
    %v2070 = vpack.c.b16 %v1606, %v1598
    %v2071 = vpack.c.b16 %v1607, %v1599
    %v2072 = vpack.c.b16 %v1608, %v1600
    %v2073 = vpack.c.b16 %v1609, %v1601
    %v2074 = vpack.c.b16 %v1610, %v1602
    %v2075 = vpack.c.b16 %v1611, %v1603
    %v2076 = vpack.c.b16 %v1620, %v1612
    %v2077 = vpack.c.b16 %v1621, %v1613
    %v2078 = vpack.c.b16 %v1622, %v1614
    %v2079 = vpack.c.b16 %v1623, %v1615
    %v2080 = vpack.c.b16 %v1624, %v1616
    %v2081 = vpack.c.b16 %v1625, %v1617
    %v2082 = vpack.c.b16 %v1626, %v1618
    %v2083 = vpack.c.b16 %v1627, %v1619
    %v2084 = vpack.c.b16 %v1636, %v1628
    %v2085 = vpack.c.b16 %v1637, %v1629
    %v2086 = vpack.c.b16 %v1638, %v1630
    %v2087 = vpack.c.b16 %v1639, %v1631
    %v2088 = vpack.c.b16 %v1640, %v1632
    %v2089 = vpack.c.b16 %v1641, %v1633
    %v2090 = vpack.c.b16 %v1642, %v1634
    %v2091 = vpack.c.b16 %v1643, %v1635
    %v2092 = vpack.c.b16 %v1652, %v1644
    %v2093 = vpack.c.b16 %v1653, %v1645
    %v2094 = vpack.c.b16 %v1654, %v1646
    %v2095 = vpack.c.b16 %v1655, %v1647
    %v2096 = vpack.c.b16 %v1656, %v1648
    %v2097 = vpack.c.b16 %v1657, %v1649
    %v2098 = vpack.c.b16 %v1658, %v1650
    %v2099 = vpack.c.b16 %v1659, %v1651
    %v2100 = vpack.c.b16 %v1668, %v1660
    %v2101 = vpack.c.b16 %v1669, %v1661
    %v2102 = vpack.c.b16 %v1670, %v1662
    %v2103 = vpack.c.b16 %v1671, %v1663
    %v2104 = vpack.c.b16 %v1672, %v1664
    %v2105 = vpack.c.b16 %v1673, %v1665
    %v2106 = vpack.c.b16 %v1674, %v1666
    %v2107 = vpack.c.b16 %v1675, %v1667
    %v2108 = vpack.c.b16 %v1684, %v1676
    %v2109 = vpack.c.b16 %v1685, %v1677
    %v2110 = vpack.c.b16 %v1686, %v1678
    %v2111 = vpack.c.b16 %v1687, %v1679
    %v2112 = vpack.c.b16 %v1688, %v1680
    %v2113 = vpack.c.b16 %v1689, %v1681
    %v2114 = vpack.c.b16 %v1690, %v1682
    %v2115 = vpack.c.b16 %v1691, %v1683
    %v2116 = vpack.c.b16 %v1700, %v1692
    %v2117 = vpack.c.b16 %v1701, %v1693
    %v2118 = vpack.c.b16 %v1702, %v1694
    %v2119 = vpack.c.b16 %v1703, %v1695
    %v2120 = vpack.c.b16 %v1704, %v1696
    %v2121 = vpack.c.b16 %v1705, %v1697
    %v2122 = vpack.c.b16 %v1706, %v1698
    %v2123 = vpack.c.b16 %v1707, %v1699
    %v2124 = vpack.c.b16 %v1716, %v1708
    %v2125 = vpack.c.b16 %v1717, %v1709
    %v2126 = vpack.c.b16 %v1718, %v1710
    %v2127 = vpack.c.b16 %v1719, %v1711
    %v2128 = vpack.c.b16 %v1720, %v1712
    %v2129 = vpack.c.b16 %v1721, %v1713
    %v2130 = vpack.c.b16 %v1722, %v1714
    %v2131 = vpack.c.b16 %v1723, %v1715
    %v2132 = vpack.c.b16 %v1732, %v1724
    %v2133 = vpack.c.b16 %v1733, %v1725
    %v2134 = vpack.c.b16 %v1734, %v1726
    %v2135 = vpack.c.b16 %v1735, %v1727
    %v2136 = vpack.c.b16 %v1736, %v1728
    %v2137 = vpack.c.b16 %v1737, %v1729
    %v2138 = vpack.c.b16 %v1738, %v1730
    %v2139 = vpack.c.b16 %v1739, %v1731
    %v2140 = vpack.c.b16 %v1748, %v1740
    %v2141 = vpack.c.b16 %v1749, %v1741
    %v2142 = vpack.c.b16 %v1750, %v1742
    %v2143 = vpack.c.b16 %v1751, %v1743
    %v2144 = vpack.c.b16 %v1752, %v1744
    %v2145 = vpack.c.b16 %v1753, %v1745
    %v2146 = vpack.c.b16 %v1754, %v1746
    %v2147 = vpack.c.b16 %v1755, %v1747
    %vm2540 = vcmask 130048
    %v2542 = vsel %vm2540, %v573, 0
    %2544 = vmatprep.subr.bf16.mxu0 %v1813
    %2545 = vmatpush1.bf16.msra.mxu0 %v1812
    %2546 = vmatprep.subr.bf16.mxu0 %v1805
    %2547 = vmatpush1.bf16.msra.mxu0 %v1804
    %2548 = vmatprep.subr.bf16.mxu0 %v1797
    %2549 = vmatpush1.bf16.msra.mxu0 %v1796
    %2550 = vmatprep.subr.bf16.mxu0 %v1789
    %2551 = vmatpush1.bf16.msra.mxu0 %v1788
    %2552 = vmatprep.subr.bf16.mxu0 %v1781
    %2553 = vmatpush1.bf16.msra.mxu0 %v1780
    %2554 = vmatprep.subr.bf16.mxu0 %v1773
    %2555 = vmatpush1.bf16.msra.mxu0 %v1772
    %2556 = vmatprep.subr.bf16.mxu0 %v1765
    %2557 = vmatpush1.bf16.msra.mxu0 %v1764
    %2558 = vmatprep.subr.bf16.mxu0 %v1757
    %2559 = vmatpush1.bf16.msra.mxu0 %v1756
    %2560 = vmatprep.subr.bf16.mxu0 %v1877
    %2561 = vmatpush2.bf16.msra.mxu0 %v1876
    %2562 = vmatprep.subr.bf16.mxu0 %v1869
    %2563 = vmatpush2.bf16.msra.mxu0 %v1868
    %2564 = vmatprep.subr.bf16.mxu0 %v1861
    %2565 = vmatpush2.bf16.msra.mxu0 %v1860
    %2566 = vmatprep.subr.bf16.mxu0 %v1853
    %2567 = vmatpush2.bf16.msra.mxu0 %v1852
    %2568 = vmatprep.subr.bf16.mxu0 %v1845
    %2569 = vmatpush2.bf16.msra.mxu0 %v1844
    %2570 = vmatprep.subr.bf16.mxu0 %v1837
    %2571 = vmatpush2.bf16.msra.mxu0 %v1836
    %2572 = vmatprep.subr.bf16.mxu0 %v1829
    %2573 = vmatpush2.bf16.msra.mxu0 %v1828
    %2574 = vmatprep.subr.bf16.mxu0 %v1821
    %2575 = vmatpush2.bf16.msra.mxu0 %v1820
    %2576 = vmatprep.mubr.bf16.mxu0 %v568
    %2577 = vmatmul.mubr.bf16.gmra.mxu0 %v567
    %v2578 = vpop.f32.mrf.mxu0
    %v2579 = vadd.f32 %v508, %v2578
    %v2580 = vpop.f32.mrf.mxu0
    %v2581 = vadd.f32 %v512, %v2580
    %v2582 = vpop.f32.mrf.mxu0
    %v2583 = vadd.f32 %v508, %v2582
    %v2584 = vpop.f32.mrf.mxu0
    %v2585 = vadd.f32 %v512, %v2584
    %2586 = vdwg.mxu0
    %2587 = vmatprep.subr.bf16.mxu0 %v1941
    %2588 = vmatpush1.bf16.msra.mxu0 %v1940
    %2589 = vmatprep.subr.bf16.mxu0 %v1933
    %2590 = vmatpush1.bf16.msra.mxu0 %v1932
    %2591 = vmatprep.subr.bf16.mxu0 %v1925
    %2592 = vmatpush1.bf16.msra.mxu0 %v1924
    %2593 = vmatprep.subr.bf16.mxu0 %v1917
    %2594 = vmatpush1.bf16.msra.mxu0 %v1916
    %2595 = vmatprep.subr.bf16.mxu0 %v1909
    %2596 = vmatpush1.bf16.msra.mxu0 %v1908
    %2597 = vmatprep.subr.bf16.mxu0 %v1901
    %2598 = vmatpush1.bf16.msra.mxu0 %v1900
    %2599 = vmatprep.subr.bf16.mxu0 %v1893
    %2600 = vmatpush1.bf16.msra.mxu0 %v1892
    %2601 = vmatprep.subr.bf16.mxu0 %v1885
    %2602 = vmatpush1.bf16.msra.mxu0 %v1884
    %2603 = vmatprep.subr.bf16.mxu0 %v2005
    %2604 = vmatpush2.bf16.msra.mxu0 %v2004
    %2605 = vmatprep.subr.bf16.mxu0 %v1997
    %2606 = vmatpush2.bf16.msra.mxu0 %v1996
    %2607 = vmatprep.subr.bf16.mxu0 %v1989
    %2608 = vmatpush2.bf16.msra.mxu0 %v1988
    %2609 = vmatprep.subr.bf16.mxu0 %v1981
    %2610 = vmatpush2.bf16.msra.mxu0 %v1980
    %2611 = vmatprep.subr.bf16.mxu0 %v1973
    %2612 = vmatpush2.bf16.msra.mxu0 %v1972
    %2613 = vmatprep.subr.bf16.mxu0 %v1965
    %2614 = vmatpush2.bf16.msra.mxu0 %v1964
    %2615 = vmatprep.subr.bf16.mxu0 %v1957
    %2616 = vmatpush2.bf16.msra.mxu0 %v1956
    %2617 = vmatprep.subr.bf16.mxu0 %v1949
    %2618 = vmatpush2.bf16.msra.mxu0 %v1948
    %2619 = vmatprep.mubr.bf16.mxu0 %v570
    %2620 = vmatmul.mubr.bf16.gmra.mxu0 %v569
    %v2621 = vpop.f32.mrf.mxu0
    %v2622 = vadd.f32 %v2579, %v2621
    %v2623 = vpop.f32.mrf.mxu0
    %v2624 = vadd.f32 %v2581, %v2623
    %v2625 = vpop.f32.mrf.mxu0
    %v2626 = vadd.f32 %v2583, %v2625
    %v2627 = vpop.f32.mrf.mxu0
    %v2628 = vadd.f32 %v2585, %v2627
    %2629 = vdwg.mxu0
    %2630 = vmatprep.subr.bf16.mxu0 %v2069
    %2631 = vmatpush1.bf16.msra.mxu0 %v2068
    %2632 = vmatprep.subr.bf16.mxu0 %v2061
    %2633 = vmatpush1.bf16.msra.mxu0 %v2060
    %2634 = vmatprep.subr.bf16.mxu0 %v2053
    %2635 = vmatpush1.bf16.msra.mxu0 %v2052
    %2636 = vmatprep.subr.bf16.mxu0 %v2045
    %2637 = vmatpush1.bf16.msra.mxu0 %v2044
    %2638 = vmatprep.subr.bf16.mxu0 %v2037
    %2639 = vmatpush1.bf16.msra.mxu0 %v2036
    %2640 = vmatprep.subr.bf16.mxu0 %v2029
    %2641 = vmatpush1.bf16.msra.mxu0 %v2028
    %2642 = vmatprep.subr.bf16.mxu0 %v2021
    %2643 = vmatpush1.bf16.msra.mxu0 %v2020
    %2644 = vmatprep.subr.bf16.mxu0 %v2013
    %2645 = vmatpush1.bf16.msra.mxu0 %v2012
    %2646 = vmatprep.subr.bf16.mxu0 %v2133
    %2647 = vmatpush2.bf16.msra.mxu0 %v2132
    %2648 = vmatprep.subr.bf16.mxu0 %v2125
    %2649 = vmatpush2.bf16.msra.mxu0 %v2124
    %2650 = vmatprep.subr.bf16.mxu0 %v2117
    %2651 = vmatpush2.bf16.msra.mxu0 %v2116
    %2652 = vmatprep.subr.bf16.mxu0 %v2109
    %2653 = vmatpush2.bf16.msra.mxu0 %v2108
    %2654 = vmatprep.subr.bf16.mxu0 %v2101
    %2655 = vmatpush2.bf16.msra.mxu0 %v2100
    %2656 = vmatprep.subr.bf16.mxu0 %v2093
    %2657 = vmatpush2.bf16.msra.mxu0 %v2092
    %2658 = vmatprep.subr.bf16.mxu0 %v2085
    %2659 = vmatpush2.bf16.msra.mxu0 %v2084
    %2660 = vmatprep.subr.bf16.mxu0 %v2077
    %2661 = vmatpush2.bf16.msra.mxu0 %v2076
    %2662 = vmatprep.mubr.bf16.mxu0 %v572
    %2663 = vmatmul.mubr.bf16.gmra.mxu0 %v571
    %v2664 = vpop.f32.mrf.mxu0
    %v2665 = vadd.f32 %v2622, %v2664
    %v2666 = vpop.f32.mrf.mxu0
    %v2667 = vadd.f32 %v2624, %v2666
    %v2668 = vpop.f32.mrf.mxu0
    %v2669 = vadd.f32 %v2626, %v2668
    %v2670 = vpop.f32.mrf.mxu0
    %v2671 = vadd.f32 %v2628, %v2670
    %2672 = vdwg.mxu0
    %2673 = vmatprep.subr.bf16.mxu0 0
    %2674 = vmatpush1.bf16.msra.mxu0 0
    %2675 = vmatprep.subr.bf16.mxu0 0
    %2676 = vmatpush1.bf16.msra.mxu0 0
    %2677 = vmatprep.subr.bf16.mxu0 0
    %2678 = vmatpush1.bf16.msra.mxu0 0
    %2679 = vmatprep.subr.bf16.mxu0 0
    %2680 = vmatpush1.bf16.msra.mxu0 0
    %2681 = vmatprep.subr.bf16.mxu0 0
    %2682 = vmatpush1.bf16.msra.mxu0 0
    %2683 = vmatprep.subr.bf16.mxu0 0
    %2684 = vmatpush1.bf16.msra.mxu0 0
    %2685 = vmatprep.subr.bf16.mxu0 0
    %2686 = vmatpush1.bf16.msra.mxu0 0
    %2687 = vmatprep.subr.bf16.mxu0 %v2141
    %2688 = vmatpush1.bf16.msra.mxu0 %v2140
    %2689 = vmatprep.subr.bf16.mxu0 0
    %2690 = vmatpush2.bf16.msra.mxu0 0
    %2691 = vmatprep.subr.bf16.mxu0 0
    %2692 = vmatpush2.bf16.msra.mxu0 0
    %2693 = vmatprep.subr.bf16.mxu0 0
    %2694 = vmatpush2.bf16.msra.mxu0 0
    %2695 = vmatprep.subr.bf16.mxu0 0
    %2696 = vmatpush2.bf16.msra.mxu0 0
    %2697 = vmatprep.subr.bf16.mxu0 0
    %2698 = vmatpush2.bf16.msra.mxu0 0
    %2699 = vmatprep.subr.bf16.mxu0 0
    %2700 = vmatpush2.bf16.msra.mxu0 0
    %2701 = vmatprep.subr.bf16.mxu0 0
    %2702 = vmatpush2.bf16.msra.mxu0 0
    %2703 = vmatprep.subr.bf16.mxu0 0
    %2704 = vmatpush2.bf16.msra.mxu0 0
    %2705 = vmatprep.mubr.bf16.mxu0 0
    %2706 = vmatmul.mubr.bf16.gmra.mxu0 %v2542
    %v2707 = vpop.f32.mrf.mxu0
    %v2708 = vadd.f32 %v2665, %v2707
    %v2709 = vpop.f32.mrf.mxu0
    %v2710 = vadd.f32 %v2667, %v2709
    %v2711 = vpop.f32.mrf.mxu0
    %v2712 = vadd.f32 %v2669, %v2711
    %v2713 = vpop.f32.mrf.mxu0
    %v2714 = vadd.f32 %v2671, %v2713
    %2715 = vdwg.mxu0
    %2716 = vmatprep.subr.bf16.mxu0 %v1815
    %2717 = vmatpush1.bf16.msra.mxu0 %v1814
    %2718 = vmatprep.subr.bf16.mxu0 %v1807
    %2719 = vmatpush1.bf16.msra.mxu0 %v1806
    %2720 = vmatprep.subr.bf16.mxu0 %v1799
    %2721 = vmatpush1.bf16.msra.mxu0 %v1798
    %2722 = vmatprep.subr.bf16.mxu0 %v1791
    %2723 = vmatpush1.bf16.msra.mxu0 %v1790
    %2724 = vmatprep.subr.bf16.mxu0 %v1783
    %2725 = vmatpush1.bf16.msra.mxu0 %v1782
    %2726 = vmatprep.subr.bf16.mxu0 %v1775
    %2727 = vmatpush1.bf16.msra.mxu0 %v1774
    %2728 = vmatprep.subr.bf16.mxu0 %v1767
    %2729 = vmatpush1.bf16.msra.mxu0 %v1766
    %2730 = vmatprep.subr.bf16.mxu0 %v1759
    %2731 = vmatpush1.bf16.msra.mxu0 %v1758
    %2732 = vmatprep.subr.bf16.mxu0 %v1879
    %2733 = vmatpush2.bf16.msra.mxu0 %v1878
    %2734 = vmatprep.subr.bf16.mxu0 %v1871
    %2735 = vmatpush2.bf16.msra.mxu0 %v1870
    %2736 = vmatprep.subr.bf16.mxu0 %v1863
    %2737 = vmatpush2.bf16.msra.mxu0 %v1862
    %2738 = vmatprep.subr.bf16.mxu0 %v1855
    %2739 = vmatpush2.bf16.msra.mxu0 %v1854
    %2740 = vmatprep.subr.bf16.mxu0 %v1847
    %2741 = vmatpush2.bf16.msra.mxu0 %v1846
    %2742 = vmatprep.subr.bf16.mxu0 %v1839
    %2743 = vmatpush2.bf16.msra.mxu0 %v1838
    %2744 = vmatprep.subr.bf16.mxu0 %v1831
    %2745 = vmatpush2.bf16.msra.mxu0 %v1830
    %2746 = vmatprep.subr.bf16.mxu0 %v1823
    %2747 = vmatpush2.bf16.msra.mxu0 %v1822
    %2748 = vmatprep.mubr.bf16.mxu0 %v568
    %2749 = vmatmul.mubr.bf16.gmra.mxu0 %v567
    %v2750 = vpop.f32.mrf.mxu0
    %v2751 = vadd.f32 %v516, %v2750
    %v2752 = vpop.f32.mrf.mxu0
    %v2753 = vadd.f32 %v520, %v2752
    %v2754 = vpop.f32.mrf.mxu0
    %v2755 = vadd.f32 %v516, %v2754
    %v2756 = vpop.f32.mrf.mxu0
    %v2757 = vadd.f32 %v520, %v2756
    %2758 = vdwg.mxu0
    %2759 = vmatprep.subr.bf16.mxu0 %v1943
    %2760 = vmatpush1.bf16.msra.mxu0 %v1942
    %2761 = vmatprep.subr.bf16.mxu0 %v1935
    %2762 = vmatpush1.bf16.msra.mxu0 %v1934
    %2763 = vmatprep.subr.bf16.mxu0 %v1927
    %2764 = vmatpush1.bf16.msra.mxu0 %v1926
    %2765 = vmatprep.subr.bf16.mxu0 %v1919
    %2766 = vmatpush1.bf16.msra.mxu0 %v1918
    %2767 = vmatprep.subr.bf16.mxu0 %v1911
    %2768 = vmatpush1.bf16.msra.mxu0 %v1910
    %2769 = vmatprep.subr.bf16.mxu0 %v1903
    %2770 = vmatpush1.bf16.msra.mxu0 %v1902
    %2771 = vmatprep.subr.bf16.mxu0 %v1895
    %2772 = vmatpush1.bf16.msra.mxu0 %v1894
    %2773 = vmatprep.subr.bf16.mxu0 %v1887
    %2774 = vmatpush1.bf16.msra.mxu0 %v1886
    %2775 = vmatprep.subr.bf16.mxu0 %v2007
    %2776 = vmatpush2.bf16.msra.mxu0 %v2006
    %2777 = vmatprep.subr.bf16.mxu0 %v1999
    %2778 = vmatpush2.bf16.msra.mxu0 %v1998
    %2779 = vmatprep.subr.bf16.mxu0 %v1991
    %2780 = vmatpush2.bf16.msra.mxu0 %v1990
    %2781 = vmatprep.subr.bf16.mxu0 %v1983
    %2782 = vmatpush2.bf16.msra.mxu0 %v1982
    %2783 = vmatprep.subr.bf16.mxu0 %v1975
    %2784 = vmatpush2.bf16.msra.mxu0 %v1974
    %2785 = vmatprep.subr.bf16.mxu0 %v1967
    %2786 = vmatpush2.bf16.msra.mxu0 %v1966
    %2787 = vmatprep.subr.bf16.mxu0 %v1959
    %2788 = vmatpush2.bf16.msra.mxu0 %v1958
    %2789 = vmatprep.subr.bf16.mxu0 %v1951
    %2790 = vmatpush2.bf16.msra.mxu0 %v1950
    %2791 = vmatprep.mubr.bf16.mxu0 %v570
    %2792 = vmatmul.mubr.bf16.gmra.mxu0 %v569
    %v2793 = vpop.f32.mrf.mxu0
    %v2794 = vadd.f32 %v2751, %v2793
    %v2795 = vpop.f32.mrf.mxu0
    %v2796 = vadd.f32 %v2753, %v2795
    %v2797 = vpop.f32.mrf.mxu0
    %v2798 = vadd.f32 %v2755, %v2797
    %v2799 = vpop.f32.mrf.mxu0
    %v2800 = vadd.f32 %v2757, %v2799
    %2801 = vdwg.mxu0
    %2802 = vmatprep.subr.bf16.mxu0 %v2071
    %2803 = vmatpush1.bf16.msra.mxu0 %v2070
    %2804 = vmatprep.subr.bf16.mxu0 %v2063
    %2805 = vmatpush1.bf16.msra.mxu0 %v2062
    %2806 = vmatprep.subr.bf16.mxu0 %v2055
    %2807 = vmatpush1.bf16.msra.mxu0 %v2054
    %2808 = vmatprep.subr.bf16.mxu0 %v2047
    %2809 = vmatpush1.bf16.msra.mxu0 %v2046
    %2810 = vmatprep.subr.bf16.mxu0 %v2039
    %2811 = vmatpush1.bf16.msra.mxu0 %v2038
    %2812 = vmatprep.subr.bf16.mxu0 %v2031
    %2813 = vmatpush1.bf16.msra.mxu0 %v2030
    %2814 = vmatprep.subr.bf16.mxu0 %v2023
    %2815 = vmatpush1.bf16.msra.mxu0 %v2022
    %2816 = vmatprep.subr.bf16.mxu0 %v2015
    %2817 = vmatpush1.bf16.msra.mxu0 %v2014
    %2818 = vmatprep.subr.bf16.mxu0 %v2135
    %2819 = vmatpush2.bf16.msra.mxu0 %v2134
    %2820 = vmatprep.subr.bf16.mxu0 %v2127
    %2821 = vmatpush2.bf16.msra.mxu0 %v2126
    %2822 = vmatprep.subr.bf16.mxu0 %v2119
    %2823 = vmatpush2.bf16.msra.mxu0 %v2118
    %2824 = vmatprep.subr.bf16.mxu0 %v2111
    %2825 = vmatpush2.bf16.msra.mxu0 %v2110
    %2826 = vmatprep.subr.bf16.mxu0 %v2103
    %2827 = vmatpush2.bf16.msra.mxu0 %v2102
    %2828 = vmatprep.subr.bf16.mxu0 %v2095
    %2829 = vmatpush2.bf16.msra.mxu0 %v2094
    %2830 = vmatprep.subr.bf16.mxu0 %v2087
    %2831 = vmatpush2.bf16.msra.mxu0 %v2086
    %2832 = vmatprep.subr.bf16.mxu0 %v2079
    %2833 = vmatpush2.bf16.msra.mxu0 %v2078
    %2834 = vmatprep.mubr.bf16.mxu0 %v572
    %2835 = vmatmul.mubr.bf16.gmra.mxu0 %v571
    %v2836 = vpop.f32.mrf.mxu0
    %v2837 = vadd.f32 %v2794, %v2836
    %v2838 = vpop.f32.mrf.mxu0
    %v2839 = vadd.f32 %v2796, %v2838
    %v2840 = vpop.f32.mrf.mxu0
    %v2841 = vadd.f32 %v2798, %v2840
    %v2842 = vpop.f32.mrf.mxu0
    %v2843 = vadd.f32 %v2800, %v2842
    %2844 = vdwg.mxu0
    %2845 = vmatprep.subr.bf16.mxu0 0
    %2846 = vmatpush1.bf16.msra.mxu0 0
    %2847 = vmatprep.subr.bf16.mxu0 0
    %2848 = vmatpush1.bf16.msra.mxu0 0
    %2849 = vmatprep.subr.bf16.mxu0 0
    %2850 = vmatpush1.bf16.msra.mxu0 0
    %2851 = vmatprep.subr.bf16.mxu0 0
    %2852 = vmatpush1.bf16.msra.mxu0 0
    %2853 = vmatprep.subr.bf16.mxu0 0
    %2854 = vmatpush1.bf16.msra.mxu0 0
    %2855 = vmatprep.subr.bf16.mxu0 0
    %2856 = vmatpush1.bf16.msra.mxu0 0
    %2857 = vmatprep.subr.bf16.mxu0 0
    %2858 = vmatpush1.bf16.msra.mxu0 0
    %2859 = vmatprep.subr.bf16.mxu0 %v2143
    %2860 = vmatpush1.bf16.msra.mxu0 %v2142
    %2861 = vmatprep.subr.bf16.mxu0 0
    %2862 = vmatpush2.bf16.msra.mxu0 0
    %2863 = vmatprep.subr.bf16.mxu0 0
    %2864 = vmatpush2.bf16.msra.mxu0 0
    %2865 = vmatprep.subr.bf16.mxu0 0
    %2866 = vmatpush2.bf16.msra.mxu0 0
    %2867 = vmatprep.subr.bf16.mxu0 0
    %2868 = vmatpush2.bf16.msra.mxu0 0
    %2869 = vmatprep.subr.bf16.mxu0 0
    %2870 = vmatpush2.bf16.msra.mxu0 0
    %2871 = vmatprep.subr.bf16.mxu0 0
    %2872 = vmatpush2.bf16.msra.mxu0 0
    %2873 = vmatprep.subr.bf16.mxu0 0
    %2874 = vmatpush2.bf16.msra.mxu0 0
    %2875 = vmatprep.subr.bf16.mxu0 0
    %2876 = vmatpush2.bf16.msra.mxu0 0
    %2877 = vmatprep.mubr.bf16.mxu0 0
    %2878 = vmatmul.mubr.bf16.gmra.mxu0 %v2542
    %v2879 = vpop.f32.mrf.mxu0
    %v2880 = vadd.f32 %v2837, %v2879
    %v2881 = vpop.f32.mrf.mxu0
    %v2882 = vadd.f32 %v2839, %v2881
    %v2883 = vpop.f32.mrf.mxu0
    %v2884 = vadd.f32 %v2841, %v2883
    %v2885 = vpop.f32.mrf.mxu0
    %v2886 = vadd.f32 %v2843, %v2885
    %2887 = vdwg.mxu0
    %2888 = vmatprep.subr.bf16.mxu0 %v1817
    %2889 = vmatpush1.bf16.msra.mxu0 %v1816
    %2890 = vmatprep.subr.bf16.mxu0 %v1809
    %2891 = vmatpush1.bf16.msra.mxu0 %v1808
    %2892 = vmatprep.subr.bf16.mxu0 %v1801
    %2893 = vmatpush1.bf16.msra.mxu0 %v1800
    %2894 = vmatprep.subr.bf16.mxu0 %v1793
    %2895 = vmatpush1.bf16.msra.mxu0 %v1792
    %2896 = vmatprep.subr.bf16.mxu0 %v1785
    %2897 = vmatpush1.bf16.msra.mxu0 %v1784
    %2898 = vmatprep.subr.bf16.mxu0 %v1777
    %2899 = vmatpush1.bf16.msra.mxu0 %v1776
    %2900 = vmatprep.subr.bf16.mxu0 %v1769
    %2901 = vmatpush1.bf16.msra.mxu0 %v1768
    %2902 = vmatprep.subr.bf16.mxu0 %v1761
    %2903 = vmatpush1.bf16.msra.mxu0 %v1760
    %2904 = vmatprep.subr.bf16.mxu0 %v1881
    %2905 = vmatpush2.bf16.msra.mxu0 %v1880
    %2906 = vmatprep.subr.bf16.mxu0 %v1873
    %2907 = vmatpush2.bf16.msra.mxu0 %v1872
    %2908 = vmatprep.subr.bf16.mxu0 %v1865
    %2909 = vmatpush2.bf16.msra.mxu0 %v1864
    %2910 = vmatprep.subr.bf16.mxu0 %v1857
    %2911 = vmatpush2.bf16.msra.mxu0 %v1856
    %2912 = vmatprep.subr.bf16.mxu0 %v1849
    %2913 = vmatpush2.bf16.msra.mxu0 %v1848
    %2914 = vmatprep.subr.bf16.mxu0 %v1841
    %2915 = vmatpush2.bf16.msra.mxu0 %v1840
    %2916 = vmatprep.subr.bf16.mxu0 %v1833
    %2917 = vmatpush2.bf16.msra.mxu0 %v1832
    %2918 = vmatprep.subr.bf16.mxu0 %v1825
    %2919 = vmatpush2.bf16.msra.mxu0 %v1824
    %2920 = vmatprep.mubr.bf16.mxu0 %v568
    %2921 = vmatmul.mubr.bf16.gmra.mxu0 %v567
    %v2922 = vpop.f32.mrf.mxu0
    %v2923 = vadd.f32 %v524, %v2922
    %v2924 = vpop.f32.mrf.mxu0
    %v2925 = vadd.f32 %v528, %v2924
    %v2926 = vpop.f32.mrf.mxu0
    %v2927 = vadd.f32 %v524, %v2926
    %v2928 = vpop.f32.mrf.mxu0
    %v2929 = vadd.f32 %v528, %v2928
    %2930 = vdwg.mxu0
    %2931 = vmatprep.subr.bf16.mxu0 %v1945
    %2932 = vmatpush1.bf16.msra.mxu0 %v1944
    %2933 = vmatprep.subr.bf16.mxu0 %v1937
    %2934 = vmatpush1.bf16.msra.mxu0 %v1936
    %2935 = vmatprep.subr.bf16.mxu0 %v1929
    %2936 = vmatpush1.bf16.msra.mxu0 %v1928
    %2937 = vmatprep.subr.bf16.mxu0 %v1921
    %2938 = vmatpush1.bf16.msra.mxu0 %v1920
    %2939 = vmatprep.subr.bf16.mxu0 %v1913
    %2940 = vmatpush1.bf16.msra.mxu0 %v1912
    %2941 = vmatprep.subr.bf16.mxu0 %v1905
    %2942 = vmatpush1.bf16.msra.mxu0 %v1904
    %2943 = vmatprep.subr.bf16.mxu0 %v1897
    %2944 = vmatpush1.bf16.msra.mxu0 %v1896
    %2945 = vmatprep.subr.bf16.mxu0 %v1889
    %2946 = vmatpush1.bf16.msra.mxu0 %v1888
    %2947 = vmatprep.subr.bf16.mxu0 %v2009
    %2948 = vmatpush2.bf16.msra.mxu0 %v2008
    %2949 = vmatprep.subr.bf16.mxu0 %v2001
    %2950 = vmatpush2.bf16.msra.mxu0 %v2000
    %2951 = vmatprep.subr.bf16.mxu0 %v1993
    %2952 = vmatpush2.bf16.msra.mxu0 %v1992
    %2953 = vmatprep.subr.bf16.mxu0 %v1985
    %2954 = vmatpush2.bf16.msra.mxu0 %v1984
    %2955 = vmatprep.subr.bf16.mxu0 %v1977
    %2956 = vmatpush2.bf16.msra.mxu0 %v1976
    %2957 = vmatprep.subr.bf16.mxu0 %v1969
    %2958 = vmatpush2.bf16.msra.mxu0 %v1968
    %2959 = vmatprep.subr.bf16.mxu0 %v1961
    %2960 = vmatpush2.bf16.msra.mxu0 %v1960
    %2961 = vmatprep.subr.bf16.mxu0 %v1953
    %2962 = vmatpush2.bf16.msra.mxu0 %v1952
    %2963 = vmatprep.mubr.bf16.mxu0 %v570
    %2964 = vmatmul.mubr.bf16.gmra.mxu0 %v569
    %v2965 = vpop.f32.mrf.mxu0
    %v2966 = vadd.f32 %v2923, %v2965
    %v2967 = vpop.f32.mrf.mxu0
    %v2968 = vadd.f32 %v2925, %v2967
    %v2969 = vpop.f32.mrf.mxu0
    %v2970 = vadd.f32 %v2927, %v2969
    %v2971 = vpop.f32.mrf.mxu0
    %v2972 = vadd.f32 %v2929, %v2971
    %2973 = vdwg.mxu0
    %2974 = vmatprep.subr.bf16.mxu0 %v2073
    %2975 = vmatpush1.bf16.msra.mxu0 %v2072
    %2976 = vmatprep.subr.bf16.mxu0 %v2065
    %2977 = vmatpush1.bf16.msra.mxu0 %v2064
    %2978 = vmatprep.subr.bf16.mxu0 %v2057
    %2979 = vmatpush1.bf16.msra.mxu0 %v2056
    %2980 = vmatprep.subr.bf16.mxu0 %v2049
    %2981 = vmatpush1.bf16.msra.mxu0 %v2048
    %2982 = vmatprep.subr.bf16.mxu0 %v2041
    %2983 = vmatpush1.bf16.msra.mxu0 %v2040
    %2984 = vmatprep.subr.bf16.mxu0 %v2033
    %2985 = vmatpush1.bf16.msra.mxu0 %v2032
    %2986 = vmatprep.subr.bf16.mxu0 %v2025
    %2987 = vmatpush1.bf16.msra.mxu0 %v2024
    %2988 = vmatprep.subr.bf16.mxu0 %v2017
    %2989 = vmatpush1.bf16.msra.mxu0 %v2016
    %2990 = vmatprep.subr.bf16.mxu0 %v2137
    %2991 = vmatpush2.bf16.msra.mxu0 %v2136
    %2992 = vmatprep.subr.bf16.mxu0 %v2129
    %2993 = vmatpush2.bf16.msra.mxu0 %v2128
    %2994 = vmatprep.subr.bf16.mxu0 %v2121
    %2995 = vmatpush2.bf16.msra.mxu0 %v2120
    %2996 = vmatprep.subr.bf16.mxu0 %v2113
    %2997 = vmatpush2.bf16.msra.mxu0 %v2112
    %2998 = vmatprep.subr.bf16.mxu0 %v2105
    %2999 = vmatpush2.bf16.msra.mxu0 %v2104
    %3000 = vmatprep.subr.bf16.mxu0 %v2097
    %3001 = vmatpush2.bf16.msra.mxu0 %v2096
    %3002 = vmatprep.subr.bf16.mxu0 %v2089
    %3003 = vmatpush2.bf16.msra.mxu0 %v2088
    %3004 = vmatprep.subr.bf16.mxu0 %v2081
    %3005 = vmatpush2.bf16.msra.mxu0 %v2080
    %3006 = vmatprep.mubr.bf16.mxu0 %v572
    %3007 = vmatmul.mubr.bf16.gmra.mxu0 %v571
    %v3008 = vpop.f32.mrf.mxu0
    %v3009 = vadd.f32 %v2966, %v3008
    %v3010 = vpop.f32.mrf.mxu0
    %v3011 = vadd.f32 %v2968, %v3010
    %v3012 = vpop.f32.mrf.mxu0
    %v3013 = vadd.f32 %v2970, %v3012
    %v3014 = vpop.f32.mrf.mxu0
    %v3015 = vadd.f32 %v2972, %v3014
    %3016 = vdwg.mxu0
    %3017 = vmatprep.subr.bf16.mxu0 0
    %3018 = vmatpush1.bf16.msra.mxu0 0
    %3019 = vmatprep.subr.bf16.mxu0 0
    %3020 = vmatpush1.bf16.msra.mxu0 0
    %3021 = vmatprep.subr.bf16.mxu0 0
    %3022 = vmatpush1.bf16.msra.mxu0 0
    %3023 = vmatprep.subr.bf16.mxu0 0
    %3024 = vmatpush1.bf16.msra.mxu0 0
    %3025 = vmatprep.subr.bf16.mxu0 0
    %3026 = vmatpush1.bf16.msra.mxu0 0
    %3027 = vmatprep.subr.bf16.mxu0 0
    %3028 = vmatpush1.bf16.msra.mxu0 0
    %3029 = vmatprep.subr.bf16.mxu0 0
    %3030 = vmatpush1.bf16.msra.mxu0 0
    %3031 = vmatprep.subr.bf16.mxu0 %v2145
    %3032 = vmatpush1.bf16.msra.mxu0 %v2144
    %3033 = vmatprep.subr.bf16.mxu0 0
    %3034 = vmatpush2.bf16.msra.mxu0 0
    %3035 = vmatprep.subr.bf16.mxu0 0
    %3036 = vmatpush2.bf16.msra.mxu0 0
    %3037 = vmatprep.subr.bf16.mxu0 0
    %3038 = vmatpush2.bf16.msra.mxu0 0
    %3039 = vmatprep.subr.bf16.mxu0 0
    %3040 = vmatpush2.bf16.msra.mxu0 0
    %3041 = vmatprep.subr.bf16.mxu0 0
    %3042 = vmatpush2.bf16.msra.mxu0 0
    %3043 = vmatprep.subr.bf16.mxu0 0
    %3044 = vmatpush2.bf16.msra.mxu0 0
    %3045 = vmatprep.subr.bf16.mxu0 0
    %3046 = vmatpush2.bf16.msra.mxu0 0
    %3047 = vmatprep.subr.bf16.mxu0 0
    %3048 = vmatpush2.bf16.msra.mxu0 0
    %3049 = vmatprep.mubr.bf16.mxu0 0
    %3050 = vmatmul.mubr.bf16.gmra.mxu0 %v2542
    %v3051 = vpop.f32.mrf.mxu0
    %v3052 = vadd.f32 %v3009, %v3051
    %v3053 = vpop.f32.mrf.mxu0
    %v3054 = vadd.f32 %v3011, %v3053
    %v3055 = vpop.f32.mrf.mxu0
    %v3056 = vadd.f32 %v3013, %v3055
    %v3057 = vpop.f32.mrf.mxu0
    %v3058 = vadd.f32 %v3015, %v3057
    %3059 = vdwg.mxu0
    %3060 = vmatprep.subr.bf16.mxu0 %v1819
    %3061 = vmatpush1.bf16.msra.mxu0 %v1818
    %3062 = vmatprep.subr.bf16.mxu0 %v1811
    %3063 = vmatpush1.bf16.msra.mxu0 %v1810
    %3064 = vmatprep.subr.bf16.mxu0 %v1803
    %3065 = vmatpush1.bf16.msra.mxu0 %v1802
    %3066 = vmatprep.subr.bf16.mxu0 %v1795
    %3067 = vmatpush1.bf16.msra.mxu0 %v1794
    %3068 = vmatprep.subr.bf16.mxu0 %v1787
    %3069 = vmatpush1.bf16.msra.mxu0 %v1786
    %3070 = vmatprep.subr.bf16.mxu0 %v1779
    %3071 = vmatpush1.bf16.msra.mxu0 %v1778
    %3072 = vmatprep.subr.bf16.mxu0 %v1771
    %3073 = vmatpush1.bf16.msra.mxu0 %v1770
    %3074 = vmatprep.subr.bf16.mxu0 %v1763
    %3075 = vmatpush1.bf16.msra.mxu0 %v1762
    %3076 = vmatprep.subr.bf16.mxu0 %v1883
    %3077 = vmatpush2.bf16.msra.mxu0 %v1882
    %3078 = vmatprep.subr.bf16.mxu0 %v1875
    %3079 = vmatpush2.bf16.msra.mxu0 %v1874
    %3080 = vmatprep.subr.bf16.mxu0 %v1867
    %3081 = vmatpush2.bf16.msra.mxu0 %v1866
    %3082 = vmatprep.subr.bf16.mxu0 %v1859
    %3083 = vmatpush2.bf16.msra.mxu0 %v1858
    %3084 = vmatprep.subr.bf16.mxu0 %v1851
    %3085 = vmatpush2.bf16.msra.mxu0 %v1850
    %3086 = vmatprep.subr.bf16.mxu0 %v1843
    %3087 = vmatpush2.bf16.msra.mxu0 %v1842
    %3088 = vmatprep.subr.bf16.mxu0 %v1835
    %3089 = vmatpush2.bf16.msra.mxu0 %v1834
    %3090 = vmatprep.subr.bf16.mxu0 %v1827
    %3091 = vmatpush2.bf16.msra.mxu0 %v1826
    %3092 = vmatprep.mubr.bf16.mxu0 %v568
    %3093 = vmatmul.mubr.bf16.gmra.mxu0 %v567
    %v3094 = vpop.f32.mrf.mxu0
    %v3095 = vadd.f32 %v532, %v3094
    %v3096 = vpop.f32.mrf.mxu0
    %v3097 = vadd.f32 %v536, %v3096
    %v3098 = vpop.f32.mrf.mxu0
    %v3099 = vadd.f32 %v532, %v3098
    %v3100 = vpop.f32.mrf.mxu0
    %v3101 = vadd.f32 %v536, %v3100
    %3102 = vdwg.mxu0
    %3103 = vmatprep.subr.bf16.mxu0 %v1947
    %3104 = vmatpush1.bf16.msra.mxu0 %v1946
    %3105 = vmatprep.subr.bf16.mxu0 %v1939
    %3106 = vmatpush1.bf16.msra.mxu0 %v1938
    %3107 = vmatprep.subr.bf16.mxu0 %v1931
    %3108 = vmatpush1.bf16.msra.mxu0 %v1930
    %3109 = vmatprep.subr.bf16.mxu0 %v1923
    %3110 = vmatpush1.bf16.msra.mxu0 %v1922
    %3111 = vmatprep.subr.bf16.mxu0 %v1915
    %3112 = vmatpush1.bf16.msra.mxu0 %v1914
    %3113 = vmatprep.subr.bf16.mxu0 %v1907
    %3114 = vmatpush1.bf16.msra.mxu0 %v1906
    %3115 = vmatprep.subr.bf16.mxu0 %v1899
    %3116 = vmatpush1.bf16.msra.mxu0 %v1898
    %3117 = vmatprep.subr.bf16.mxu0 %v1891
    %3118 = vmatpush1.bf16.msra.mxu0 %v1890
    %3119 = vmatprep.subr.bf16.mxu0 %v2011
    %3120 = vmatpush2.bf16.msra.mxu0 %v2010
    %3121 = vmatprep.subr.bf16.mxu0 %v2003
    %3122 = vmatpush2.bf16.msra.mxu0 %v2002
    %3123 = vmatprep.subr.bf16.mxu0 %v1995
    %3124 = vmatpush2.bf16.msra.mxu0 %v1994
    %3125 = vmatprep.subr.bf16.mxu0 %v1987
    %3126 = vmatpush2.bf16.msra.mxu0 %v1986
    %3127 = vmatprep.subr.bf16.mxu0 %v1979
    %3128 = vmatpush2.bf16.msra.mxu0 %v1978
    %3129 = vmatprep.subr.bf16.mxu0 %v1971
    %3130 = vmatpush2.bf16.msra.mxu0 %v1970
    %3131 = vmatprep.subr.bf16.mxu0 %v1963
    %3132 = vmatpush2.bf16.msra.mxu0 %v1962
    %3133 = vmatprep.subr.bf16.mxu0 %v1955
    %3134 = vmatpush2.bf16.msra.mxu0 %v1954
    %3135 = vmatprep.mubr.bf16.mxu0 %v570
    %3136 = vmatmul.mubr.bf16.gmra.mxu0 %v569
    %v3137 = vpop.f32.mrf.mxu0
    %v3138 = vadd.f32 %v3095, %v3137
    %v3139 = vpop.f32.mrf.mxu0
    %v3140 = vadd.f32 %v3097, %v3139
    %v3141 = vpop.f32.mrf.mxu0
    %v3142 = vadd.f32 %v3099, %v3141
    %v3143 = vpop.f32.mrf.mxu0
    %v3144 = vadd.f32 %v3101, %v3143
    %3145 = vdwg.mxu0
    %3146 = vmatprep.subr.bf16.mxu0 %v2075
    %3147 = vmatpush1.bf16.msra.mxu0 %v2074
    %3148 = vmatprep.subr.bf16.mxu0 %v2067
    %3149 = vmatpush1.bf16.msra.mxu0 %v2066
    %3150 = vmatprep.subr.bf16.mxu0 %v2059
    %3151 = vmatpush1.bf16.msra.mxu0 %v2058
    %3152 = vmatprep.subr.bf16.mxu0 %v2051
    %3153 = vmatpush1.bf16.msra.mxu0 %v2050
    %3154 = vmatprep.subr.bf16.mxu0 %v2043
    %3155 = vmatpush1.bf16.msra.mxu0 %v2042
    %3156 = vmatprep.subr.bf16.mxu0 %v2035
    %3157 = vmatpush1.bf16.msra.mxu0 %v2034
    %3158 = vmatprep.subr.bf16.mxu0 %v2027
    %3159 = vmatpush1.bf16.msra.mxu0 %v2026
    %3160 = vmatprep.subr.bf16.mxu0 %v2019
    %3161 = vmatpush1.bf16.msra.mxu0 %v2018
    %3162 = vmatprep.subr.bf16.mxu0 %v2139
    %3163 = vmatpush2.bf16.msra.mxu0 %v2138
    %3164 = vmatprep.subr.bf16.mxu0 %v2131
    %3165 = vmatpush2.bf16.msra.mxu0 %v2130
    %3166 = vmatprep.subr.bf16.mxu0 %v2123
    %3167 = vmatpush2.bf16.msra.mxu0 %v2122
    %3168 = vmatprep.subr.bf16.mxu0 %v2115
    %3169 = vmatpush2.bf16.msra.mxu0 %v2114
    %3170 = vmatprep.subr.bf16.mxu0 %v2107
    %3171 = vmatpush2.bf16.msra.mxu0 %v2106
    %3172 = vmatprep.subr.bf16.mxu0 %v2099
    %3173 = vmatpush2.bf16.msra.mxu0 %v2098
    %3174 = vmatprep.subr.bf16.mxu0 %v2091
    %3175 = vmatpush2.bf16.msra.mxu0 %v2090
    %3176 = vmatprep.subr.bf16.mxu0 %v2083
    %3177 = vmatpush2.bf16.msra.mxu0 %v2082
    %3178 = vmatprep.mubr.bf16.mxu0 %v572
    %3179 = vmatmul.mubr.bf16.gmra.mxu0 %v571
    %v3180 = vpop.f32.mrf.mxu0
    %v3181 = vadd.f32 %v3138, %v3180
    %v3182 = vpop.f32.mrf.mxu0
    %v3183 = vadd.f32 %v3140, %v3182
    %v3184 = vpop.f32.mrf.mxu0
    %v3185 = vadd.f32 %v3142, %v3184
    %v3186 = vpop.f32.mrf.mxu0
    %v3187 = vadd.f32 %v3144, %v3186
    %3188 = vdwg.mxu0
    %3189 = vmatprep.subr.bf16.mxu0 0
    %3190 = vmatpush1.bf16.msra.mxu0 0
    %3191 = vmatprep.subr.bf16.mxu0 0
    %3192 = vmatpush1.bf16.msra.mxu0 0
    %3193 = vmatprep.subr.bf16.mxu0 0
    %3194 = vmatpush1.bf16.msra.mxu0 0
    %3195 = vmatprep.subr.bf16.mxu0 0
    %3196 = vmatpush1.bf16.msra.mxu0 0
    %3197 = vmatprep.subr.bf16.mxu0 0
    %3198 = vmatpush1.bf16.msra.mxu0 0
    %3199 = vmatprep.subr.bf16.mxu0 0
    %3200 = vmatpush1.bf16.msra.mxu0 0
    %3201 = vmatprep.subr.bf16.mxu0 0
    %3202 = vmatpush1.bf16.msra.mxu0 0
    %3203 = vmatprep.subr.bf16.mxu0 %v2147
    %3204 = vmatpush1.bf16.msra.mxu0 %v2146
    %3205 = vmatprep.subr.bf16.mxu0 0
    %3206 = vmatpush2.bf16.msra.mxu0 0
    %3207 = vmatprep.subr.bf16.mxu0 0
    %3208 = vmatpush2.bf16.msra.mxu0 0
    %3209 = vmatprep.subr.bf16.mxu0 0
    %3210 = vmatpush2.bf16.msra.mxu0 0
    %3211 = vmatprep.subr.bf16.mxu0 0
    %3212 = vmatpush2.bf16.msra.mxu0 0
    %3213 = vmatprep.subr.bf16.mxu0 0
    %3214 = vmatpush2.bf16.msra.mxu0 0
    %3215 = vmatprep.subr.bf16.mxu0 0
    %3216 = vmatpush2.bf16.msra.mxu0 0
    %3217 = vmatprep.subr.bf16.mxu0 0
    %3218 = vmatpush2.bf16.msra.mxu0 0
    %3219 = vmatprep.subr.bf16.mxu0 0
    %3220 = vmatpush2.bf16.msra.mxu0 0
    %3221 = vmatprep.mubr.bf16.mxu0 0
    %3222 = vmatmul.mubr.bf16.gmra.mxu0 %v2542
    %v3223 = vpop.f32.mrf.mxu0
    %v3224 = vadd.f32 %v3181, %v3223
    %v3225 = vpop.f32.mrf.mxu0
    %v3226 = vadd.f32 %v3183, %v3225
    %v3227 = vpop.f32.mrf.mxu0
    %v3228 = vadd.f32 %v3185, %v3227
    %v3229 = vpop.f32.mrf.mxu0
    %v3230 = vadd.f32 %v3187, %v3229
    %3231 = vdwg.mxu0
    %v3232 = vmax.f32 %v2708, 0.0
    %v3233 = vmax.f32 %v2710, 0.0
    %v3234 = vmax.f32 %v2880, 0.0
    %v3235 = vmax.f32 %v2882, 0.0
    %v3236 = vmax.f32 %v3052, 0.0
    %v3237 = vmax.f32 %v3054, 0.0
    %v3238 = vmax.f32 %v3224, 0.0
    %v3239 = vmax.f32 %v3226, 0.0
    %v3240 = vmax.f32 %v2712, 0.0
    %v3241 = vmax.f32 %v2714, 0.0
    %v3242 = vmax.f32 %v2884, 0.0
    %v3243 = vmax.f32 %v2886, 0.0
    %v3244 = vmax.f32 %v3056, 0.0
    %v3245 = vmax.f32 %v3058, 0.0
    %v3246 = vmax.f32 %v3228, 0.0
    %v3247 = vmax.f32 %v3230, 0.0
    %v3248 = vpack.c.bf16 %v3240, %v3232
    %v3249 = vpack.c.bf16 %v3241, %v3233
    %v3250 = vpack.c.bf16 %v3242, %v3234
    %v3251 = vpack.c.bf16 %v3243, %v3235
    %v3252 = vpack.c.bf16 %v3244, %v3236
    %v3253 = vpack.c.bf16 %v3245, %v3237
    %v3254 = vpack.c.bf16 %v3246, %v3238
    %v3255 = vpack.c.bf16 %v3247, %v3239
    %v3256 = vld [vmem:[#allocation6] sm:$0xff]
    %v3257 = vld [vmem:[#allocation6 + $0x8] sm:$0xff]
    %v3258 = vld [vmem:[#allocation6 + $0x10] sm:$0xff]
    %v3259 = vld [vmem:[#allocation6 + $0x18] sm:$0xff]
    %v3260 = vld [vmem:[#allocation6 + $0x20] sm:$0xff]
    %v3261 = vld [vmem:[#allocation6 + $0x28] sm:$0xff]
    %v3262 = vld [vmem:[#allocation6 + $0x30] sm:$0xff]
    %v3263 = vld [vmem:[#allocation6 + $0x38] sm:$0xff]
    %v3264 = vld [vmem:[#allocation6 + $0x40] sm:$0xff]
    %v3265 = vld [vmem:[#allocation6 + $0x48] sm:$0xff]
    %v3266 = vld [vmem:[#allocation6 + $0x50] sm:$0xff]
    %v3267 = vld [vmem:[#allocation6 + $0x58] sm:$0xff]
    %v3268 = vld [vmem:[#allocation6 + $0x60] sm:$0xff]
    %v3269 = vld [vmem:[#allocation6 + $0x68] sm:$0xff]
    %v3270 = vld [vmem:[#allocation6 + $0x70] sm:$0xff]
    %v3271 = vld [vmem:[#allocation6 + $0x78] sm:$0xff]
    %v3272 = vld [vmem:[#allocation6 + $0x80] sm:$0xff]
    %v3273 = vld [vmem:[#allocation6 + $0x88] sm:$0xff]
    %v3274 = vld [vmem:[#allocation6 + $0x90] sm:$0xff]
    %v3275 = vld [vmem:[#allocation6 + $0x98] sm:$0xff]
    %v3276 = vld [vmem:[#allocation6 + $0xa0] sm:$0xff]
    %v3277 = vld [vmem:[#allocation6 + $0xa8] sm:$0xff]
    %v3278 = vld [vmem:[#allocation6 + $0xb0] sm:$0xff]
    %v3279 = vld [vmem:[#allocation6 + $0xb8] sm:$0xff]
    %v3280 = vld [vmem:[#allocation6 + $0xc0] sm:$0xff]
    %v3281 = vld [vmem:[#allocation6 + $0xc8] sm:$0xff]
    %v3282 = vld [vmem:[#allocation6 + $0xd0] sm:$0xff]
    %v3283 = vld [vmem:[#allocation6 + $0xd8] sm:$0xff]
    %v3284 = vld [vmem:[#allocation6 + $0xe0] sm:$0xff]
    %v3285 = vld [vmem:[#allocation6 + $0xe8] sm:$0xff]
    %v3286 = vld [vmem:[#allocation6 + $0xf0] sm:$0xff]
    %v3287 = vld [vmem:[#allocation6 + $0xf8] sm:$0xff]
    %v3288 = vld [vmem:[#allocation6 + $0x100] sm:$0xff]
    %v3289 = vld [vmem:[#allocation6 + $0x108] sm:$0xff]
    %v3290 = vld [vmem:[#allocation6 + $0x110] sm:$0xff]
    %v3291 = vld [vmem:[#allocation6 + $0x118] sm:$0xff]
    %v3292 = vld [vmem:[#allocation6 + $0x120] sm:$0xff]
    %v3293 = vld [vmem:[#allocation6 + $0x128] sm:$0xff]
    %v3294 = vld [vmem:[#allocation6 + $0x130] sm:$0xff]
    %v3295 = vld [vmem:[#allocation6 + $0x138] sm:$0xff]
    %v3296 = vld [vmem:[#allocation6 + $0x140] sm:$0xff]
    %v3297 = vld [vmem:[#allocation6 + $0x148] sm:$0xff]
    %v3298 = vld [vmem:[#allocation6 + $0x150] sm:$0xff]
    %v3299 = vld [vmem:[#allocation6 + $0x158] sm:$0xff]
    %v3300 = vld [vmem:[#allocation6 + $0x160] sm:$0xff]
    %v3301 = vld [vmem:[#allocation6 + $0x168] sm:$0xff]
    %v3302 = vld [vmem:[#allocation6 + $0x170] sm:$0xff]
    %v3303 = vld [vmem:[#allocation6 + $0x178] sm:$0xff]
    %v3304 = vld [vmem:[#allocation6 + $0x180] sm:$0xff]
    %v3305 = vld [vmem:[#allocation6 + $0x188] sm:$0xff]
    %v3306 = vld [vmem:[#allocation6 + $0x190] sm:$0xff]
    %v3307 = vld [vmem:[#allocation6 + $0x198] sm:$0xff]
    %v3308 = vld [vmem:[#allocation6 + $0x1a0] sm:$0xff]
    %v3309 = vld [vmem:[#allocation6 + $0x1a8] sm:$0xff]
    %v3310 = vld [vmem:[#allocation6 + $0x1b0] sm:$0xff]
    %v3311 = vld [vmem:[#allocation6 + $0x1b8] sm:$0xff]
    %v3312 = vld [vmem:[#allocation6 + $0x1c0] sm:$0xff]
    %v3313 = vld [vmem:[#allocation6 + $0x1c8] sm:$0xff]
    %v3314 = vld [vmem:[#allocation6 + $0x1d0] sm:$0xff]
    %v3315 = vld [vmem:[#allocation6 + $0x1d8] sm:$0xff]
    %v3316 = vld [vmem:[#allocation6 + $0x1e0] sm:$0xff]
    %v3317 = vld [vmem:[#allocation6 + $0x1e8] sm:$0xff]
    %v3318 = vld [vmem:[#allocation6 + $0x1f0] sm:$0xff]
    %v3319 = vld [vmem:[#allocation6 + $0x1f8] sm:$0xff]
    %v3320 = vld [vmem:[#allocation6 + $0x200] sm:$0xff]
    %v3321 = vld [vmem:[#allocation6 + $0x208] sm:$0xff]
    %v3322 = vld [vmem:[#allocation6 + $0x210] sm:$0xff]
    %v3323 = vld [vmem:[#allocation6 + $0x218] sm:$0xff]
    %v3324 = vld [vmem:[#allocation6 + $0x220] sm:$0xff]
    %v3325 = vld [vmem:[#allocation6 + $0x228] sm:$0xff]
    %v3326 = vld [vmem:[#allocation6 + $0x230] sm:$0xff]
    %v3327 = vld [vmem:[#allocation6 + $0x238] sm:$0xff]
    %v3328 = vld [vmem:[#allocation6 + $0x240] sm:$0xff]
    %v3329 = vld [vmem:[#allocation6 + $0x248] sm:$0xff]
    %v3330 = vld [vmem:[#allocation6 + $0x250] sm:$0xff]
    %v3331 = vld [vmem:[#allocation6 + $0x258] sm:$0xff]
    %v3332 = vld [vmem:[#allocation6 + $0x260] sm:$0xff]
    %v3333 = vld [vmem:[#allocation6 + $0x268] sm:$0xff]
    %v3334 = vld [vmem:[#allocation6 + $0x270] sm:$0xff]
    %v3335 = vld [vmem:[#allocation6 + $0x278] sm:$0xff]
    %v3336 = vld [vmem:[#allocation6 + $0x280] sm:$0xff]
    %v3337 = vld [vmem:[#allocation6 + $0x288] sm:$0xff]
    %v3338 = vld [vmem:[#allocation6 + $0x290] sm:$0xff]
    %v3339 = vld [vmem:[#allocation6 + $0x298] sm:$0xff]
    %v3340 = vld [vmem:[#allocation6 + $0x2a0] sm:$0xff]
    %v3341 = vld [vmem:[#allocation6 + $0x2a8] sm:$0xff]
    %v3342 = vld [vmem:[#allocation6 + $0x2b0] sm:$0xff]
    %v3343 = vld [vmem:[#allocation6 + $0x2b8] sm:$0xff]
    %v3344 = vld [vmem:[#allocation6 + $0x2c0] sm:$0xff]
    %v3345 = vld [vmem:[#allocation6 + $0x2c8] sm:$0xff]
    %v3346 = vld [vmem:[#allocation6 + $0x2d0] sm:$0xff]
    %v3347 = vld [vmem:[#allocation6 + $0x2d8] sm:$0xff]
    %v3348 = vld [vmem:[#allocation6 + $0x2e0] sm:$0xff]
    %v3349 = vld [vmem:[#allocation6 + $0x2e8] sm:$0xff]
    %v3350 = vld [vmem:[#allocation6 + $0x2f0] sm:$0xff]
    %v3351 = vld [vmem:[#allocation6 + $0x2f8] sm:$0xff]
    %v3352 = vld [vmem:[#allocation6 + $0x300] sm:$0xff]
    %v3353 = vld [vmem:[#allocation6 + $0x308] sm:$0xff]
    %v3354 = vld [vmem:[#allocation6 + $0x310] sm:$0xff]
    %v3355 = vld [vmem:[#allocation6 + $0x318] sm:$0xff]
    %v3356 = vld [vmem:[#allocation6 + $0x320] sm:$0xff]
    %v3357 = vld [vmem:[#allocation6 + $0x328] sm:$0xff]
    %v3358 = vld [vmem:[#allocation6 + $0x330] sm:$0xff]
    %v3359 = vld [vmem:[#allocation6 + $0x338] sm:$0xff]
    %v3360 = vld [vmem:[#allocation6 + $0x340] sm:$0xff]
    %v3361 = vld [vmem:[#allocation6 + $0x348] sm:$0xff]
    %v3362 = vld [vmem:[#allocation6 + $0x350] sm:$0xff]
    %v3363 = vld [vmem:[#allocation6 + $0x358] sm:$0xff]
    %v3364 = vld [vmem:[#allocation6 + $0x360] sm:$0xff]
    %v3365 = vld [vmem:[#allocation6 + $0x368] sm:$0xff]
    %v3366 = vld [vmem:[#allocation6 + $0x370] sm:$0xff]
    %v3367 = vld [vmem:[#allocation6 + $0x378] sm:$0xff]
    %v3368 = vld [vmem:[#allocation6 + $0x380] sm:$0xff]
    %v3369 = vld [vmem:[#allocation6 + $0x388] sm:$0xff]
    %v3370 = vld [vmem:[#allocation6 + $0x390] sm:$0xff]
    %v3371 = vld [vmem:[#allocation6 + $0x398] sm:$0xff]
    %v3372 = vld [vmem:[#allocation6 + $0x3a0] sm:$0xff]
    %v3373 = vld [vmem:[#allocation6 + $0x3a8] sm:$0xff]
    %v3374 = vld [vmem:[#allocation6 + $0x3b0] sm:$0xff]
    %v3375 = vld [vmem:[#allocation6 + $0x3b8] sm:$0xff]
    %v3376 = vld [vmem:[#allocation6 + $0x3c0] sm:$0xff]
    %v3377 = vld [vmem:[#allocation6 + $0x3c8] sm:$0xff]
    %v3378 = vld [vmem:[#allocation6 + $0x3d0] sm:$0xff]
    %v3379 = vld [vmem:[#allocation6 + $0x3d8] sm:$0xff]
    %v3380 = vld [vmem:[#allocation6 + $0x3e0] sm:$0xff]
    %v3381 = vld [vmem:[#allocation6 + $0x3e8] sm:$0xff]
    %v3382 = vld [vmem:[#allocation6 + $0x3f0] sm:$0xff]
    %v3383 = vld [vmem:[#allocation6 + $0x3f8] sm:$0xff]
    %v3384 = vld [vmem:[#allocation6 + $0x400] sm:$0xff]
    %v3385 = vld [vmem:[#allocation6 + $0x408] sm:$0xff]
    %v3386 = vld [vmem:[#allocation6 + $0x410] sm:$0xff]
    %v3387 = vld [vmem:[#allocation6 + $0x418] sm:$0xff]
    %v3388 = vld [vmem:[#allocation6 + $0x420] sm:$0xff]
    %v3389 = vld [vmem:[#allocation6 + $0x428] sm:$0xff]
    %v3390 = vld [vmem:[#allocation6 + $0x430] sm:$0xff]
    %v3391 = vld [vmem:[#allocation6 + $0x438] sm:$0xff]
    %v3392 = vld [vmem:[#allocation6 + $0x440] sm:$0xff]
    %v3393 = vld [vmem:[#allocation6 + $0x448] sm:$0xff]
    %v3394 = vld [vmem:[#allocation6 + $0x450] sm:$0xff]
    %v3395 = vld [vmem:[#allocation6 + $0x458] sm:$0xff]
    %v3396 = vld [vmem:[#allocation6 + $0x460] sm:$0xff]
    %v3397 = vld [vmem:[#allocation6 + $0x468] sm:$0xff]
    %v3398 = vld [vmem:[#allocation6 + $0x470] sm:$0xff]
    %v3399 = vld [vmem:[#allocation6 + $0x478] sm:$0xff]
    %v3400 = vld [vmem:[#allocation6 + $0x480] sm:$0xff]
    %v3401 = vld [vmem:[#allocation6 + $0x488] sm:$0xff]
    %v3402 = vld [vmem:[#allocation6 + $0x490] sm:$0xff]
    %v3403 = vld [vmem:[#allocation6 + $0x498] sm:$0xff]
    %v3404 = vld [vmem:[#allocation6 + $0x4a0] sm:$0xff]
    %v3405 = vld [vmem:[#allocation6 + $0x4a8] sm:$0xff]
    %v3406 = vld [vmem:[#allocation6 + $0x4b0] sm:$0xff]
    %v3407 = vld [vmem:[#allocation6 + $0x4b8] sm:$0xff]
    %v3408 = vld [vmem:[#allocation6 + $0x4c0] sm:$0xff]
    %v3409 = vld [vmem:[#allocation6 + $0x4c8] sm:$0xff]
    %v3410 = vld [vmem:[#allocation6 + $0x4d0] sm:$0xff]
    %v3411 = vld [vmem:[#allocation6 + $0x4d8] sm:$0xff]
    %v3412 = vld [vmem:[#allocation6 + $0x4e0] sm:$0xff]
    %v3413 = vld [vmem:[#allocation6 + $0x4e8] sm:$0xff]
    %v3414 = vld [vmem:[#allocation6 + $0x4f0] sm:$0xff]
    %v3415 = vld [vmem:[#allocation6 + $0x4f8] sm:$0xff]
    %v3416 = vld [vmem:[#allocation6 + $0x500] sm:$0xff]
    %v3417 = vld [vmem:[#allocation6 + $0x508] sm:$0xff]
    %v3418 = vld [vmem:[#allocation6 + $0x510] sm:$0xff]
    %v3419 = vld [vmem:[#allocation6 + $0x518] sm:$0xff]
    %v3420 = vld [vmem:[#allocation6 + $0x520] sm:$0xff]
    %v3421 = vld [vmem:[#allocation6 + $0x528] sm:$0xff]
    %v3422 = vld [vmem:[#allocation6 + $0x530] sm:$0xff]
    %v3423 = vld [vmem:[#allocation6 + $0x538] sm:$0xff]
    %v3424 = vld [vmem:[#allocation6 + $0x540] sm:$0xff]
    %v3425 = vld [vmem:[#allocation6 + $0x548] sm:$0xff]
    %v3426 = vld [vmem:[#allocation6 + $0x550] sm:$0xff]
    %v3427 = vld [vmem:[#allocation6 + $0x558] sm:$0xff]
    %v3428 = vld [vmem:[#allocation6 + $0x560] sm:$0xff]
    %v3429 = vld [vmem:[#allocation6 + $0x568] sm:$0xff]
    %v3430 = vld [vmem:[#allocation6 + $0x570] sm:$0xff]
    %v3431 = vld [vmem:[#allocation6 + $0x578] sm:$0xff]
    %v3432 = vld [vmem:[#allocation6 + $0x580] sm:$0xff]
    %v3433 = vld [vmem:[#allocation6 + $0x588] sm:$0xff]
    %v3434 = vld [vmem:[#allocation6 + $0x590] sm:$0xff]
    %v3435 = vld [vmem:[#allocation6 + $0x598] sm:$0xff]
    %v3436 = vld [vmem:[#allocation6 + $0x5a0] sm:$0xff]
    %v3437 = vld [vmem:[#allocation6 + $0x5a8] sm:$0xff]
    %v3438 = vld [vmem:[#allocation6 + $0x5b0] sm:$0xff]
    %v3439 = vld [vmem:[#allocation6 + $0x5b8] sm:$0xff]
    %v3440 = vld [vmem:[#allocation6 + $0x5c0] sm:$0xff]
    %v3441 = vld [vmem:[#allocation6 + $0x5c8] sm:$0xff]
    %v3442 = vld [vmem:[#allocation6 + $0x5d0] sm:$0xff]
    %v3443 = vld [vmem:[#allocation6 + $0x5d8] sm:$0xff]
    %v3444 = vld [vmem:[#allocation6 + $0x5e0] sm:$0xff]
    %v3445 = vld [vmem:[#allocation6 + $0x5e8] sm:$0xff]
    %v3446 = vld [vmem:[#allocation6 + $0x5f0] sm:$0xff]
    %v3447 = vld [vmem:[#allocation6 + $0x5f8] sm:$0xff]
    %v3448 = vld [vmem:[#allocation6 + $0x600] sm:$0xff]
    %v3449 = vld [vmem:[#allocation6 + $0x608] sm:$0xff]
    %v3450 = vld [vmem:[#allocation6 + $0x610] sm:$0xff]
    %v3451 = vld [vmem:[#allocation6 + $0x618] sm:$0xff]
    %v3452 = vld [vmem:[#allocation6 + $0x620] sm:$0xff]
    %v3453 = vld [vmem:[#allocation6 + $0x628] sm:$0xff]
    %v3454 = vld [vmem:[#allocation6 + $0x630] sm:$0xff]
    %v3455 = vld [vmem:[#allocation6 + $0x638] sm:$0xff]
    %v3456 = vld [vmem:[#allocation6 + $0x640] sm:$0xff]
    %v3457 = vld [vmem:[#allocation6 + $0x648] sm:$0xff]
    %v3458 = vld [vmem:[#allocation6 + $0x650] sm:$0xff]
    %v3459 = vld [vmem:[#allocation6 + $0x658] sm:$0xff]
    %v3460 = vld [vmem:[#allocation6 + $0x660] sm:$0xff]
    %v3461 = vld [vmem:[#allocation6 + $0x668] sm:$0xff]
    %v3462 = vld [vmem:[#allocation6 + $0x670] sm:$0xff]
    %v3463 = vld [vmem:[#allocation6 + $0x678] sm:$0xff]
    %v3464 = vld [vmem:[#allocation6 + $0x680] sm:$0xff]
    %v3465 = vld [vmem:[#allocation6 + $0x688] sm:$0xff]
    %v3466 = vld [vmem:[#allocation6 + $0x690] sm:$0xff]
    %v3467 = vld [vmem:[#allocation6 + $0x698] sm:$0xff]
    %v3468 = vld [vmem:[#allocation6 + $0x6a0] sm:$0xff]
    %v3469 = vld [vmem:[#allocation6 + $0x6a8] sm:$0xff]
    %v3470 = vld [vmem:[#allocation6 + $0x6b0] sm:$0xff]
    %v3471 = vld [vmem:[#allocation6 + $0x6b8] sm:$0xff]
    %v3472 = vld [vmem:[#allocation6 + $0x6c0] sm:$0xff]
    %v3473 = vld [vmem:[#allocation6 + $0x6c8] sm:$0xff]
    %v3474 = vld [vmem:[#allocation6 + $0x6d0] sm:$0xff]
    %v3475 = vld [vmem:[#allocation6 + $0x6d8] sm:$0xff]
    %v3476 = vld [vmem:[#allocation6 + $0x6e0] sm:$0xff]
    %v3477 = vld [vmem:[#allocation6 + $0x6e8] sm:$0xff]
    %v3478 = vld [vmem:[#allocation6 + $0x6f0] sm:$0xff]
    %v3479 = vld [vmem:[#allocation6 + $0x6f8] sm:$0xff]
    %v3480 = vld [vmem:[#allocation6 + $0x700] sm:$0xff]
    %v3481 = vld [vmem:[#allocation6 + $0x708] sm:$0xff]
    %v3482 = vld [vmem:[#allocation6 + $0x710] sm:$0xff]
    %v3483 = vld [vmem:[#allocation6 + $0x718] sm:$0xff]
    %v3484 = vld [vmem:[#allocation6 + $0x720] sm:$0xff]
    %v3485 = vld [vmem:[#allocation6 + $0x728] sm:$0xff]
    %v3486 = vld [vmem:[#allocation6 + $0x730] sm:$0xff]
    %v3487 = vld [vmem:[#allocation6 + $0x738] sm:$0xff]
    %v3488 = vld [vmem:[#allocation6 + $0x740] sm:$0xff]
    %v3489 = vld [vmem:[#allocation6 + $0x748] sm:$0xff]
    %v3490 = vld [vmem:[#allocation6 + $0x750] sm:$0xff]
    %v3491 = vld [vmem:[#allocation6 + $0x758] sm:$0xff]
    %v3492 = vld [vmem:[#allocation6 + $0x760] sm:$0xff]
    %v3493 = vld [vmem:[#allocation6 + $0x768] sm:$0xff]
    %v3494 = vld [vmem:[#allocation6 + $0x770] sm:$0xff]
    %v3495 = vld [vmem:[#allocation6 + $0x778] sm:$0xff]
    %v3496 = vld [vmem:[#allocation6 + $0x780] sm:$0xff]
    %v3497 = vld [vmem:[#allocation6 + $0x788] sm:$0xff]
    %v3498 = vld [vmem:[#allocation6 + $0x790] sm:$0xff]
    %v3499 = vld [vmem:[#allocation6 + $0x798] sm:$0xff]
    %v3500 = vld [vmem:[#allocation6 + $0x7a0] sm:$0xff]
    %v3501 = vld [vmem:[#allocation6 + $0x7a8] sm:$0xff]
    %v3502 = vld [vmem:[#allocation6 + $0x7b0] sm:$0xff]
    %v3503 = vld [vmem:[#allocation6 + $0x7b8] sm:$0xff]
    %v3504 = vld [vmem:[#allocation6 + $0x7c0] sm:$0xff]
    %v3505 = vld [vmem:[#allocation6 + $0x7c8] sm:$0xff]
    %v3506 = vld [vmem:[#allocation6 + $0x7d0] sm:$0xff]
    %v3507 = vld [vmem:[#allocation6 + $0x7d8] sm:$0xff]
    %v3508 = vld [vmem:[#allocation6 + $0x7e0] sm:$0xff]
    %v3509 = vld [vmem:[#allocation6 + $0x7e8] sm:$0xff]
    %v3510 = vld [vmem:[#allocation6 + $0x7f0] sm:$0xff]
    %v3511 = vld [vmem:[#allocation6 + $0x7f8] sm:$0xff]
    %v3512 = vld [vmem:[#allocation6 + $0x800] sm:$0xff]
    %v3513 = vld [vmem:[#allocation6 + $0x808] sm:$0xff]
    %v3514 = vld [vmem:[#allocation6 + $0x810] sm:$0xff]
    %v3515 = vld [vmem:[#allocation6 + $0x818] sm:$0xff]
    %v3516 = vld [vmem:[#allocation6 + $0x820] sm:$0xff]
    %v3517 = vld [vmem:[#allocation6 + $0x828] sm:$0xff]
    %v3518 = vld [vmem:[#allocation6 + $0x830] sm:$0xff]
    %v3519 = vld [vmem:[#allocation6 + $0x838] sm:$0xff]
    %v3520 = vld [vmem:[#allocation6 + $0x840] sm:$0xff]
    %v3521 = vld [vmem:[#allocation6 + $0x848] sm:$0xff]
    %v3522 = vld [vmem:[#allocation6 + $0x850] sm:$0xff]
    %v3523 = vld [vmem:[#allocation6 + $0x858] sm:$0xff]
    %v3524 = vld [vmem:[#allocation6 + $0x860] sm:$0xff]
    %v3525 = vld [vmem:[#allocation6 + $0x868] sm:$0xff]
    %v3526 = vld [vmem:[#allocation6 + $0x870] sm:$0xff]
    %v3527 = vld [vmem:[#allocation6 + $0x878] sm:$0xff]
    %v3528 = vld [vmem:[#allocation6 + $0x880] sm:$0xff]
    %v3529 = vld [vmem:[#allocation6 + $0x888] sm:$0xff]
    %v3530 = vld [vmem:[#allocation6 + $0x890] sm:$0xff]
    %v3531 = vld [vmem:[#allocation6 + $0x898] sm:$0xff]
    %v3532 = vld [vmem:[#allocation6 + $0x8a0] sm:$0xff]
    %v3533 = vld [vmem:[#allocation6 + $0x8a8] sm:$0xff]
    %v3534 = vld [vmem:[#allocation6 + $0x8b0] sm:$0xff]
    %v3535 = vld [vmem:[#allocation6 + $0x8b8] sm:$0xff]
    %v3536 = vld [vmem:[#allocation6 + $0x8c0] sm:$0xff]
    %v3537 = vld [vmem:[#allocation6 + $0x8c8] sm:$0xff]
    %v3538 = vld [vmem:[#allocation6 + $0x8d0] sm:$0xff]
    %v3539 = vld [vmem:[#allocation6 + $0x8d8] sm:$0xff]
    %v3540 = vld [vmem:[#allocation6 + $0x8e0] sm:$0xff]
    %v3541 = vld [vmem:[#allocation6 + $0x8e8] sm:$0xff]
    %v3542 = vld [vmem:[#allocation6 + $0x8f0] sm:$0xff]
    %v3543 = vld [vmem:[#allocation6 + $0x8f8] sm:$0xff]
    %v3544 = vld [vmem:[#allocation6 + $0x900] sm:$0xff]
    %v3545 = vld [vmem:[#allocation6 + $0x908] sm:$0xff]
    %v3546 = vld [vmem:[#allocation6 + $0x910] sm:$0xff]
    %v3547 = vld [vmem:[#allocation6 + $0x918] sm:$0xff]
    %v3548 = vld [vmem:[#allocation6 + $0x920] sm:$0xff]
    %v3549 = vld [vmem:[#allocation6 + $0x928] sm:$0xff]
    %v3550 = vld [vmem:[#allocation6 + $0x930] sm:$0xff]
    %v3551 = vld [vmem:[#allocation6 + $0x938] sm:$0xff]
    %v3552 = vld [vmem:[#allocation6 + $0x940] sm:$0xff]
    %v3553 = vld [vmem:[#allocation6 + $0x948] sm:$0xff]
    %v3554 = vld [vmem:[#allocation6 + $0x950] sm:$0xff]
    %v3555 = vld [vmem:[#allocation6 + $0x958] sm:$0xff]
    %v3556 = vld [vmem:[#allocation6 + $0x960] sm:$0xff]
    %v3557 = vld [vmem:[#allocation6 + $0x968] sm:$0xff]
    %v3558 = vld [vmem:[#allocation6 + $0x970] sm:$0xff]
    %v3559 = vld [vmem:[#allocation6 + $0x978] sm:$0xff]
    %v3560 = vld [vmem:[#allocation6 + $0x980] sm:$0xff]
    %v3561 = vld [vmem:[#allocation6 + $0x988] sm:$0xff]
    %v3562 = vld [vmem:[#allocation6 + $0x990] sm:$0xff]
    %v3563 = vld [vmem:[#allocation6 + $0x998] sm:$0xff]
    %v3564 = vld [vmem:[#allocation6 + $0x9a0] sm:$0xff]
    %v3565 = vld [vmem:[#allocation6 + $0x9a8] sm:$0xff]
    %v3566 = vld [vmem:[#allocation6 + $0x9b0] sm:$0xff]
    %v3567 = vld [vmem:[#allocation6 + $0x9b8] sm:$0xff]
    %v3568 = vld [vmem:[#allocation6 + $0x9c0] sm:$0xff]
    %v3569 = vld [vmem:[#allocation6 + $0x9c8] sm:$0xff]
    %v3570 = vld [vmem:[#allocation6 + $0x9d0] sm:$0xff]
    %v3571 = vld [vmem:[#allocation6 + $0x9d8] sm:$0xff]
    %v3572 = vld [vmem:[#allocation6 + $0x9e0] sm:$0xff]
    %v3573 = vld [vmem:[#allocation6 + $0x9e8] sm:$0xff]
    %v3574 = vld [vmem:[#allocation6 + $0x9f0] sm:$0xff]
    %v3575 = vld [vmem:[#allocation6 + $0x9f8] sm:$0xff]
    %v3576 = vld [vmem:[#allocation6 + $0xa00] sm:$0xff]
    %v3577 = vld [vmem:[#allocation6 + $0xa08] sm:$0xff]
    %v3578 = vld [vmem:[#allocation6 + $0xa10] sm:$0xff]
    %v3579 = vld [vmem:[#allocation6 + $0xa18] sm:$0xff]
    %v3580 = vld [vmem:[#allocation6 + $0xa20] sm:$0xff]
    %v3581 = vld [vmem:[#allocation6 + $0xa28] sm:$0xff]
    %v3582 = vld [vmem:[#allocation6 + $0xa30] sm:$0xff]
    %v3583 = vld [vmem:[#allocation6 + $0xa38] sm:$0xff]
    %v3584 = vld [vmem:[#allocation6 + $0xa40] sm:$0xff]
    %v3585 = vld [vmem:[#allocation6 + $0xa48] sm:$0xff]
    %v3586 = vld [vmem:[#allocation6 + $0xa50] sm:$0xff]
    %v3587 = vld [vmem:[#allocation6 + $0xa58] sm:$0xff]
    %v3588 = vld [vmem:[#allocation6 + $0xa60] sm:$0xff]
    %v3589 = vld [vmem:[#allocation6 + $0xa68] sm:$0xff]
    %v3590 = vld [vmem:[#allocation6 + $0xa70] sm:$0xff]
    %v3591 = vld [vmem:[#allocation6 + $0xa78] sm:$0xff]
    %v3592 = vld [vmem:[#allocation6 + $0xa80] sm:$0xff]
    %v3593 = vld [vmem:[#allocation6 + $0xa88] sm:$0xff]
    %v3594 = vld [vmem:[#allocation6 + $0xa90] sm:$0xff]
    %v3595 = vld [vmem:[#allocation6 + $0xa98] sm:$0xff]
    %v3596 = vld [vmem:[#allocation6 + $0xaa0] sm:$0xff]
    %v3597 = vld [vmem:[#allocation6 + $0xaa8] sm:$0xff]
    %v3598 = vld [vmem:[#allocation6 + $0xab0] sm:$0xff]
    %v3599 = vld [vmem:[#allocation6 + $0xab8] sm:$0xff]
    %v3600 = vld [vmem:[#allocation6 + $0xac0] sm:$0xff]
    %v3601 = vld [vmem:[#allocation6 + $0xac8] sm:$0xff]
    %v3602 = vld [vmem:[#allocation6 + $0xad0] sm:$0xff]
    %v3603 = vld [vmem:[#allocation6 + $0xad8] sm:$0xff]
    %v3604 = vld [vmem:[#allocation6 + $0xae0] sm:$0xff]
    %v3605 = vld [vmem:[#allocation6 + $0xae8] sm:$0xff]
    %v3606 = vld [vmem:[#allocation6 + $0xaf0] sm:$0xff]
    %v3607 = vld [vmem:[#allocation6 + $0xaf8] sm:$0xff]
    %v3608 = vld [vmem:[#allocation6 + $0xb00] sm:$0xff]
    %v3609 = vld [vmem:[#allocation6 + $0xb08] sm:$0xff]
    %v3610 = vld [vmem:[#allocation6 + $0xb10] sm:$0xff]
    %v3611 = vld [vmem:[#allocation6 + $0xb18] sm:$0xff]
    %v3612 = vld [vmem:[#allocation6 + $0xb20] sm:$0xff]
    %v3613 = vld [vmem:[#allocation6 + $0xb28] sm:$0xff]
    %v3614 = vld [vmem:[#allocation6 + $0xb30] sm:$0xff]
    %v3615 = vld [vmem:[#allocation6 + $0xb38] sm:$0xff]
    %v3616 = vld [vmem:[#allocation6 + $0xb40] sm:$0xff]
    %v3617 = vld [vmem:[#allocation6 + $0xb48] sm:$0xff]
    %v3618 = vld [vmem:[#allocation6 + $0xb50] sm:$0xff]
    %v3619 = vld [vmem:[#allocation6 + $0xb58] sm:$0xff]
    %v3620 = vld [vmem:[#allocation6 + $0xb60] sm:$0xff]
    %v3621 = vld [vmem:[#allocation6 + $0xb68] sm:$0xff]
    %v3622 = vld [vmem:[#allocation6 + $0xb70] sm:$0xff]
    %v3623 = vld [vmem:[#allocation6 + $0xb78] sm:$0xff]
    %v3624 = vld [vmem:[#allocation6 + $0xb80] sm:$0xff]
    %v3625 = vld [vmem:[#allocation6 + $0xb88] sm:$0xff]
    %v3626 = vld [vmem:[#allocation6 + $0xb90] sm:$0xff]
    %v3627 = vld [vmem:[#allocation6 + $0xb98] sm:$0xff]
    %v3628 = vld [vmem:[#allocation6 + $0xba0] sm:$0xff]
    %v3629 = vld [vmem:[#allocation6 + $0xba8] sm:$0xff]
    %v3630 = vld [vmem:[#allocation6 + $0xbb0] sm:$0xff]
    %v3631 = vld [vmem:[#allocation6 + $0xbb8] sm:$0xff]
    %v3632 = vld [vmem:[#allocation6 + $0xbc0] sm:$0xff]
    %v3633 = vld [vmem:[#allocation6 + $0xbc8] sm:$0xff]
    %v3634 = vld [vmem:[#allocation6 + $0xbd0] sm:$0xff]
    %v3635 = vld [vmem:[#allocation6 + $0xbd8] sm:$0xff]
    %v3636 = vld [vmem:[#allocation6 + $0xbe0] sm:$0xff]
    %v3637 = vld [vmem:[#allocation6 + $0xbe8] sm:$0xff]
    %v3638 = vld [vmem:[#allocation6 + $0xbf0] sm:$0xff]
    %v3639 = vld [vmem:[#allocation6 + $0xbf8] sm:$0xff]
    %v3640 = vld [vmem:[#allocation6 + $0xc00] sm:$0xff]
    %v3641 = vld [vmem:[#allocation6 + $0xc08] sm:$0xff]
    %v3642 = vld [vmem:[#allocation6 + $0xc10] sm:$0xff]
    %v3643 = vld [vmem:[#allocation6 + $0xc18] sm:$0xff]
    %v3644 = vld [vmem:[#allocation6 + $0xc20] sm:$0xff]
    %v3645 = vld [vmem:[#allocation6 + $0xc28] sm:$0xff]
    %v3646 = vld [vmem:[#allocation6 + $0xc30] sm:$0xff]
    %v3647 = vld [vmem:[#allocation6 + $0xc38] sm:$0xff]
    %v3648 = vld [vmem:[#allocation6 + $0xc40] sm:$0xff]
    %v3649 = vld [vmem:[#allocation6 + $0xc48] sm:$0xff]
    %v3650 = vld [vmem:[#allocation6 + $0xc50] sm:$0xff]
    %v3651 = vld [vmem:[#allocation6 + $0xc58] sm:$0xff]
    %v3652 = vld [vmem:[#allocation6 + $0xc60] sm:$0xff]
    %v3653 = vld [vmem:[#allocation6 + $0xc68] sm:$0xff]
    %v3654 = vld [vmem:[#allocation6 + $0xc70] sm:$0xff]
    %v3655 = vld [vmem:[#allocation6 + $0xc78] sm:$0xff]
    %v3656 = vld [vmem:[#allocation6 + $0xc80] sm:$0xff]
    %v3657 = vld [vmem:[#allocation6 + $0xc88] sm:$0xff]
    %v3658 = vld [vmem:[#allocation6 + $0xc90] sm:$0xff]
    %v3659 = vld [vmem:[#allocation6 + $0xc98] sm:$0xff]
    %v3660 = vld [vmem:[#allocation6 + $0xca0] sm:$0xff]
    %v3661 = vld [vmem:[#allocation6 + $0xca8] sm:$0xff]
    %v3662 = vld [vmem:[#allocation6 + $0xcb0] sm:$0xff]
    %v3663 = vld [vmem:[#allocation6 + $0xcb8] sm:$0xff]
    %v3664 = vld [vmem:[#allocation6 + $0xcc0] sm:$0xff]
    %v3665 = vld [vmem:[#allocation6 + $0xcc8] sm:$0xff]
    %v3666 = vld [vmem:[#allocation6 + $0xcd0] sm:$0xff]
    %v3667 = vld [vmem:[#allocation6 + $0xcd8] sm:$0xff]
    %v3668 = vld [vmem:[#allocation6 + $0xce0] sm:$0xff]
    %v3669 = vld [vmem:[#allocation6 + $0xce8] sm:$0xff]
    %v3670 = vld [vmem:[#allocation6 + $0xcf0] sm:$0xff]
    %v3671 = vld [vmem:[#allocation6 + $0xcf8] sm:$0xff]
    %v3672 = vld [vmem:[#allocation6 + $0xd00] sm:$0xff]
    %v3673 = vld [vmem:[#allocation6 + $0xd08] sm:$0xff]
    %v3674 = vld [vmem:[#allocation6 + $0xd10] sm:$0xff]
    %v3675 = vld [vmem:[#allocation6 + $0xd18] sm:$0xff]
    %v3676 = vld [vmem:[#allocation6 + $0xd20] sm:$0xff]
    %v3677 = vld [vmem:[#allocation6 + $0xd28] sm:$0xff]
    %v3678 = vld [vmem:[#allocation6 + $0xd30] sm:$0xff]
    %v3679 = vld [vmem:[#allocation6 + $0xd38] sm:$0xff]
    %v3680 = vld [vmem:[#allocation6 + $0xd40] sm:$0xff]
    %v3681 = vld [vmem:[#allocation6 + $0xd48] sm:$0xff]
    %v3682 = vld [vmem:[#allocation6 + $0xd50] sm:$0xff]
    %v3683 = vld [vmem:[#allocation6 + $0xd58] sm:$0xff]
    %v3684 = vld [vmem:[#allocation6 + $0xd60] sm:$0xff]
    %v3685 = vld [vmem:[#allocation6 + $0xd68] sm:$0xff]
    %v3686 = vld [vmem:[#allocation6 + $0xd70] sm:$0xff]
    %v3687 = vld [vmem:[#allocation6 + $0xd78] sm:$0xff]
    %v3688 = vld [vmem:[#allocation6 + $0xd80] sm:$0xff]
    %v3689 = vld [vmem:[#allocation6 + $0xd88] sm:$0xff]
    %v3690 = vld [vmem:[#allocation6 + $0xd90] sm:$0xff]
    %v3691 = vld [vmem:[#allocation6 + $0xd98] sm:$0xff]
    %v3692 = vld [vmem:[#allocation6 + $0xda0] sm:$0xff]
    %v3693 = vld [vmem:[#allocation6 + $0xda8] sm:$0xff]
    %v3694 = vld [vmem:[#allocation6 + $0xdb0] sm:$0xff]
    %v3695 = vld [vmem:[#allocation6 + $0xdb8] sm:$0xff]
    %v3696 = vld [vmem:[#allocation6 + $0xdc0] sm:$0xff]
    %v3697 = vld [vmem:[#allocation6 + $0xdc8] sm:$0xff]
    %v3698 = vld [vmem:[#allocation6 + $0xdd0] sm:$0xff]
    %v3699 = vld [vmem:[#allocation6 + $0xdd8] sm:$0xff]
    %v3700 = vld [vmem:[#allocation6 + $0xde0] sm:$0xff]
    %v3701 = vld [vmem:[#allocation6 + $0xde8] sm:$0xff]
    %v3702 = vld [vmem:[#allocation6 + $0xdf0] sm:$0xff]
    %v3703 = vld [vmem:[#allocation6 + $0xdf8] sm:$0xff]
    %v3704 = vld [vmem:[#allocation6 + $0xe00] sm:$0xff]
    %v3705 = vld [vmem:[#allocation6 + $0xe08] sm:$0xff]
    %v3706 = vld [vmem:[#allocation6 + $0xe10] sm:$0xff]
    %v3707 = vld [vmem:[#allocation6 + $0xe18] sm:$0xff]
    %v3708 = vld [vmem:[#allocation6 + $0xe20] sm:$0xff]
    %v3709 = vld [vmem:[#allocation6 + $0xe28] sm:$0xff]
    %v3710 = vld [vmem:[#allocation6 + $0xe30] sm:$0xff]
    %v3711 = vld [vmem:[#allocation6 + $0xe38] sm:$0xff]
    %v3712 = vld [vmem:[#allocation6 + $0xe40] sm:$0xff]
    %v3713 = vld [vmem:[#allocation6 + $0xe48] sm:$0xff]
    %v3714 = vld [vmem:[#allocation6 + $0xe50] sm:$0xff]
    %v3715 = vld [vmem:[#allocation6 + $0xe58] sm:$0xff]
    %v3716 = vld [vmem:[#allocation6 + $0xe60] sm:$0xff]
    %v3717 = vld [vmem:[#allocation6 + $0xe68] sm:$0xff]
    %v3718 = vld [vmem:[#allocation6 + $0xe70] sm:$0xff]
    %v3719 = vld [vmem:[#allocation6 + $0xe78] sm:$0xff]
    %v3720 = vld [vmem:[#allocation6 + $0xe80] sm:$0xff]
    %v3721 = vld [vmem:[#allocation6 + $0xe88] sm:$0xff]
    %v3722 = vld [vmem:[#allocation6 + $0xe90] sm:$0xff]
    %v3723 = vld [vmem:[#allocation6 + $0xe98] sm:$0xff]
    %v3724 = vld [vmem:[#allocation6 + $0xea0] sm:$0xff]
    %v3725 = vld [vmem:[#allocation6 + $0xea8] sm:$0xff]
    %v3726 = vld [vmem:[#allocation6 + $0xeb0] sm:$0xff]
    %v3727 = vld [vmem:[#allocation6 + $0xeb8] sm:$0xff]
    %v3728 = vld [vmem:[#allocation6 + $0xec0] sm:$0xff]
    %v3729 = vld [vmem:[#allocation6 + $0xec8] sm:$0xff]
    %v3730 = vld [vmem:[#allocation6 + $0xed0] sm:$0xff]
    %v3731 = vld [vmem:[#allocation6 + $0xed8] sm:$0xff]
    %v3732 = vld [vmem:[#allocation6 + $0xee0] sm:$0xff]
    %v3733 = vld [vmem:[#allocation6 + $0xee8] sm:$0xff]
    %v3734 = vld [vmem:[#allocation6 + $0xef0] sm:$0xff]
    %v3735 = vld [vmem:[#allocation6 + $0xef8] sm:$0xff]
    %v3736 = vld [vmem:[#allocation6 + $0xf00] sm:$0xff]
    %v3737 = vld [vmem:[#allocation6 + $0xf08] sm:$0xff]
    %v3738 = vld [vmem:[#allocation6 + $0xf10] sm:$0xff]
    %v3739 = vld [vmem:[#allocation6 + $0xf18] sm:$0xff]
    %v3740 = vld [vmem:[#allocation6 + $0xf20] sm:$0xff]
    %v3741 = vld [vmem:[#allocation6 + $0xf28] sm:$0xff]
    %v3742 = vld [vmem:[#allocation6 + $0xf30] sm:$0xff]
    %v3743 = vld [vmem:[#allocation6 + $0xf38] sm:$0xff]
    %v3744 = vld [vmem:[#allocation6 + $0xf40] sm:$0xff]
    %v3745 = vld [vmem:[#allocation6 + $0xf48] sm:$0xff]
    %v3746 = vld [vmem:[#allocation6 + $0xf50] sm:$0xff]
    %v3747 = vld [vmem:[#allocation6 + $0xf58] sm:$0xff]
    %v3748 = vld [vmem:[#allocation6 + $0xf60] sm:$0xff]
    %v3749 = vld [vmem:[#allocation6 + $0xf68] sm:$0xff]
    %v3750 = vld [vmem:[#allocation6 + $0xf70] sm:$0xff]
    %v3751 = vld [vmem:[#allocation6 + $0xf78] sm:$0xff]
    %v3752 = vld [vmem:[#allocation6 + $0xf80] sm:$0xff]
    %v3753 = vld [vmem:[#allocation6 + $0xf88] sm:$0xff]
    %v3754 = vld [vmem:[#allocation6 + $0xf90] sm:$0xff]
    %v3755 = vld [vmem:[#allocation6 + $0xf98] sm:$0xff]
    %v3756 = vld [vmem:[#allocation6 + $0xfa0] sm:$0xff]
    %v3757 = vld [vmem:[#allocation6 + $0xfa8] sm:$0xff]
    %v3758 = vld [vmem:[#allocation6 + $0xfb0] sm:$0xff]
    %v3759 = vld [vmem:[#allocation6 + $0xfb8] sm:$0xff]
    %v3760 = vld [vmem:[#allocation6 + $0xfc0] sm:$0xff]
    %v3761 = vld [vmem:[#allocation6 + $0xfc8] sm:$0xff]
    %v3762 = vld [vmem:[#allocation6 + $0xfd0] sm:$0xff]
    %v3763 = vld [vmem:[#allocation6 + $0xfd8] sm:$0xff]
    %v3764 = vld [vmem:[#allocation6 + $0xfe0] sm:$0xff]
    %v3765 = vld [vmem:[#allocation6 + $0xfe8] sm:$0xff]
    %v3766 = vld [vmem:[#allocation6 + $0xff0] sm:$0xff]
    %v3767 = vld [vmem:[#allocation6 + $0xff8] sm:$0xff]
    %v3768 = vld [vmem:[#allocation7] sm:$0xff]
    %v3770 = vlaneseq
    %v3771 = vshrl.u32 %v3770, 7
    %v3772 = vsub.s32 0, %v3771
    %v3773 = vrot.slane %v3768, %v3772
    %v3774 = vlaneseq
    %v3775 = vshrl.u32 %v3774, 7
    %v3776 = vsub.s32 1, %v3775
    %v3777 = vrot.slane %v3768, %v3776
    %v3778 = vlaneseq
    %v3779 = vshrl.u32 %v3778, 7
    %v3780 = vsub.s32 2, %v3779
    %v3781 = vrot.slane %v3768, %v3780
    %v3782 = vlaneseq
    %v3783 = vshrl.u32 %v3782, 7
    %v3784 = vsub.s32 3, %v3783
    %v3785 = vrot.slane %v3768, %v3784
    %v3786 = vlaneseq
    %v3787 = vshrl.u32 %v3786, 7
    %v3788 = vsub.s32 4, %v3787
    %v3789 = vrot.slane %v3768, %v3788
    %v3790 = vlaneseq
    %v3791 = vshrl.u32 %v3790, 7
    %v3792 = vsub.s32 5, %v3791
    %v3793 = vrot.slane %v3768, %v3792
    %v3794 = vlaneseq
    %v3795 = vshrl.u32 %v3794, 7
    %v3796 = vsub.s32 6, %v3795
    %v3797 = vrot.slane %v3768, %v3796
    %v3798 = vlaneseq
    %v3799 = vshrl.u32 %v3798, 7
    %v3800 = vsub.s32 7, %v3799
    %v3801 = vrot.slane %v3768, %v3800
    %v4322 = vunpack.c.l.b16 %v3256
    %v4323 = vunpack.c.h.b16 %v3256
    %v4324 = vunpack.c.l.b16 %v3257
    %v4325 = vunpack.c.h.b16 %v3257
    %v4326 = vunpack.c.l.b16 %v3258
    %v4327 = vunpack.c.h.b16 %v3258
    %v4328 = vunpack.c.l.b16 %v3259
    %v4329 = vunpack.c.h.b16 %v3259
    %v4330 = vunpack.c.l.b16 %v3260
    %v4331 = vunpack.c.h.b16 %v3260
    %v4332 = vunpack.c.l.b16 %v3261
    %v4333 = vunpack.c.h.b16 %v3261
    %v4334 = vunpack.c.l.b16 %v3262
    %v4335 = vunpack.c.h.b16 %v3262
    %v4336 = vunpack.c.l.b16 %v3263
    %v4337 = vunpack.c.h.b16 %v3263
    %v4338 = vunpack.c.l.b16 %v3264
    %v4339 = vunpack.c.h.b16 %v3264
    %v4340 = vunpack.c.l.b16 %v3265
    %v4341 = vunpack.c.h.b16 %v3265
    %v4342 = vunpack.c.l.b16 %v3266
    %v4343 = vunpack.c.h.b16 %v3266
    %v4344 = vunpack.c.l.b16 %v3267
    %v4345 = vunpack.c.h.b16 %v3267
    %v4346 = vunpack.c.l.b16 %v3268
    %v4347 = vunpack.c.h.b16 %v3268
    %v4348 = vunpack.c.l.b16 %v3269
    %v4349 = vunpack.c.h.b16 %v3269
    %v4350 = vunpack.c.l.b16 %v3270
    %v4351 = vunpack.c.h.b16 %v3270
    %v4352 = vunpack.c.l.b16 %v3271
    %v4353 = vunpack.c.h.b16 %v3271
    %v4354 = vunpack.c.l.b16 %v3272
    %v4355 = vunpack.c.h.b16 %v3272
    %v4356 = vunpack.c.l.b16 %v3273
    %v4357 = vunpack.c.h.b16 %v3273
    %v4358 = vunpack.c.l.b16 %v3274
    %v4359 = vunpack.c.h.b16 %v3274
    %v4360 = vunpack.c.l.b16 %v3275
    %v4361 = vunpack.c.h.b16 %v3275
    %v4362 = vunpack.c.l.b16 %v3276
    %v4363 = vunpack.c.h.b16 %v3276
    %v4364 = vunpack.c.l.b16 %v3277
    %v4365 = vunpack.c.h.b16 %v3277
    %v4366 = vunpack.c.l.b16 %v3278
    %v4367 = vunpack.c.h.b16 %v3278
    %v4368 = vunpack.c.l.b16 %v3279
    %v4369 = vunpack.c.h.b16 %v3279
    %v4370 = vunpack.c.l.b16 %v3280
    %v4371 = vunpack.c.h.b16 %v3280
    %v4372 = vunpack.c.l.b16 %v3281
    %v4373 = vunpack.c.h.b16 %v3281
    %v4374 = vunpack.c.l.b16 %v3282
    %v4375 = vunpack.c.h.b16 %v3282
    %v4376 = vunpack.c.l.b16 %v3283
    %v4377 = vunpack.c.h.b16 %v3283
    %v4378 = vunpack.c.l.b16 %v3284
    %v4379 = vunpack.c.h.b16 %v3284
    %v4380 = vunpack.c.l.b16 %v3285
    %v4381 = vunpack.c.h.b16 %v3285
    %v4382 = vunpack.c.l.b16 %v3286
    %v4383 = vunpack.c.h.b16 %v3286
    %v4384 = vunpack.c.l.b16 %v3287
    %v4385 = vunpack.c.h.b16 %v3287
    %v4386 = vunpack.c.l.b16 %v3288
    %v4387 = vunpack.c.h.b16 %v3288
    %v4388 = vunpack.c.l.b16 %v3289
    %v4389 = vunpack.c.h.b16 %v3289
    %v4390 = vunpack.c.l.b16 %v3290
    %v4391 = vunpack.c.h.b16 %v3290
    %v4392 = vunpack.c.l.b16 %v3291
    %v4393 = vunpack.c.h.b16 %v3291
    %v4394 = vunpack.c.l.b16 %v3292
    %v4395 = vunpack.c.h.b16 %v3292
    %v4396 = vunpack.c.l.b16 %v3293
    %v4397 = vunpack.c.h.b16 %v3293
    %v4398 = vunpack.c.l.b16 %v3294
    %v4399 = vunpack.c.h.b16 %v3294
    %v4400 = vunpack.c.l.b16 %v3295
    %v4401 = vunpack.c.h.b16 %v3295
    %v4402 = vunpack.c.l.b16 %v3296
    %v4403 = vunpack.c.h.b16 %v3296
    %v4404 = vunpack.c.l.b16 %v3297
    %v4405 = vunpack.c.h.b16 %v3297
    %v4406 = vunpack.c.l.b16 %v3298
    %v4407 = vunpack.c.h.b16 %v3298
    %v4408 = vunpack.c.l.b16 %v3299
    %v4409 = vunpack.c.h.b16 %v3299
    %v4410 = vunpack.c.l.b16 %v3300
    %v4411 = vunpack.c.h.b16 %v3300
    %v4412 = vunpack.c.l.b16 %v3301
    %v4413 = vunpack.c.h.b16 %v3301
    %v4414 = vunpack.c.l.b16 %v3302
    %v4415 = vunpack.c.h.b16 %v3302
    %v4416 = vunpack.c.l.b16 %v3303
    %v4417 = vunpack.c.h.b16 %v3303
    %v4418 = vunpack.c.l.b16 %v3304
    %v4419 = vunpack.c.h.b16 %v3304
    %v4420 = vunpack.c.l.b16 %v3305
    %v4421 = vunpack.c.h.b16 %v3305
    %v4422 = vunpack.c.l.b16 %v3306
    %v4423 = vunpack.c.h.b16 %v3306
    %v4424 = vunpack.c.l.b16 %v3307
    %v4425 = vunpack.c.h.b16 %v3307
    %v4426 = vunpack.c.l.b16 %v3308
    %v4427 = vunpack.c.h.b16 %v3308
    %v4428 = vunpack.c.l.b16 %v3309
    %v4429 = vunpack.c.h.b16 %v3309
    %v4430 = vunpack.c.l.b16 %v3310
    %v4431 = vunpack.c.h.b16 %v3310
    %v4432 = vunpack.c.l.b16 %v3311
    %v4433 = vunpack.c.h.b16 %v3311
    %v4434 = vunpack.c.l.b16 %v3312
    %v4435 = vunpack.c.h.b16 %v3312
    %v4436 = vunpack.c.l.b16 %v3313
    %v4437 = vunpack.c.h.b16 %v3313
    %v4438 = vunpack.c.l.b16 %v3314
    %v4439 = vunpack.c.h.b16 %v3314
    %v4440 = vunpack.c.l.b16 %v3315
    %v4441 = vunpack.c.h.b16 %v3315
    %v4442 = vunpack.c.l.b16 %v3316
    %v4443 = vunpack.c.h.b16 %v3316
    %v4444 = vunpack.c.l.b16 %v3317
    %v4445 = vunpack.c.h.b16 %v3317
    %v4446 = vunpack.c.l.b16 %v3318
    %v4447 = vunpack.c.h.b16 %v3318
    %v4448 = vunpack.c.l.b16 %v3319
    %v4449 = vunpack.c.h.b16 %v3319
    %v4450 = vunpack.c.l.b16 %v3320
    %v4451 = vunpack.c.h.b16 %v3320
    %v4452 = vunpack.c.l.b16 %v3321
    %v4453 = vunpack.c.h.b16 %v3321
    %v4454 = vunpack.c.l.b16 %v3322
    %v4455 = vunpack.c.h.b16 %v3322
    %v4456 = vunpack.c.l.b16 %v3323
    %v4457 = vunpack.c.h.b16 %v3323
    %v4458 = vunpack.c.l.b16 %v3324
    %v4459 = vunpack.c.h.b16 %v3324
    %v4460 = vunpack.c.l.b16 %v3325
    %v4461 = vunpack.c.h.b16 %v3325
    %v4462 = vunpack.c.l.b16 %v3326
    %v4463 = vunpack.c.h.b16 %v3326
    %v4464 = vunpack.c.l.b16 %v3327
    %v4465 = vunpack.c.h.b16 %v3327
    %v4466 = vunpack.c.l.b16 %v3328
    %v4467 = vunpack.c.h.b16 %v3328
    %v4468 = vunpack.c.l.b16 %v3329
    %v4469 = vunpack.c.h.b16 %v3329
    %v4470 = vunpack.c.l.b16 %v3330
    %v4471 = vunpack.c.h.b16 %v3330
    %v4472 = vunpack.c.l.b16 %v3331
    %v4473 = vunpack.c.h.b16 %v3331
    %v4474 = vunpack.c.l.b16 %v3332
    %v4475 = vunpack.c.h.b16 %v3332
    %v4476 = vunpack.c.l.b16 %v3333
    %v4477 = vunpack.c.h.b16 %v3333
    %v4478 = vunpack.c.l.b16 %v3334
    %v4479 = vunpack.c.h.b16 %v3334
    %v4480 = vunpack.c.l.b16 %v3335
    %v4481 = vunpack.c.h.b16 %v3335
    %v4482 = vunpack.c.l.b16 %v3336
    %v4483 = vunpack.c.h.b16 %v3336
    %v4484 = vunpack.c.l.b16 %v3337
    %v4485 = vunpack.c.h.b16 %v3337
    %v4486 = vunpack.c.l.b16 %v3338
    %v4487 = vunpack.c.h.b16 %v3338
    %v4488 = vunpack.c.l.b16 %v3339
    %v4489 = vunpack.c.h.b16 %v3339
    %v4490 = vunpack.c.l.b16 %v3340
    %v4491 = vunpack.c.h.b16 %v3340
    %v4492 = vunpack.c.l.b16 %v3341
    %v4493 = vunpack.c.h.b16 %v3341
    %v4494 = vunpack.c.l.b16 %v3342
    %v4495 = vunpack.c.h.b16 %v3342
    %v4496 = vunpack.c.l.b16 %v3343
    %v4497 = vunpack.c.h.b16 %v3343
    %v4498 = vunpack.c.l.b16 %v3344
    %v4499 = vunpack.c.h.b16 %v3344
    %v4500 = vunpack.c.l.b16 %v3345
    %v4501 = vunpack.c.h.b16 %v3345
    %v4502 = vunpack.c.l.b16 %v3346
    %v4503 = vunpack.c.h.b16 %v3346
    %v4504 = vunpack.c.l.b16 %v3347
    %v4505 = vunpack.c.h.b16 %v3347
    %v4506 = vunpack.c.l.b16 %v3348
    %v4507 = vunpack.c.h.b16 %v3348
    %v4508 = vunpack.c.l.b16 %v3349
    %v4509 = vunpack.c.h.b16 %v3349
    %v4510 = vunpack.c.l.b16 %v3350
    %v4511 = vunpack.c.h.b16 %v3350
    %v4512 = vunpack.c.l.b16 %v3351
    %v4513 = vunpack.c.h.b16 %v3351
    %v4514 = vunpack.c.l.b16 %v3352
    %v4515 = vunpack.c.h.b16 %v3352
    %v4516 = vunpack.c.l.b16 %v3353
    %v4517 = vunpack.c.h.b16 %v3353
    %v4518 = vunpack.c.l.b16 %v3354
    %v4519 = vunpack.c.h.b16 %v3354
    %v4520 = vunpack.c.l.b16 %v3355
    %v4521 = vunpack.c.h.b16 %v3355
    %v4522 = vunpack.c.l.b16 %v3356
    %v4523 = vunpack.c.h.b16 %v3356
    %v4524 = vunpack.c.l.b16 %v3357
    %v4525 = vunpack.c.h.b16 %v3357
    %v4526 = vunpack.c.l.b16 %v3358
    %v4527 = vunpack.c.h.b16 %v3358
    %v4528 = vunpack.c.l.b16 %v3359
    %v4529 = vunpack.c.h.b16 %v3359
    %v4530 = vunpack.c.l.b16 %v3360
    %v4531 = vunpack.c.h.b16 %v3360
    %v4532 = vunpack.c.l.b16 %v3361
    %v4533 = vunpack.c.h.b16 %v3361
    %v4534 = vunpack.c.l.b16 %v3362
    %v4535 = vunpack.c.h.b16 %v3362
    %v4536 = vunpack.c.l.b16 %v3363
    %v4537 = vunpack.c.h.b16 %v3363
    %v4538 = vunpack.c.l.b16 %v3364
    %v4539 = vunpack.c.h.b16 %v3364
    %v4540 = vunpack.c.l.b16 %v3365
    %v4541 = vunpack.c.h.b16 %v3365
    %v4542 = vunpack.c.l.b16 %v3366
    %v4543 = vunpack.c.h.b16 %v3366
    %v4544 = vunpack.c.l.b16 %v3367
    %v4545 = vunpack.c.h.b16 %v3367
    %v4546 = vunpack.c.l.b16 %v3368
    %v4547 = vunpack.c.h.b16 %v3368
    %v4548 = vunpack.c.l.b16 %v3369
    %v4549 = vunpack.c.h.b16 %v3369
    %v4550 = vunpack.c.l.b16 %v3370
    %v4551 = vunpack.c.h.b16 %v3370
    %v4552 = vunpack.c.l.b16 %v3371
    %v4553 = vunpack.c.h.b16 %v3371
    %v4554 = vunpack.c.l.b16 %v3372
    %v4555 = vunpack.c.h.b16 %v3372
    %v4556 = vunpack.c.l.b16 %v3373
    %v4557 = vunpack.c.h.b16 %v3373
    %v4558 = vunpack.c.l.b16 %v3374
    %v4559 = vunpack.c.h.b16 %v3374
    %v4560 = vunpack.c.l.b16 %v3375
    %v4561 = vunpack.c.h.b16 %v3375
    %v4562 = vunpack.c.l.b16 %v3376
    %v4563 = vunpack.c.h.b16 %v3376
    %v4564 = vunpack.c.l.b16 %v3377
    %v4565 = vunpack.c.h.b16 %v3377
    %v4566 = vunpack.c.l.b16 %v3378
    %v4567 = vunpack.c.h.b16 %v3378
    %v4568 = vunpack.c.l.b16 %v3379
    %v4569 = vunpack.c.h.b16 %v3379
    %v4570 = vunpack.c.l.b16 %v3380
    %v4571 = vunpack.c.h.b16 %v3380
    %v4572 = vunpack.c.l.b16 %v3381
    %v4573 = vunpack.c.h.b16 %v3381
    %v4574 = vunpack.c.l.b16 %v3382
    %v4575 = vunpack.c.h.b16 %v3382
    %v4576 = vunpack.c.l.b16 %v3383
    %v4577 = vunpack.c.h.b16 %v3383
    %v4578 = vunpack.c.l.b16 %v3384
    %v4579 = vunpack.c.h.b16 %v3384
    %v4580 = vunpack.c.l.b16 %v3385
    %v4581 = vunpack.c.h.b16 %v3385
    %v4582 = vunpack.c.l.b16 %v3386
    %v4583 = vunpack.c.h.b16 %v3386
    %v4584 = vunpack.c.l.b16 %v3387
    %v4585 = vunpack.c.h.b16 %v3387
    %v4586 = vunpack.c.l.b16 %v3388
    %v4587 = vunpack.c.h.b16 %v3388
    %v4588 = vunpack.c.l.b16 %v3389
    %v4589 = vunpack.c.h.b16 %v3389
    %v4590 = vunpack.c.l.b16 %v3390
    %v4591 = vunpack.c.h.b16 %v3390
    %v4592 = vunpack.c.l.b16 %v3391
    %v4593 = vunpack.c.h.b16 %v3391
    %v4594 = vunpack.c.l.b16 %v3392
    %v4595 = vunpack.c.h.b16 %v3392
    %v4596 = vunpack.c.l.b16 %v3393
    %v4597 = vunpack.c.h.b16 %v3393
    %v4598 = vunpack.c.l.b16 %v3394
    %v4599 = vunpack.c.h.b16 %v3394
    %v4600 = vunpack.c.l.b16 %v3395
    %v4601 = vunpack.c.h.b16 %v3395
    %v4602 = vunpack.c.l.b16 %v3396
    %v4603 = vunpack.c.h.b16 %v3396
    %v4604 = vunpack.c.l.b16 %v3397
    %v4605 = vunpack.c.h.b16 %v3397
    %v4606 = vunpack.c.l.b16 %v3398
    %v4607 = vunpack.c.h.b16 %v3398
    %v4608 = vunpack.c.l.b16 %v3399
    %v4609 = vunpack.c.h.b16 %v3399
    %v4610 = vunpack.c.l.b16 %v3400
    %v4611 = vunpack.c.h.b16 %v3400
    %v4612 = vunpack.c.l.b16 %v3401
    %v4613 = vunpack.c.h.b16 %v3401
    %v4614 = vunpack.c.l.b16 %v3402
    %v4615 = vunpack.c.h.b16 %v3402
    %v4616 = vunpack.c.l.b16 %v3403
    %v4617 = vunpack.c.h.b16 %v3403
    %v4618 = vunpack.c.l.b16 %v3404
    %v4619 = vunpack.c.h.b16 %v3404
    %v4620 = vunpack.c.l.b16 %v3405
    %v4621 = vunpack.c.h.b16 %v3405
    %v4622 = vunpack.c.l.b16 %v3406
    %v4623 = vunpack.c.h.b16 %v3406
    %v4624 = vunpack.c.l.b16 %v3407
    %v4625 = vunpack.c.h.b16 %v3407
    %v4626 = vunpack.c.l.b16 %v3408
    %v4627 = vunpack.c.h.b16 %v3408
    %v4628 = vunpack.c.l.b16 %v3409
    %v4629 = vunpack.c.h.b16 %v3409
    %v4630 = vunpack.c.l.b16 %v3410
    %v4631 = vunpack.c.h.b16 %v3410
    %v4632 = vunpack.c.l.b16 %v3411
    %v4633 = vunpack.c.h.b16 %v3411
    %v4634 = vunpack.c.l.b16 %v3412
    %v4635 = vunpack.c.h.b16 %v3412
    %v4636 = vunpack.c.l.b16 %v3413
    %v4637 = vunpack.c.h.b16 %v3413
    %v4638 = vunpack.c.l.b16 %v3414
    %v4639 = vunpack.c.h.b16 %v3414
    %v4640 = vunpack.c.l.b16 %v3415
    %v4641 = vunpack.c.h.b16 %v3415
    %v4642 = vunpack.c.l.b16 %v3416
    %v4643 = vunpack.c.h.b16 %v3416
    %v4644 = vunpack.c.l.b16 %v3417
    %v4645 = vunpack.c.h.b16 %v3417
    %v4646 = vunpack.c.l.b16 %v3418
    %v4647 = vunpack.c.h.b16 %v3418
    %v4648 = vunpack.c.l.b16 %v3419
    %v4649 = vunpack.c.h.b16 %v3419
    %v4650 = vunpack.c.l.b16 %v3420
    %v4651 = vunpack.c.h.b16 %v3420
    %v4652 = vunpack.c.l.b16 %v3421
    %v4653 = vunpack.c.h.b16 %v3421
    %v4654 = vunpack.c.l.b16 %v3422
    %v4655 = vunpack.c.h.b16 %v3422
    %v4656 = vunpack.c.l.b16 %v3423
    %v4657 = vunpack.c.h.b16 %v3423
    %v4658 = vunpack.c.l.b16 %v3424
    %v4659 = vunpack.c.h.b16 %v3424
    %v4660 = vunpack.c.l.b16 %v3425
    %v4661 = vunpack.c.h.b16 %v3425
    %v4662 = vunpack.c.l.b16 %v3426
    %v4663 = vunpack.c.h.b16 %v3426
    %v4664 = vunpack.c.l.b16 %v3427
    %v4665 = vunpack.c.h.b16 %v3427
    %v4666 = vunpack.c.l.b16 %v3428
    %v4667 = vunpack.c.h.b16 %v3428
    %v4668 = vunpack.c.l.b16 %v3429
    %v4669 = vunpack.c.h.b16 %v3429
    %v4670 = vunpack.c.l.b16 %v3430
    %v4671 = vunpack.c.h.b16 %v3430
    %v4672 = vunpack.c.l.b16 %v3431
    %v4673 = vunpack.c.h.b16 %v3431
    %v4674 = vunpack.c.l.b16 %v3432
    %v4675 = vunpack.c.h.b16 %v3432
    %v4676 = vunpack.c.l.b16 %v3433
    %v4677 = vunpack.c.h.b16 %v3433
    %v4678 = vunpack.c.l.b16 %v3434
    %v4679 = vunpack.c.h.b16 %v3434
    %v4680 = vunpack.c.l.b16 %v3435
    %v4681 = vunpack.c.h.b16 %v3435
    %v4682 = vunpack.c.l.b16 %v3436
    %v4683 = vunpack.c.h.b16 %v3436
    %v4684 = vunpack.c.l.b16 %v3437
    %v4685 = vunpack.c.h.b16 %v3437
    %v4686 = vunpack.c.l.b16 %v3438
    %v4687 = vunpack.c.h.b16 %v3438
    %v4688 = vunpack.c.l.b16 %v3439
    %v4689 = vunpack.c.h.b16 %v3439
    %v4690 = vunpack.c.l.b16 %v3440
    %v4691 = vunpack.c.h.b16 %v3440
    %v4692 = vunpack.c.l.b16 %v3441
    %v4693 = vunpack.c.h.b16 %v3441
    %v4694 = vunpack.c.l.b16 %v3442
    %v4695 = vunpack.c.h.b16 %v3442
    %v4696 = vunpack.c.l.b16 %v3443
    %v4697 = vunpack.c.h.b16 %v3443
    %v4698 = vunpack.c.l.b16 %v3444
    %v4699 = vunpack.c.h.b16 %v3444
    %v4700 = vunpack.c.l.b16 %v3445
    %v4701 = vunpack.c.h.b16 %v3445
    %v4702 = vunpack.c.l.b16 %v3446
    %v4703 = vunpack.c.h.b16 %v3446
    %v4704 = vunpack.c.l.b16 %v3447
    %v4705 = vunpack.c.h.b16 %v3447
    %v4706 = vunpack.c.l.b16 %v3448
    %v4707 = vunpack.c.h.b16 %v3448
    %v4708 = vunpack.c.l.b16 %v3449
    %v4709 = vunpack.c.h.b16 %v3449
    %v4710 = vunpack.c.l.b16 %v3450
    %v4711 = vunpack.c.h.b16 %v3450
    %v4712 = vunpack.c.l.b16 %v3451
    %v4713 = vunpack.c.h.b16 %v3451
    %v4714 = vunpack.c.l.b16 %v3452
    %v4715 = vunpack.c.h.b16 %v3452
    %v4716 = vunpack.c.l.b16 %v3453
    %v4717 = vunpack.c.h.b16 %v3453
    %v4718 = vunpack.c.l.b16 %v3454
    %v4719 = vunpack.c.h.b16 %v3454
    %v4720 = vunpack.c.l.b16 %v3455
    %v4721 = vunpack.c.h.b16 %v3455
    %v4722 = vunpack.c.l.b16 %v3456
    %v4723 = vunpack.c.h.b16 %v3456
    %v4724 = vunpack.c.l.b16 %v3457
    %v4725 = vunpack.c.h.b16 %v3457
    %v4726 = vunpack.c.l.b16 %v3458
    %v4727 = vunpack.c.h.b16 %v3458
    %v4728 = vunpack.c.l.b16 %v3459
    %v4729 = vunpack.c.h.b16 %v3459
    %v4730 = vunpack.c.l.b16 %v3460
    %v4731 = vunpack.c.h.b16 %v3460
    %v4732 = vunpack.c.l.b16 %v3461
    %v4733 = vunpack.c.h.b16 %v3461
    %v4734 = vunpack.c.l.b16 %v3462
    %v4735 = vunpack.c.h.b16 %v3462
    %v4736 = vunpack.c.l.b16 %v3463
    %v4737 = vunpack.c.h.b16 %v3463
    %v4738 = vunpack.c.l.b16 %v3464
    %v4739 = vunpack.c.h.b16 %v3464
    %v4740 = vunpack.c.l.b16 %v3465
    %v4741 = vunpack.c.h.b16 %v3465
    %v4742 = vunpack.c.l.b16 %v3466
    %v4743 = vunpack.c.h.b16 %v3466
    %v4744 = vunpack.c.l.b16 %v3467
    %v4745 = vunpack.c.h.b16 %v3467
    %v4746 = vunpack.c.l.b16 %v3468
    %v4747 = vunpack.c.h.b16 %v3468
    %v4748 = vunpack.c.l.b16 %v3469
    %v4749 = vunpack.c.h.b16 %v3469
    %v4750 = vunpack.c.l.b16 %v3470
    %v4751 = vunpack.c.h.b16 %v3470
    %v4752 = vunpack.c.l.b16 %v3471
    %v4753 = vunpack.c.h.b16 %v3471
    %v4754 = vunpack.c.l.b16 %v3472
    %v4755 = vunpack.c.h.b16 %v3472
    %v4756 = vunpack.c.l.b16 %v3473
    %v4757 = vunpack.c.h.b16 %v3473
    %v4758 = vunpack.c.l.b16 %v3474
    %v4759 = vunpack.c.h.b16 %v3474
    %v4760 = vunpack.c.l.b16 %v3475
    %v4761 = vunpack.c.h.b16 %v3475
    %v4762 = vunpack.c.l.b16 %v3476
    %v4763 = vunpack.c.h.b16 %v3476
    %v4764 = vunpack.c.l.b16 %v3477
    %v4765 = vunpack.c.h.b16 %v3477
    %v4766 = vunpack.c.l.b16 %v3478
    %v4767 = vunpack.c.h.b16 %v3478
    %v4768 = vunpack.c.l.b16 %v3479
    %v4769 = vunpack.c.h.b16 %v3479
    %v4770 = vunpack.c.l.b16 %v3480
    %v4771 = vunpack.c.h.b16 %v3480
    %v4772 = vunpack.c.l.b16 %v3481
    %v4773 = vunpack.c.h.b16 %v3481
    %v4774 = vunpack.c.l.b16 %v3482
    %v4775 = vunpack.c.h.b16 %v3482
    %v4776 = vunpack.c.l.b16 %v3483
    %v4777 = vunpack.c.h.b16 %v3483
    %v4778 = vunpack.c.l.b16 %v3484
    %v4779 = vunpack.c.h.b16 %v3484
    %v4780 = vunpack.c.l.b16 %v3485
    %v4781 = vunpack.c.h.b16 %v3485
    %v4782 = vunpack.c.l.b16 %v3486
    %v4783 = vunpack.c.h.b16 %v3486
    %v4784 = vunpack.c.l.b16 %v3487
    %v4785 = vunpack.c.h.b16 %v3487
    %v4786 = vunpack.c.l.b16 %v3488
    %v4787 = vunpack.c.h.b16 %v3488
    %v4788 = vunpack.c.l.b16 %v3489
    %v4789 = vunpack.c.h.b16 %v3489
    %v4790 = vunpack.c.l.b16 %v3490
    %v4791 = vunpack.c.h.b16 %v3490
    %v4792 = vunpack.c.l.b16 %v3491
    %v4793 = vunpack.c.h.b16 %v3491
    %v4794 = vunpack.c.l.b16 %v3492
    %v4795 = vunpack.c.h.b16 %v3492
    %v4796 = vunpack.c.l.b16 %v3493
    %v4797 = vunpack.c.h.b16 %v3493
    %v4798 = vunpack.c.l.b16 %v3494
    %v4799 = vunpack.c.h.b16 %v3494
    %v4800 = vunpack.c.l.b16 %v3495
    %v4801 = vunpack.c.h.b16 %v3495
    %v4802 = vunpack.c.l.b16 %v3496
    %v4803 = vunpack.c.h.b16 %v3496
    %v4804 = vunpack.c.l.b16 %v3497
    %v4805 = vunpack.c.h.b16 %v3497
    %v4806 = vunpack.c.l.b16 %v3498
    %v4807 = vunpack.c.h.b16 %v3498
    %v4808 = vunpack.c.l.b16 %v3499
    %v4809 = vunpack.c.h.b16 %v3499
    %v4810 = vunpack.c.l.b16 %v3500
    %v4811 = vunpack.c.h.b16 %v3500
    %v4812 = vunpack.c.l.b16 %v3501
    %v4813 = vunpack.c.h.b16 %v3501
    %v4814 = vunpack.c.l.b16 %v3502
    %v4815 = vunpack.c.h.b16 %v3502
    %v4816 = vunpack.c.l.b16 %v3503
    %v4817 = vunpack.c.h.b16 %v3503
    %v4818 = vunpack.c.l.b16 %v3504
    %v4819 = vunpack.c.h.b16 %v3504
    %v4820 = vunpack.c.l.b16 %v3505
    %v4821 = vunpack.c.h.b16 %v3505
    %v4822 = vunpack.c.l.b16 %v3506
    %v4823 = vunpack.c.h.b16 %v3506
    %v4824 = vunpack.c.l.b16 %v3507
    %v4825 = vunpack.c.h.b16 %v3507
    %v4826 = vunpack.c.l.b16 %v3508
    %v4827 = vunpack.c.h.b16 %v3508
    %v4828 = vunpack.c.l.b16 %v3509
    %v4829 = vunpack.c.h.b16 %v3509
    %v4830 = vunpack.c.l.b16 %v3510
    %v4831 = vunpack.c.h.b16 %v3510
    %v4832 = vunpack.c.l.b16 %v3511
    %v4833 = vunpack.c.h.b16 %v3511
    %v4834 = vunpack.c.l.b16 %v3512
    %v4835 = vunpack.c.h.b16 %v3512
    %v4836 = vunpack.c.l.b16 %v3513
    %v4837 = vunpack.c.h.b16 %v3513
    %v4838 = vunpack.c.l.b16 %v3514
    %v4839 = vunpack.c.h.b16 %v3514
    %v4840 = vunpack.c.l.b16 %v3515
    %v4841 = vunpack.c.h.b16 %v3515
    %v4842 = vunpack.c.l.b16 %v3516
    %v4843 = vunpack.c.h.b16 %v3516
    %v4844 = vunpack.c.l.b16 %v3517
    %v4845 = vunpack.c.h.b16 %v3517
    %v4846 = vunpack.c.l.b16 %v3518
    %v4847 = vunpack.c.h.b16 %v3518
    %v4848 = vunpack.c.l.b16 %v3519
    %v4849 = vunpack.c.h.b16 %v3519
    %v4850 = vunpack.c.l.b16 %v3520
    %v4851 = vunpack.c.h.b16 %v3520
    %v4852 = vunpack.c.l.b16 %v3521
    %v4853 = vunpack.c.h.b16 %v3521
    %v4854 = vunpack.c.l.b16 %v3522
    %v4855 = vunpack.c.h.b16 %v3522
    %v4856 = vunpack.c.l.b16 %v3523
    %v4857 = vunpack.c.h.b16 %v3523
    %v4858 = vunpack.c.l.b16 %v3524
    %v4859 = vunpack.c.h.b16 %v3524
    %v4860 = vunpack.c.l.b16 %v3525
    %v4861 = vunpack.c.h.b16 %v3525
    %v4862 = vunpack.c.l.b16 %v3526
    %v4863 = vunpack.c.h.b16 %v3526
    %v4864 = vunpack.c.l.b16 %v3527
    %v4865 = vunpack.c.h.b16 %v3527
    %v4866 = vunpack.c.l.b16 %v3528
    %v4867 = vunpack.c.h.b16 %v3528
    %v4868 = vunpack.c.l.b16 %v3529
    %v4869 = vunpack.c.h.b16 %v3529
    %v4870 = vunpack.c.l.b16 %v3530
    %v4871 = vunpack.c.h.b16 %v3530
    %v4872 = vunpack.c.l.b16 %v3531
    %v4873 = vunpack.c.h.b16 %v3531
    %v4874 = vunpack.c.l.b16 %v3532
    %v4875 = vunpack.c.h.b16 %v3532
    %v4876 = vunpack.c.l.b16 %v3533
    %v4877 = vunpack.c.h.b16 %v3533
    %v4878 = vunpack.c.l.b16 %v3534
    %v4879 = vunpack.c.h.b16 %v3534
    %v4880 = vunpack.c.l.b16 %v3535
    %v4881 = vunpack.c.h.b16 %v3535
    %v4882 = vunpack.c.l.b16 %v3536
    %v4883 = vunpack.c.h.b16 %v3536
    %v4884 = vunpack.c.l.b16 %v3537
    %v4885 = vunpack.c.h.b16 %v3537
    %v4886 = vunpack.c.l.b16 %v3538
    %v4887 = vunpack.c.h.b16 %v3538
    %v4888 = vunpack.c.l.b16 %v3539
    %v4889 = vunpack.c.h.b16 %v3539
    %v4890 = vunpack.c.l.b16 %v3540
    %v4891 = vunpack.c.h.b16 %v3540
    %v4892 = vunpack.c.l.b16 %v3541
    %v4893 = vunpack.c.h.b16 %v3541
    %v4894 = vunpack.c.l.b16 %v3542
    %v4895 = vunpack.c.h.b16 %v3542
    %v4896 = vunpack.c.l.b16 %v3543
    %v4897 = vunpack.c.h.b16 %v3543
    %v4898 = vunpack.c.l.b16 %v3544
    %v4899 = vunpack.c.h.b16 %v3544
    %v4900 = vunpack.c.l.b16 %v3545
    %v4901 = vunpack.c.h.b16 %v3545
    %v4902 = vunpack.c.l.b16 %v3546
    %v4903 = vunpack.c.h.b16 %v3546
    %v4904 = vunpack.c.l.b16 %v3547
    %v4905 = vunpack.c.h.b16 %v3547
    %v4906 = vunpack.c.l.b16 %v3548
    %v4907 = vunpack.c.h.b16 %v3548
    %v4908 = vunpack.c.l.b16 %v3549
    %v4909 = vunpack.c.h.b16 %v3549
    %v4910 = vunpack.c.l.b16 %v3550
    %v4911 = vunpack.c.h.b16 %v3550
    %v4912 = vunpack.c.l.b16 %v3551
    %v4913 = vunpack.c.h.b16 %v3551
    %v4914 = vunpack.c.l.b16 %v3552
    %v4915 = vunpack.c.h.b16 %v3552
    %v4916 = vunpack.c.l.b16 %v3553
    %v4917 = vunpack.c.h.b16 %v3553
    %v4918 = vunpack.c.l.b16 %v3554
    %v4919 = vunpack.c.h.b16 %v3554
    %v4920 = vunpack.c.l.b16 %v3555
    %v4921 = vunpack.c.h.b16 %v3555
    %v4922 = vunpack.c.l.b16 %v3556
    %v4923 = vunpack.c.h.b16 %v3556
    %v4924 = vunpack.c.l.b16 %v3557
    %v4925 = vunpack.c.h.b16 %v3557
    %v4926 = vunpack.c.l.b16 %v3558
    %v4927 = vunpack.c.h.b16 %v3558
    %v4928 = vunpack.c.l.b16 %v3559
    %v4929 = vunpack.c.h.b16 %v3559
    %v4930 = vunpack.c.l.b16 %v3560
    %v4931 = vunpack.c.h.b16 %v3560
    %v4932 = vunpack.c.l.b16 %v3561
    %v4933 = vunpack.c.h.b16 %v3561
    %v4934 = vunpack.c.l.b16 %v3562
    %v4935 = vunpack.c.h.b16 %v3562
    %v4936 = vunpack.c.l.b16 %v3563
    %v4937 = vunpack.c.h.b16 %v3563
    %v4938 = vunpack.c.l.b16 %v3564
    %v4939 = vunpack.c.h.b16 %v3564
    %v4940 = vunpack.c.l.b16 %v3565
    %v4941 = vunpack.c.h.b16 %v3565
    %v4942 = vunpack.c.l.b16 %v3566
    %v4943 = vunpack.c.h.b16 %v3566
    %v4944 = vunpack.c.l.b16 %v3567
    %v4945 = vunpack.c.h.b16 %v3567
    %v4946 = vunpack.c.l.b16 %v3568
    %v4947 = vunpack.c.h.b16 %v3568
    %v4948 = vunpack.c.l.b16 %v3569
    %v4949 = vunpack.c.h.b16 %v3569
    %v4950 = vunpack.c.l.b16 %v3570
    %v4951 = vunpack.c.h.b16 %v3570
    %v4952 = vunpack.c.l.b16 %v3571
    %v4953 = vunpack.c.h.b16 %v3571
    %v4954 = vunpack.c.l.b16 %v3572
    %v4955 = vunpack.c.h.b16 %v3572
    %v4956 = vunpack.c.l.b16 %v3573
    %v4957 = vunpack.c.h.b16 %v3573
    %v4958 = vunpack.c.l.b16 %v3574
    %v4959 = vunpack.c.h.b16 %v3574
    %v4960 = vunpack.c.l.b16 %v3575
    %v4961 = vunpack.c.h.b16 %v3575
    %v4962 = vunpack.c.l.b16 %v3576
    %v4963 = vunpack.c.h.b16 %v3576
    %v4964 = vunpack.c.l.b16 %v3577
    %v4965 = vunpack.c.h.b16 %v3577
    %v4966 = vunpack.c.l.b16 %v3578
    %v4967 = vunpack.c.h.b16 %v3578
    %v4968 = vunpack.c.l.b16 %v3579
    %v4969 = vunpack.c.h.b16 %v3579
    %v4970 = vunpack.c.l.b16 %v3580
    %v4971 = vunpack.c.h.b16 %v3580
    %v4972 = vunpack.c.l.b16 %v3581
    %v4973 = vunpack.c.h.b16 %v3581
    %v4974 = vunpack.c.l.b16 %v3582
    %v4975 = vunpack.c.h.b16 %v3582
    %v4976 = vunpack.c.l.b16 %v3583
    %v4977 = vunpack.c.h.b16 %v3583
    %v4978 = vunpack.c.l.b16 %v3584
    %v4979 = vunpack.c.h.b16 %v3584
    %v4980 = vunpack.c.l.b16 %v3585
    %v4981 = vunpack.c.h.b16 %v3585
    %v4982 = vunpack.c.l.b16 %v3586
    %v4983 = vunpack.c.h.b16 %v3586
    %v4984 = vunpack.c.l.b16 %v3587
    %v4985 = vunpack.c.h.b16 %v3587
    %v4986 = vunpack.c.l.b16 %v3588
    %v4987 = vunpack.c.h.b16 %v3588
    %v4988 = vunpack.c.l.b16 %v3589
    %v4989 = vunpack.c.h.b16 %v3589
    %v4990 = vunpack.c.l.b16 %v3590
    %v4991 = vunpack.c.h.b16 %v3590
    %v4992 = vunpack.c.l.b16 %v3591
    %v4993 = vunpack.c.h.b16 %v3591
    %v4994 = vunpack.c.l.b16 %v3592
    %v4995 = vunpack.c.h.b16 %v3592
    %v4996 = vunpack.c.l.b16 %v3593
    %v4997 = vunpack.c.h.b16 %v3593
    %v4998 = vunpack.c.l.b16 %v3594
    %v4999 = vunpack.c.h.b16 %v3594
    %v5000 = vunpack.c.l.b16 %v3595
    %v5001 = vunpack.c.h.b16 %v3595
    %v5002 = vunpack.c.l.b16 %v3596
    %v5003 = vunpack.c.h.b16 %v3596
    %v5004 = vunpack.c.l.b16 %v3597
    %v5005 = vunpack.c.h.b16 %v3597
    %v5006 = vunpack.c.l.b16 %v3598
    %v5007 = vunpack.c.h.b16 %v3598
    %v5008 = vunpack.c.l.b16 %v3599
    %v5009 = vunpack.c.h.b16 %v3599
    %v5010 = vunpack.c.l.b16 %v3600
    %v5011 = vunpack.c.h.b16 %v3600
    %v5012 = vunpack.c.l.b16 %v3601
    %v5013 = vunpack.c.h.b16 %v3601
    %v5014 = vunpack.c.l.b16 %v3602
    %v5015 = vunpack.c.h.b16 %v3602
    %v5016 = vunpack.c.l.b16 %v3603
    %v5017 = vunpack.c.h.b16 %v3603
    %v5018 = vunpack.c.l.b16 %v3604
    %v5019 = vunpack.c.h.b16 %v3604
    %v5020 = vunpack.c.l.b16 %v3605
    %v5021 = vunpack.c.h.b16 %v3605
    %v5022 = vunpack.c.l.b16 %v3606
    %v5023 = vunpack.c.h.b16 %v3606
    %v5024 = vunpack.c.l.b16 %v3607
    %v5025 = vunpack.c.h.b16 %v3607
    %v5026 = vunpack.c.l.b16 %v3608
    %v5027 = vunpack.c.h.b16 %v3608
    %v5028 = vunpack.c.l.b16 %v3609
    %v5029 = vunpack.c.h.b16 %v3609
    %v5030 = vunpack.c.l.b16 %v3610
    %v5031 = vunpack.c.h.b16 %v3610
    %v5032 = vunpack.c.l.b16 %v3611
    %v5033 = vunpack.c.h.b16 %v3611
    %v5034 = vunpack.c.l.b16 %v3612
    %v5035 = vunpack.c.h.b16 %v3612
    %v5036 = vunpack.c.l.b16 %v3613
    %v5037 = vunpack.c.h.b16 %v3613
    %v5038 = vunpack.c.l.b16 %v3614
    %v5039 = vunpack.c.h.b16 %v3614
    %v5040 = vunpack.c.l.b16 %v3615
    %v5041 = vunpack.c.h.b16 %v3615
    %v5042 = vunpack.c.l.b16 %v3616
    %v5043 = vunpack.c.h.b16 %v3616
    %v5044 = vunpack.c.l.b16 %v3617
    %v5045 = vunpack.c.h.b16 %v3617
    %v5046 = vunpack.c.l.b16 %v3618
    %v5047 = vunpack.c.h.b16 %v3618
    %v5048 = vunpack.c.l.b16 %v3619
    %v5049 = vunpack.c.h.b16 %v3619
    %v5050 = vunpack.c.l.b16 %v3620
    %v5051 = vunpack.c.h.b16 %v3620
    %v5052 = vunpack.c.l.b16 %v3621
    %v5053 = vunpack.c.h.b16 %v3621
    %v5054 = vunpack.c.l.b16 %v3622
    %v5055 = vunpack.c.h.b16 %v3622
    %v5056 = vunpack.c.l.b16 %v3623
    %v5057 = vunpack.c.h.b16 %v3623
    %v5058 = vunpack.c.l.b16 %v3624
    %v5059 = vunpack.c.h.b16 %v3624
    %v5060 = vunpack.c.l.b16 %v3625
    %v5061 = vunpack.c.h.b16 %v3625
    %v5062 = vunpack.c.l.b16 %v3626
    %v5063 = vunpack.c.h.b16 %v3626
    %v5064 = vunpack.c.l.b16 %v3627
    %v5065 = vunpack.c.h.b16 %v3627
    %v5066 = vunpack.c.l.b16 %v3628
    %v5067 = vunpack.c.h.b16 %v3628
    %v5068 = vunpack.c.l.b16 %v3629
    %v5069 = vunpack.c.h.b16 %v3629
    %v5070 = vunpack.c.l.b16 %v3630
    %v5071 = vunpack.c.h.b16 %v3630
    %v5072 = vunpack.c.l.b16 %v3631
    %v5073 = vunpack.c.h.b16 %v3631
    %v5074 = vunpack.c.l.b16 %v3632
    %v5075 = vunpack.c.h.b16 %v3632
    %v5076 = vunpack.c.l.b16 %v3633
    %v5077 = vunpack.c.h.b16 %v3633
    %v5078 = vunpack.c.l.b16 %v3634
    %v5079 = vunpack.c.h.b16 %v3634
    %v5080 = vunpack.c.l.b16 %v3635
    %v5081 = vunpack.c.h.b16 %v3635
    %v5082 = vunpack.c.l.b16 %v3636
    %v5083 = vunpack.c.h.b16 %v3636
    %v5084 = vunpack.c.l.b16 %v3637
    %v5085 = vunpack.c.h.b16 %v3637
    %v5086 = vunpack.c.l.b16 %v3638
    %v5087 = vunpack.c.h.b16 %v3638
    %v5088 = vunpack.c.l.b16 %v3639
    %v5089 = vunpack.c.h.b16 %v3639
    %v5090 = vunpack.c.l.b16 %v3640
    %v5091 = vunpack.c.h.b16 %v3640
    %v5092 = vunpack.c.l.b16 %v3641
    %v5093 = vunpack.c.h.b16 %v3641
    %v5094 = vunpack.c.l.b16 %v3642
    %v5095 = vunpack.c.h.b16 %v3642
    %v5096 = vunpack.c.l.b16 %v3643
    %v5097 = vunpack.c.h.b16 %v3643
    %v5098 = vunpack.c.l.b16 %v3644
    %v5099 = vunpack.c.h.b16 %v3644
    %v5100 = vunpack.c.l.b16 %v3645
    %v5101 = vunpack.c.h.b16 %v3645
    %v5102 = vunpack.c.l.b16 %v3646
    %v5103 = vunpack.c.h.b16 %v3646
    %v5104 = vunpack.c.l.b16 %v3647
    %v5105 = vunpack.c.h.b16 %v3647
    %v5106 = vunpack.c.l.b16 %v3648
    %v5107 = vunpack.c.h.b16 %v3648
    %v5108 = vunpack.c.l.b16 %v3649
    %v5109 = vunpack.c.h.b16 %v3649
    %v5110 = vunpack.c.l.b16 %v3650
    %v5111 = vunpack.c.h.b16 %v3650
    %v5112 = vunpack.c.l.b16 %v3651
    %v5113 = vunpack.c.h.b16 %v3651
    %v5114 = vunpack.c.l.b16 %v3652
    %v5115 = vunpack.c.h.b16 %v3652
    %v5116 = vunpack.c.l.b16 %v3653
    %v5117 = vunpack.c.h.b16 %v3653
    %v5118 = vunpack.c.l.b16 %v3654
    %v5119 = vunpack.c.h.b16 %v3654
    %v5120 = vunpack.c.l.b16 %v3655
    %v5121 = vunpack.c.h.b16 %v3655
    %v5122 = vunpack.c.l.b16 %v3656
    %v5123 = vunpack.c.h.b16 %v3656
    %v5124 = vunpack.c.l.b16 %v3657
    %v5125 = vunpack.c.h.b16 %v3657
    %v5126 = vunpack.c.l.b16 %v3658
    %v5127 = vunpack.c.h.b16 %v3658
    %v5128 = vunpack.c.l.b16 %v3659
    %v5129 = vunpack.c.h.b16 %v3659
    %v5130 = vunpack.c.l.b16 %v3660
    %v5131 = vunpack.c.h.b16 %v3660
    %v5132 = vunpack.c.l.b16 %v3661
    %v5133 = vunpack.c.h.b16 %v3661
    %v5134 = vunpack.c.l.b16 %v3662
    %v5135 = vunpack.c.h.b16 %v3662
    %v5136 = vunpack.c.l.b16 %v3663
    %v5137 = vunpack.c.h.b16 %v3663
    %v5138 = vunpack.c.l.b16 %v3664
    %v5139 = vunpack.c.h.b16 %v3664
    %v5140 = vunpack.c.l.b16 %v3665
    %v5141 = vunpack.c.h.b16 %v3665
    %v5142 = vunpack.c.l.b16 %v3666
    %v5143 = vunpack.c.h.b16 %v3666
    %v5144 = vunpack.c.l.b16 %v3667
    %v5145 = vunpack.c.h.b16 %v3667
    %v5146 = vunpack.c.l.b16 %v3668
    %v5147 = vunpack.c.h.b16 %v3668
    %v5148 = vunpack.c.l.b16 %v3669
    %v5149 = vunpack.c.h.b16 %v3669
    %v5150 = vunpack.c.l.b16 %v3670
    %v5151 = vunpack.c.h.b16 %v3670
    %v5152 = vunpack.c.l.b16 %v3671
    %v5153 = vunpack.c.h.b16 %v3671
    %v5154 = vunpack.c.l.b16 %v3672
    %v5155 = vunpack.c.h.b16 %v3672
    %v5156 = vunpack.c.l.b16 %v3673
    %v5157 = vunpack.c.h.b16 %v3673
    %v5158 = vunpack.c.l.b16 %v3674
    %v5159 = vunpack.c.h.b16 %v3674
    %v5160 = vunpack.c.l.b16 %v3675
    %v5161 = vunpack.c.h.b16 %v3675
    %v5162 = vunpack.c.l.b16 %v3676
    %v5163 = vunpack.c.h.b16 %v3676
    %v5164 = vunpack.c.l.b16 %v3677
    %v5165 = vunpack.c.h.b16 %v3677
    %v5166 = vunpack.c.l.b16 %v3678
    %v5167 = vunpack.c.h.b16 %v3678
    %v5168 = vunpack.c.l.b16 %v3679
    %v5169 = vunpack.c.h.b16 %v3679
    %v5170 = vunpack.c.l.b16 %v3680
    %v5171 = vunpack.c.h.b16 %v3680
    %v5172 = vunpack.c.l.b16 %v3681
    %v5173 = vunpack.c.h.b16 %v3681
    %v5174 = vunpack.c.l.b16 %v3682
    %v5175 = vunpack.c.h.b16 %v3682
    %v5176 = vunpack.c.l.b16 %v3683
    %v5177 = vunpack.c.h.b16 %v3683
    %v5178 = vunpack.c.l.b16 %v3684
    %v5179 = vunpack.c.h.b16 %v3684
    %v5180 = vunpack.c.l.b16 %v3685
    %v5181 = vunpack.c.h.b16 %v3685
    %v5182 = vunpack.c.l.b16 %v3686
    %v5183 = vunpack.c.h.b16 %v3686
    %v5184 = vunpack.c.l.b16 %v3687
    %v5185 = vunpack.c.h.b16 %v3687
    %v5186 = vunpack.c.l.b16 %v3688
    %v5187 = vunpack.c.h.b16 %v3688
    %v5188 = vunpack.c.l.b16 %v3689
    %v5189 = vunpack.c.h.b16 %v3689
    %v5190 = vunpack.c.l.b16 %v3690
    %v5191 = vunpack.c.h.b16 %v3690
    %v5192 = vunpack.c.l.b16 %v3691
    %v5193 = vunpack.c.h.b16 %v3691
    %v5194 = vunpack.c.l.b16 %v3692
    %v5195 = vunpack.c.h.b16 %v3692
    %v5196 = vunpack.c.l.b16 %v3693
    %v5197 = vunpack.c.h.b16 %v3693
    %v5198 = vunpack.c.l.b16 %v3694
    %v5199 = vunpack.c.h.b16 %v3694
    %v5200 = vunpack.c.l.b16 %v3695
    %v5201 = vunpack.c.h.b16 %v3695
    %v5202 = vunpack.c.l.b16 %v3696
    %v5203 = vunpack.c.h.b16 %v3696
    %v5204 = vunpack.c.l.b16 %v3697
    %v5205 = vunpack.c.h.b16 %v3697
    %v5206 = vunpack.c.l.b16 %v3698
    %v5207 = vunpack.c.h.b16 %v3698
    %v5208 = vunpack.c.l.b16 %v3699
    %v5209 = vunpack.c.h.b16 %v3699
    %v5210 = vunpack.c.l.b16 %v3700
    %v5211 = vunpack.c.h.b16 %v3700
    %v5212 = vunpack.c.l.b16 %v3701
    %v5213 = vunpack.c.h.b16 %v3701
    %v5214 = vunpack.c.l.b16 %v3702
    %v5215 = vunpack.c.h.b16 %v3702
    %v5216 = vunpack.c.l.b16 %v3703
    %v5217 = vunpack.c.h.b16 %v3703
    %v5218 = vunpack.c.l.b16 %v3704
    %v5219 = vunpack.c.h.b16 %v3704
    %v5220 = vunpack.c.l.b16 %v3705
    %v5221 = vunpack.c.h.b16 %v3705
    %v5222 = vunpack.c.l.b16 %v3706
    %v5223 = vunpack.c.h.b16 %v3706
    %v5224 = vunpack.c.l.b16 %v3707
    %v5225 = vunpack.c.h.b16 %v3707
    %v5226 = vunpack.c.l.b16 %v3708
    %v5227 = vunpack.c.h.b16 %v3708
    %v5228 = vunpack.c.l.b16 %v3709
    %v5229 = vunpack.c.h.b16 %v3709
    %v5230 = vunpack.c.l.b16 %v3710
    %v5231 = vunpack.c.h.b16 %v3710
    %v5232 = vunpack.c.l.b16 %v3711
    %v5233 = vunpack.c.h.b16 %v3711
    %v5234 = vunpack.c.l.b16 %v3712
    %v5235 = vunpack.c.h.b16 %v3712
    %v5236 = vunpack.c.l.b16 %v3713
    %v5237 = vunpack.c.h.b16 %v3713
    %v5238 = vunpack.c.l.b16 %v3714
    %v5239 = vunpack.c.h.b16 %v3714
    %v5240 = vunpack.c.l.b16 %v3715
    %v5241 = vunpack.c.h.b16 %v3715
    %v5242 = vunpack.c.l.b16 %v3716
    %v5243 = vunpack.c.h.b16 %v3716
    %v5244 = vunpack.c.l.b16 %v3717
    %v5245 = vunpack.c.h.b16 %v3717
    %v5246 = vunpack.c.l.b16 %v3718
    %v5247 = vunpack.c.h.b16 %v3718
    %v5248 = vunpack.c.l.b16 %v3719
    %v5249 = vunpack.c.h.b16 %v3719
    %v5250 = vunpack.c.l.b16 %v3720
    %v5251 = vunpack.c.h.b16 %v3720
    %v5252 = vunpack.c.l.b16 %v3721
    %v5253 = vunpack.c.h.b16 %v3721
    %v5254 = vunpack.c.l.b16 %v3722
    %v5255 = vunpack.c.h.b16 %v3722
    %v5256 = vunpack.c.l.b16 %v3723
    %v5257 = vunpack.c.h.b16 %v3723
    %v5258 = vunpack.c.l.b16 %v3724
    %v5259 = vunpack.c.h.b16 %v3724
    %v5260 = vunpack.c.l.b16 %v3725
    %v5261 = vunpack.c.h.b16 %v3725
    %v5262 = vunpack.c.l.b16 %v3726
    %v5263 = vunpack.c.h.b16 %v3726
    %v5264 = vunpack.c.l.b16 %v3727
    %v5265 = vunpack.c.h.b16 %v3727
    %v5266 = vunpack.c.l.b16 %v3728
    %v5267 = vunpack.c.h.b16 %v3728
    %v5268 = vunpack.c.l.b16 %v3729
    %v5269 = vunpack.c.h.b16 %v3729
    %v5270 = vunpack.c.l.b16 %v3730
    %v5271 = vunpack.c.h.b16 %v3730
    %v5272 = vunpack.c.l.b16 %v3731
    %v5273 = vunpack.c.h.b16 %v3731
    %v5274 = vunpack.c.l.b16 %v3732
    %v5275 = vunpack.c.h.b16 %v3732
    %v5276 = vunpack.c.l.b16 %v3733
    %v5277 = vunpack.c.h.b16 %v3733
    %v5278 = vunpack.c.l.b16 %v3734
    %v5279 = vunpack.c.h.b16 %v3734
    %v5280 = vunpack.c.l.b16 %v3735
    %v5281 = vunpack.c.h.b16 %v3735
    %v5282 = vunpack.c.l.b16 %v3736
    %v5283 = vunpack.c.h.b16 %v3736
    %v5284 = vunpack.c.l.b16 %v3737
    %v5285 = vunpack.c.h.b16 %v3737
    %v5286 = vunpack.c.l.b16 %v3738
    %v5287 = vunpack.c.h.b16 %v3738
    %v5288 = vunpack.c.l.b16 %v3739
    %v5289 = vunpack.c.h.b16 %v3739
    %v5290 = vunpack.c.l.b16 %v3740
    %v5291 = vunpack.c.h.b16 %v3740
    %v5292 = vunpack.c.l.b16 %v3741
    %v5293 = vunpack.c.h.b16 %v3741
    %v5294 = vunpack.c.l.b16 %v3742
    %v5295 = vunpack.c.h.b16 %v3742
    %v5296 = vunpack.c.l.b16 %v3743
    %v5297 = vunpack.c.h.b16 %v3743
    %v5298 = vunpack.c.l.b16 %v3744
    %v5299 = vunpack.c.h.b16 %v3744
    %v5300 = vunpack.c.l.b16 %v3745
    %v5301 = vunpack.c.h.b16 %v3745
    %v5302 = vunpack.c.l.b16 %v3746
    %v5303 = vunpack.c.h.b16 %v3746
    %v5304 = vunpack.c.l.b16 %v3747
    %v5305 = vunpack.c.h.b16 %v3747
    %v5306 = vunpack.c.l.b16 %v3748
    %v5307 = vunpack.c.h.b16 %v3748
    %v5308 = vunpack.c.l.b16 %v3749
    %v5309 = vunpack.c.h.b16 %v3749
    %v5310 = vunpack.c.l.b16 %v3750
    %v5311 = vunpack.c.h.b16 %v3750
    %v5312 = vunpack.c.l.b16 %v3751
    %v5313 = vunpack.c.h.b16 %v3751
    %v5314 = vunpack.c.l.b16 %v3752
    %v5315 = vunpack.c.h.b16 %v3752
    %v5316 = vunpack.c.l.b16 %v3753
    %v5317 = vunpack.c.h.b16 %v3753
    %v5318 = vunpack.c.l.b16 %v3754
    %v5319 = vunpack.c.h.b16 %v3754
    %v5320 = vunpack.c.l.b16 %v3755
    %v5321 = vunpack.c.h.b16 %v3755
    %v5322 = vunpack.c.l.b16 %v3756
    %v5323 = vunpack.c.h.b16 %v3756
    %v5324 = vunpack.c.l.b16 %v3757
    %v5325 = vunpack.c.h.b16 %v3757
    %v5326 = vunpack.c.l.b16 %v3758
    %v5327 = vunpack.c.h.b16 %v3758
    %v5328 = vunpack.c.l.b16 %v3759
    %v5329 = vunpack.c.h.b16 %v3759
    %v5330 = vunpack.c.l.b16 %v3760
    %v5331 = vunpack.c.h.b16 %v3760
    %v5332 = vunpack.c.l.b16 %v3761
    %v5333 = vunpack.c.h.b16 %v3761
    %v5334 = vunpack.c.l.b16 %v3762
    %v5335 = vunpack.c.h.b16 %v3762
    %v5336 = vunpack.c.l.b16 %v3763
    %v5337 = vunpack.c.h.b16 %v3763
    %v5338 = vunpack.c.l.b16 %v3764
    %v5339 = vunpack.c.h.b16 %v3764
    %v5340 = vunpack.c.l.b16 %v3765
    %v5341 = vunpack.c.h.b16 %v3765
    %v5342 = vunpack.c.l.b16 %v3766
    %v5343 = vunpack.c.h.b16 %v3766
    %v5344 = vunpack.c.l.b16 %v3767
    %v5345 = vunpack.c.h.b16 %v3767
    %v5346 = vpack.c.b16 %v4330, %v4322
    %v5347 = vpack.c.b16 %v4331, %v4323
    %v5348 = vpack.c.b16 %v4332, %v4324
    %v5349 = vpack.c.b16 %v4333, %v4325
    %v5350 = vpack.c.b16 %v4334, %v4326
    %v5351 = vpack.c.b16 %v4335, %v4327
    %v5352 = vpack.c.b16 %v4336, %v4328
    %v5353 = vpack.c.b16 %v4337, %v4329
    %v5354 = vpack.c.b16 %v4346, %v4338
    %v5355 = vpack.c.b16 %v4347, %v4339
    %v5356 = vpack.c.b16 %v4348, %v4340
    %v5357 = vpack.c.b16 %v4349, %v4341
    %v5358 = vpack.c.b16 %v4350, %v4342
    %v5359 = vpack.c.b16 %v4351, %v4343
    %v5360 = vpack.c.b16 %v4352, %v4344
    %v5361 = vpack.c.b16 %v4353, %v4345
    %v5362 = vpack.c.b16 %v4362, %v4354
    %v5363 = vpack.c.b16 %v4363, %v4355
    %v5364 = vpack.c.b16 %v4364, %v4356
    %v5365 = vpack.c.b16 %v4365, %v4357
    %v5366 = vpack.c.b16 %v4366, %v4358
    %v5367 = vpack.c.b16 %v4367, %v4359
    %v5368 = vpack.c.b16 %v4368, %v4360
    %v5369 = vpack.c.b16 %v4369, %v4361
    %v5370 = vpack.c.b16 %v4378, %v4370
    %v5371 = vpack.c.b16 %v4379, %v4371
    %v5372 = vpack.c.b16 %v4380, %v4372
    %v5373 = vpack.c.b16 %v4381, %v4373
    %v5374 = vpack.c.b16 %v4382, %v4374
    %v5375 = vpack.c.b16 %v4383, %v4375
    %v5376 = vpack.c.b16 %v4384, %v4376
    %v5377 = vpack.c.b16 %v4385, %v4377
    %v5378 = vpack.c.b16 %v4394, %v4386
    %v5379 = vpack.c.b16 %v4395, %v4387
    %v5380 = vpack.c.b16 %v4396, %v4388
    %v5381 = vpack.c.b16 %v4397, %v4389
    %v5382 = vpack.c.b16 %v4398, %v4390
    %v5383 = vpack.c.b16 %v4399, %v4391
    %v5384 = vpack.c.b16 %v4400, %v4392
    %v5385 = vpack.c.b16 %v4401, %v4393
    %v5386 = vpack.c.b16 %v4410, %v4402
    %v5387 = vpack.c.b16 %v4411, %v4403
    %v5388 = vpack.c.b16 %v4412, %v4404
    %v5389 = vpack.c.b16 %v4413, %v4405
    %v5390 = vpack.c.b16 %v4414, %v4406
    %v5391 = vpack.c.b16 %v4415, %v4407
    %v5392 = vpack.c.b16 %v4416, %v4408
    %v5393 = vpack.c.b16 %v4417, %v4409
    %v5394 = vpack.c.b16 %v4426, %v4418
    %v5395 = vpack.c.b16 %v4427, %v4419
    %v5396 = vpack.c.b16 %v4428, %v4420
    %v5397 = vpack.c.b16 %v4429, %v4421
    %v5398 = vpack.c.b16 %v4430, %v4422
    %v5399 = vpack.c.b16 %v4431, %v4423
    %v5400 = vpack.c.b16 %v4432, %v4424
    %v5401 = vpack.c.b16 %v4433, %v4425
    %v5402 = vpack.c.b16 %v4442, %v4434
    %v5403 = vpack.c.b16 %v4443, %v4435
    %v5404 = vpack.c.b16 %v4444, %v4436
    %v5405 = vpack.c.b16 %v4445, %v4437
    %v5406 = vpack.c.b16 %v4446, %v4438
    %v5407 = vpack.c.b16 %v4447, %v4439
    %v5408 = vpack.c.b16 %v4448, %v4440
    %v5409 = vpack.c.b16 %v4449, %v4441
    %v5410 = vpack.c.b16 %v4458, %v4450
    %v5411 = vpack.c.b16 %v4459, %v4451
    %v5412 = vpack.c.b16 %v4460, %v4452
    %v5413 = vpack.c.b16 %v4461, %v4453
    %v5414 = vpack.c.b16 %v4462, %v4454
    %v5415 = vpack.c.b16 %v4463, %v4455
    %v5416 = vpack.c.b16 %v4464, %v4456
    %v5417 = vpack.c.b16 %v4465, %v4457
    %v5418 = vpack.c.b16 %v4474, %v4466
    %v5419 = vpack.c.b16 %v4475, %v4467
    %v5420 = vpack.c.b16 %v4476, %v4468
    %v5421 = vpack.c.b16 %v4477, %v4469
    %v5422 = vpack.c.b16 %v4478, %v4470
    %v5423 = vpack.c.b16 %v4479, %v4471
    %v5424 = vpack.c.b16 %v4480, %v4472
    %v5425 = vpack.c.b16 %v4481, %v4473
    %v5426 = vpack.c.b16 %v4490, %v4482
    %v5427 = vpack.c.b16 %v4491, %v4483
    %v5428 = vpack.c.b16 %v4492, %v4484
    %v5429 = vpack.c.b16 %v4493, %v4485
    %v5430 = vpack.c.b16 %v4494, %v4486
    %v5431 = vpack.c.b16 %v4495, %v4487
    %v5432 = vpack.c.b16 %v4496, %v4488
    %v5433 = vpack.c.b16 %v4497, %v4489
    %v5434 = vpack.c.b16 %v4506, %v4498
    %v5435 = vpack.c.b16 %v4507, %v4499
    %v5436 = vpack.c.b16 %v4508, %v4500
    %v5437 = vpack.c.b16 %v4509, %v4501
    %v5438 = vpack.c.b16 %v4510, %v4502
    %v5439 = vpack.c.b16 %v4511, %v4503
    %v5440 = vpack.c.b16 %v4512, %v4504
    %v5441 = vpack.c.b16 %v4513, %v4505
    %v5442 = vpack.c.b16 %v4522, %v4514
    %v5443 = vpack.c.b16 %v4523, %v4515
    %v5444 = vpack.c.b16 %v4524, %v4516
    %v5445 = vpack.c.b16 %v4525, %v4517
    %v5446 = vpack.c.b16 %v4526, %v4518
    %v5447 = vpack.c.b16 %v4527, %v4519
    %v5448 = vpack.c.b16 %v4528, %v4520
    %v5449 = vpack.c.b16 %v4529, %v4521
    %v5450 = vpack.c.b16 %v4538, %v4530
    %v5451 = vpack.c.b16 %v4539, %v4531
    %v5452 = vpack.c.b16 %v4540, %v4532
    %v5453 = vpack.c.b16 %v4541, %v4533
    %v5454 = vpack.c.b16 %v4542, %v4534
    %v5455 = vpack.c.b16 %v4543, %v4535
    %v5456 = vpack.c.b16 %v4544, %v4536
    %v5457 = vpack.c.b16 %v4545, %v4537
    %v5458 = vpack.c.b16 %v4554, %v4546
    %v5459 = vpack.c.b16 %v4555, %v4547
    %v5460 = vpack.c.b16 %v4556, %v4548
    %v5461 = vpack.c.b16 %v4557, %v4549
    %v5462 = vpack.c.b16 %v4558, %v4550
    %v5463 = vpack.c.b16 %v4559, %v4551
    %v5464 = vpack.c.b16 %v4560, %v4552
    %v5465 = vpack.c.b16 %v4561, %v4553
    %v5466 = vpack.c.b16 %v4570, %v4562
    %v5467 = vpack.c.b16 %v4571, %v4563
    %v5468 = vpack.c.b16 %v4572, %v4564
    %v5469 = vpack.c.b16 %v4573, %v4565
    %v5470 = vpack.c.b16 %v4574, %v4566
    %v5471 = vpack.c.b16 %v4575, %v4567
    %v5472 = vpack.c.b16 %v4576, %v4568
    %v5473 = vpack.c.b16 %v4577, %v4569
    %v5474 = vpack.c.b16 %v4586, %v4578
    %v5475 = vpack.c.b16 %v4587, %v4579
    %v5476 = vpack.c.b16 %v4588, %v4580
    %v5477 = vpack.c.b16 %v4589, %v4581
    %v5478 = vpack.c.b16 %v4590, %v4582
    %v5479 = vpack.c.b16 %v4591, %v4583
    %v5480 = vpack.c.b16 %v4592, %v4584
    %v5481 = vpack.c.b16 %v4593, %v4585
    %v5482 = vpack.c.b16 %v4602, %v4594
    %v5483 = vpack.c.b16 %v4603, %v4595
    %v5484 = vpack.c.b16 %v4604, %v4596
    %v5485 = vpack.c.b16 %v4605, %v4597
    %v5486 = vpack.c.b16 %v4606, %v4598
    %v5487 = vpack.c.b16 %v4607, %v4599
    %v5488 = vpack.c.b16 %v4608, %v4600
    %v5489 = vpack.c.b16 %v4609, %v4601
    %v5490 = vpack.c.b16 %v4618, %v4610
    %v5491 = vpack.c.b16 %v4619, %v4611
    %v5492 = vpack.c.b16 %v4620, %v4612
    %v5493 = vpack.c.b16 %v4621, %v4613
    %v5494 = vpack.c.b16 %v4622, %v4614
    %v5495 = vpack.c.b16 %v4623, %v4615
    %v5496 = vpack.c.b16 %v4624, %v4616
    %v5497 = vpack.c.b16 %v4625, %v4617
    %v5498 = vpack.c.b16 %v4634, %v4626
    %v5499 = vpack.c.b16 %v4635, %v4627
    %v5500 = vpack.c.b16 %v4636, %v4628
    %v5501 = vpack.c.b16 %v4637, %v4629
    %v5502 = vpack.c.b16 %v4638, %v4630
    %v5503 = vpack.c.b16 %v4639, %v4631
    %v5504 = vpack.c.b16 %v4640, %v4632
    %v5505 = vpack.c.b16 %v4641, %v4633
    %v5506 = vpack.c.b16 %v4650, %v4642
    %v5507 = vpack.c.b16 %v4651, %v4643
    %v5508 = vpack.c.b16 %v4652, %v4644
    %v5509 = vpack.c.b16 %v4653, %v4645
    %v5510 = vpack.c.b16 %v4654, %v4646
    %v5511 = vpack.c.b16 %v4655, %v4647
    %v5512 = vpack.c.b16 %v4656, %v4648
    %v5513 = vpack.c.b16 %v4657, %v4649
    %v5514 = vpack.c.b16 %v4666, %v4658
    %v5515 = vpack.c.b16 %v4667, %v4659
    %v5516 = vpack.c.b16 %v4668, %v4660
    %v5517 = vpack.c.b16 %v4669, %v4661
    %v5518 = vpack.c.b16 %v4670, %v4662
    %v5519 = vpack.c.b16 %v4671, %v4663
    %v5520 = vpack.c.b16 %v4672, %v4664
    %v5521 = vpack.c.b16 %v4673, %v4665
    %v5522 = vpack.c.b16 %v4682, %v4674
    %v5523 = vpack.c.b16 %v4683, %v4675
    %v5524 = vpack.c.b16 %v4684, %v4676
    %v5525 = vpack.c.b16 %v4685, %v4677
    %v5526 = vpack.c.b16 %v4686, %v4678
    %v5527 = vpack.c.b16 %v4687, %v4679
    %v5528 = vpack.c.b16 %v4688, %v4680
    %v5529 = vpack.c.b16 %v4689, %v4681
    %v5530 = vpack.c.b16 %v4698, %v4690
    %v5531 = vpack.c.b16 %v4699, %v4691
    %v5532 = vpack.c.b16 %v4700, %v4692
    %v5533 = vpack.c.b16 %v4701, %v4693
    %v5534 = vpack.c.b16 %v4702, %v4694
    %v5535 = vpack.c.b16 %v4703, %v4695
    %v5536 = vpack.c.b16 %v4704, %v4696
    %v5537 = vpack.c.b16 %v4705, %v4697
    %v5538 = vpack.c.b16 %v4714, %v4706
    %v5539 = vpack.c.b16 %v4715, %v4707
    %v5540 = vpack.c.b16 %v4716, %v4708
    %v5541 = vpack.c.b16 %v4717, %v4709
    %v5542 = vpack.c.b16 %v4718, %v4710
    %v5543 = vpack.c.b16 %v4719, %v4711
    %v5544 = vpack.c.b16 %v4720, %v4712
    %v5545 = vpack.c.b16 %v4721, %v4713
    %v5546 = vpack.c.b16 %v4730, %v4722
    %v5547 = vpack.c.b16 %v4731, %v4723
    %v5548 = vpack.c.b16 %v4732, %v4724
    %v5549 = vpack.c.b16 %v4733, %v4725
    %v5550 = vpack.c.b16 %v4734, %v4726
    %v5551 = vpack.c.b16 %v4735, %v4727
    %v5552 = vpack.c.b16 %v4736, %v4728
    %v5553 = vpack.c.b16 %v4737, %v4729
    %v5554 = vpack.c.b16 %v4746, %v4738
    %v5555 = vpack.c.b16 %v4747, %v4739
    %v5556 = vpack.c.b16 %v4748, %v4740
    %v5557 = vpack.c.b16 %v4749, %v4741
    %v5558 = vpack.c.b16 %v4750, %v4742
    %v5559 = vpack.c.b16 %v4751, %v4743
    %v5560 = vpack.c.b16 %v4752, %v4744
    %v5561 = vpack.c.b16 %v4753, %v4745
    %v5562 = vpack.c.b16 %v4762, %v4754
    %v5563 = vpack.c.b16 %v4763, %v4755
    %v5564 = vpack.c.b16 %v4764, %v4756
    %v5565 = vpack.c.b16 %v4765, %v4757
    %v5566 = vpack.c.b16 %v4766, %v4758
    %v5567 = vpack.c.b16 %v4767, %v4759
    %v5568 = vpack.c.b16 %v4768, %v4760
    %v5569 = vpack.c.b16 %v4769, %v4761
    %v5570 = vpack.c.b16 %v4778, %v4770
    %v5571 = vpack.c.b16 %v4779, %v4771
    %v5572 = vpack.c.b16 %v4780, %v4772
    %v5573 = vpack.c.b16 %v4781, %v4773
    %v5574 = vpack.c.b16 %v4782, %v4774
    %v5575 = vpack.c.b16 %v4783, %v4775
    %v5576 = vpack.c.b16 %v4784, %v4776
    %v5577 = vpack.c.b16 %v4785, %v4777
    %v5578 = vpack.c.b16 %v4794, %v4786
    %v5579 = vpack.c.b16 %v4795, %v4787
    %v5580 = vpack.c.b16 %v4796, %v4788
    %v5581 = vpack.c.b16 %v4797, %v4789
    %v5582 = vpack.c.b16 %v4798, %v4790
    %v5583 = vpack.c.b16 %v4799, %v4791
    %v5584 = vpack.c.b16 %v4800, %v4792
    %v5585 = vpack.c.b16 %v4801, %v4793
    %v5586 = vpack.c.b16 %v4810, %v4802
    %v5587 = vpack.c.b16 %v4811, %v4803
    %v5588 = vpack.c.b16 %v4812, %v4804
    %v5589 = vpack.c.b16 %v4813, %v4805
    %v5590 = vpack.c.b16 %v4814, %v4806
    %v5591 = vpack.c.b16 %v4815, %v4807
    %v5592 = vpack.c.b16 %v4816, %v4808
    %v5593 = vpack.c.b16 %v4817, %v4809
    %v5594 = vpack.c.b16 %v4826, %v4818
    %v5595 = vpack.c.b16 %v4827, %v4819
    %v5596 = vpack.c.b16 %v4828, %v4820
    %v5597 = vpack.c.b16 %v4829, %v4821
    %v5598 = vpack.c.b16 %v4830, %v4822
    %v5599 = vpack.c.b16 %v4831, %v4823
    %v5600 = vpack.c.b16 %v4832, %v4824
    %v5601 = vpack.c.b16 %v4833, %v4825
    %v5602 = vpack.c.b16 %v4842, %v4834
    %v5603 = vpack.c.b16 %v4843, %v4835
    %v5604 = vpack.c.b16 %v4844, %v4836
    %v5605 = vpack.c.b16 %v4845, %v4837
    %v5606 = vpack.c.b16 %v4846, %v4838
    %v5607 = vpack.c.b16 %v4847, %v4839
    %v5608 = vpack.c.b16 %v4848, %v4840
    %v5609 = vpack.c.b16 %v4849, %v4841
    %v5610 = vpack.c.b16 %v4858, %v4850
    %v5611 = vpack.c.b16 %v4859, %v4851
    %v5612 = vpack.c.b16 %v4860, %v4852
    %v5613 = vpack.c.b16 %v4861, %v4853
    %v5614 = vpack.c.b16 %v4862, %v4854
    %v5615 = vpack.c.b16 %v4863, %v4855
    %v5616 = vpack.c.b16 %v4864, %v4856
    %v5617 = vpack.c.b16 %v4865, %v4857
    %v5618 = vpack.c.b16 %v4874, %v4866
    %v5619 = vpack.c.b16 %v4875, %v4867
    %v5620 = vpack.c.b16 %v4876, %v4868
    %v5621 = vpack.c.b16 %v4877, %v4869
    %v5622 = vpack.c.b16 %v4878, %v4870
    %v5623 = vpack.c.b16 %v4879, %v4871
    %v5624 = vpack.c.b16 %v4880, %v4872
    %v5625 = vpack.c.b16 %v4881, %v4873
    %v5626 = vpack.c.b16 %v4890, %v4882
    %v5627 = vpack.c.b16 %v4891, %v4883
    %v5628 = vpack.c.b16 %v4892, %v4884
    %v5629 = vpack.c.b16 %v4893, %v4885
    %v5630 = vpack.c.b16 %v4894, %v4886
    %v5631 = vpack.c.b16 %v4895, %v4887
    %v5632 = vpack.c.b16 %v4896, %v4888
    %v5633 = vpack.c.b16 %v4897, %v4889
    %v5634 = vpack.c.b16 %v4906, %v4898
    %v5635 = vpack.c.b16 %v4907, %v4899
    %v5636 = vpack.c.b16 %v4908, %v4900
    %v5637 = vpack.c.b16 %v4909, %v4901
    %v5638 = vpack.c.b16 %v4910, %v4902
    %v5639 = vpack.c.b16 %v4911, %v4903
    %v5640 = vpack.c.b16 %v4912, %v4904
    %v5641 = vpack.c.b16 %v4913, %v4905
    %v5642 = vpack.c.b16 %v4922, %v4914
    %v5643 = vpack.c.b16 %v4923, %v4915
    %v5644 = vpack.c.b16 %v4924, %v4916
    %v5645 = vpack.c.b16 %v4925, %v4917
    %v5646 = vpack.c.b16 %v4926, %v4918
    %v5647 = vpack.c.b16 %v4927, %v4919
    %v5648 = vpack.c.b16 %v4928, %v4920
    %v5649 = vpack.c.b16 %v4929, %v4921
    %v5650 = vpack.c.b16 %v4938, %v4930
    %v5651 = vpack.c.b16 %v4939, %v4931
    %v5652 = vpack.c.b16 %v4940, %v4932
    %v5653 = vpack.c.b16 %v4941, %v4933
    %v5654 = vpack.c.b16 %v4942, %v4934
    %v5655 = vpack.c.b16 %v4943, %v4935
    %v5656 = vpack.c.b16 %v4944, %v4936
    %v5657 = vpack.c.b16 %v4945, %v4937
    %v5658 = vpack.c.b16 %v4954, %v4946
    %v5659 = vpack.c.b16 %v4955, %v4947
    %v5660 = vpack.c.b16 %v4956, %v4948
    %v5661 = vpack.c.b16 %v4957, %v4949
    %v5662 = vpack.c.b16 %v4958, %v4950
    %v5663 = vpack.c.b16 %v4959, %v4951
    %v5664 = vpack.c.b16 %v4960, %v4952
    %v5665 = vpack.c.b16 %v4961, %v4953
    %v5666 = vpack.c.b16 %v4970, %v4962
    %v5667 = vpack.c.b16 %v4971, %v4963
    %v5668 = vpack.c.b16 %v4972, %v4964
    %v5669 = vpack.c.b16 %v4973, %v4965
    %v5670 = vpack.c.b16 %v4974, %v4966
    %v5671 = vpack.c.b16 %v4975, %v4967
    %v5672 = vpack.c.b16 %v4976, %v4968
    %v5673 = vpack.c.b16 %v4977, %v4969
    %v5674 = vpack.c.b16 %v4986, %v4978
    %v5675 = vpack.c.b16 %v4987, %v4979
    %v5676 = vpack.c.b16 %v4988, %v4980
    %v5677 = vpack.c.b16 %v4989, %v4981
    %v5678 = vpack.c.b16 %v4990, %v4982
    %v5679 = vpack.c.b16 %v4991, %v4983
    %v5680 = vpack.c.b16 %v4992, %v4984
    %v5681 = vpack.c.b16 %v4993, %v4985
    %v5682 = vpack.c.b16 %v5002, %v4994
    %v5683 = vpack.c.b16 %v5003, %v4995
    %v5684 = vpack.c.b16 %v5004, %v4996
    %v5685 = vpack.c.b16 %v5005, %v4997
    %v5686 = vpack.c.b16 %v5006, %v4998
    %v5687 = vpack.c.b16 %v5007, %v4999
    %v5688 = vpack.c.b16 %v5008, %v5000
    %v5689 = vpack.c.b16 %v5009, %v5001
    %v5690 = vpack.c.b16 %v5018, %v5010
    %v5691 = vpack.c.b16 %v5019, %v5011
    %v5692 = vpack.c.b16 %v5020, %v5012
    %v5693 = vpack.c.b16 %v5021, %v5013
    %v5694 = vpack.c.b16 %v5022, %v5014
    %v5695 = vpack.c.b16 %v5023, %v5015
    %v5696 = vpack.c.b16 %v5024, %v5016
    %v5697 = vpack.c.b16 %v5025, %v5017
    %v5698 = vpack.c.b16 %v5034, %v5026
    %v5699 = vpack.c.b16 %v5035, %v5027
    %v5700 = vpack.c.b16 %v5036, %v5028
    %v5701 = vpack.c.b16 %v5037, %v5029
    %v5702 = vpack.c.b16 %v5038, %v5030
    %v5703 = vpack.c.b16 %v5039, %v5031
    %v5704 = vpack.c.b16 %v5040, %v5032
    %v5705 = vpack.c.b16 %v5041, %v5033
    %v5706 = vpack.c.b16 %v5050, %v5042
    %v5707 = vpack.c.b16 %v5051, %v5043
    %v5708 = vpack.c.b16 %v5052, %v5044
    %v5709 = vpack.c.b16 %v5053, %v5045
    %v5710 = vpack.c.b16 %v5054, %v5046
    %v5711 = vpack.c.b16 %v5055, %v5047
    %v5712 = vpack.c.b16 %v5056, %v5048
    %v5713 = vpack.c.b16 %v5057, %v5049
    %v5714 = vpack.c.b16 %v5066, %v5058
    %v5715 = vpack.c.b16 %v5067, %v5059
    %v5716 = vpack.c.b16 %v5068, %v5060
    %v5717 = vpack.c.b16 %v5069, %v5061
    %v5718 = vpack.c.b16 %v5070, %v5062
    %v5719 = vpack.c.b16 %v5071, %v5063
    %v5720 = vpack.c.b16 %v5072, %v5064
    %v5721 = vpack.c.b16 %v5073, %v5065
    %v5722 = vpack.c.b16 %v5082, %v5074
    %v5723 = vpack.c.b16 %v5083, %v5075
    %v5724 = vpack.c.b16 %v5084, %v5076
    %v5725 = vpack.c.b16 %v5085, %v5077
    %v5726 = vpack.c.b16 %v5086, %v5078
    %v5727 = vpack.c.b16 %v5087, %v5079
    %v5728 = vpack.c.b16 %v5088, %v5080
    %v5729 = vpack.c.b16 %v5089, %v5081
    %v5730 = vpack.c.b16 %v5098, %v5090
    %v5731 = vpack.c.b16 %v5099, %v5091
    %v5732 = vpack.c.b16 %v5100, %v5092
    %v5733 = vpack.c.b16 %v5101, %v5093
    %v5734 = vpack.c.b16 %v5102, %v5094
    %v5735 = vpack.c.b16 %v5103, %v5095
    %v5736 = vpack.c.b16 %v5104, %v5096
    %v5737 = vpack.c.b16 %v5105, %v5097
    %v5738 = vpack.c.b16 %v5114, %v5106
    %v5739 = vpack.c.b16 %v5115, %v5107
    %v5740 = vpack.c.b16 %v5116, %v5108
    %v5741 = vpack.c.b16 %v5117, %v5109
    %v5742 = vpack.c.b16 %v5118, %v5110
    %v5743 = vpack.c.b16 %v5119, %v5111
    %v5744 = vpack.c.b16 %v5120, %v5112
    %v5745 = vpack.c.b16 %v5121, %v5113
    %v5746 = vpack.c.b16 %v5130, %v5122
    %v5747 = vpack.c.b16 %v5131, %v5123
    %v5748 = vpack.c.b16 %v5132, %v5124
    %v5749 = vpack.c.b16 %v5133, %v5125
    %v5750 = vpack.c.b16 %v5134, %v5126
    %v5751 = vpack.c.b16 %v5135, %v5127
    %v5752 = vpack.c.b16 %v5136, %v5128
    %v5753 = vpack.c.b16 %v5137, %v5129
    %v5754 = vpack.c.b16 %v5146, %v5138
    %v5755 = vpack.c.b16 %v5147, %v5139
    %v5756 = vpack.c.b16 %v5148, %v5140
    %v5757 = vpack.c.b16 %v5149, %v5141
    %v5758 = vpack.c.b16 %v5150, %v5142
    %v5759 = vpack.c.b16 %v5151, %v5143
    %v5760 = vpack.c.b16 %v5152, %v5144
    %v5761 = vpack.c.b16 %v5153, %v5145
    %v5762 = vpack.c.b16 %v5162, %v5154
    %v5763 = vpack.c.b16 %v5163, %v5155
    %v5764 = vpack.c.b16 %v5164, %v5156
    %v5765 = vpack.c.b16 %v5165, %v5157
    %v5766 = vpack.c.b16 %v5166, %v5158
    %v5767 = vpack.c.b16 %v5167, %v5159
    %v5768 = vpack.c.b16 %v5168, %v5160
    %v5769 = vpack.c.b16 %v5169, %v5161
    %v5770 = vpack.c.b16 %v5178, %v5170
    %v5771 = vpack.c.b16 %v5179, %v5171
    %v5772 = vpack.c.b16 %v5180, %v5172
    %v5773 = vpack.c.b16 %v5181, %v5173
    %v5774 = vpack.c.b16 %v5182, %v5174
    %v5775 = vpack.c.b16 %v5183, %v5175
    %v5776 = vpack.c.b16 %v5184, %v5176
    %v5777 = vpack.c.b16 %v5185, %v5177
    %v5778 = vpack.c.b16 %v5194, %v5186
    %v5779 = vpack.c.b16 %v5195, %v5187
    %v5780 = vpack.c.b16 %v5196, %v5188
    %v5781 = vpack.c.b16 %v5197, %v5189
    %v5782 = vpack.c.b16 %v5198, %v5190
    %v5783 = vpack.c.b16 %v5199, %v5191
    %v5784 = vpack.c.b16 %v5200, %v5192
    %v5785 = vpack.c.b16 %v5201, %v5193
    %v5786 = vpack.c.b16 %v5210, %v5202
    %v5787 = vpack.c.b16 %v5211, %v5203
    %v5788 = vpack.c.b16 %v5212, %v5204
    %v5789 = vpack.c.b16 %v5213, %v5205
    %v5790 = vpack.c.b16 %v5214, %v5206
    %v5791 = vpack.c.b16 %v5215, %v5207
    %v5792 = vpack.c.b16 %v5216, %v5208
    %v5793 = vpack.c.b16 %v5217, %v5209
    %v5794 = vpack.c.b16 %v5226, %v5218
    %v5795 = vpack.c.b16 %v5227, %v5219
    %v5796 = vpack.c.b16 %v5228, %v5220
    %v5797 = vpack.c.b16 %v5229, %v5221
    %v5798 = vpack.c.b16 %v5230, %v5222
    %v5799 = vpack.c.b16 %v5231, %v5223
    %v5800 = vpack.c.b16 %v5232, %v5224
    %v5801 = vpack.c.b16 %v5233, %v5225
    %v5802 = vpack.c.b16 %v5242, %v5234
    %v5803 = vpack.c.b16 %v5243, %v5235
    %v5804 = vpack.c.b16 %v5244, %v5236
    %v5805 = vpack.c.b16 %v5245, %v5237
    %v5806 = vpack.c.b16 %v5246, %v5238
    %v5807 = vpack.c.b16 %v5247, %v5239
    %v5808 = vpack.c.b16 %v5248, %v5240
    %v5809 = vpack.c.b16 %v5249, %v5241
    %v5810 = vpack.c.b16 %v5258, %v5250
    %v5811 = vpack.c.b16 %v5259, %v5251
    %v5812 = vpack.c.b16 %v5260, %v5252
    %v5813 = vpack.c.b16 %v5261, %v5253
    %v5814 = vpack.c.b16 %v5262, %v5254
    %v5815 = vpack.c.b16 %v5263, %v5255
    %v5816 = vpack.c.b16 %v5264, %v5256
    %v5817 = vpack.c.b16 %v5265, %v5257
    %v5818 = vpack.c.b16 %v5274, %v5266
    %v5819 = vpack.c.b16 %v5275, %v5267
    %v5820 = vpack.c.b16 %v5276, %v5268
    %v5821 = vpack.c.b16 %v5277, %v5269
    %v5822 = vpack.c.b16 %v5278, %v5270
    %v5823 = vpack.c.b16 %v5279, %v5271
    %v5824 = vpack.c.b16 %v5280, %v5272
    %v5825 = vpack.c.b16 %v5281, %v5273
    %v5826 = vpack.c.b16 %v5290, %v5282
    %v5827 = vpack.c.b16 %v5291, %v5283
    %v5828 = vpack.c.b16 %v5292, %v5284
    %v5829 = vpack.c.b16 %v5293, %v5285
    %v5830 = vpack.c.b16 %v5294, %v5286
    %v5831 = vpack.c.b16 %v5295, %v5287
    %v5832 = vpack.c.b16 %v5296, %v5288
    %v5833 = vpack.c.b16 %v5297, %v5289
    %v5834 = vpack.c.b16 %v5306, %v5298
    %v5835 = vpack.c.b16 %v5307, %v5299
    %v5836 = vpack.c.b16 %v5308, %v5300
    %v5837 = vpack.c.b16 %v5309, %v5301
    %v5838 = vpack.c.b16 %v5310, %v5302
    %v5839 = vpack.c.b16 %v5311, %v5303
    %v5840 = vpack.c.b16 %v5312, %v5304
    %v5841 = vpack.c.b16 %v5313, %v5305
    %v5842 = vpack.c.b16 %v5322, %v5314
    %v5843 = vpack.c.b16 %v5323, %v5315
    %v5844 = vpack.c.b16 %v5324, %v5316
    %v5845 = vpack.c.b16 %v5325, %v5317
    %v5846 = vpack.c.b16 %v5326, %v5318
    %v5847 = vpack.c.b16 %v5327, %v5319
    %v5848 = vpack.c.b16 %v5328, %v5320
    %v5849 = vpack.c.b16 %v5329, %v5321
    %v5850 = vpack.c.b16 %v5338, %v5330
    %v5851 = vpack.c.b16 %v5339, %v5331
    %v5852 = vpack.c.b16 %v5340, %v5332
    %v5853 = vpack.c.b16 %v5341, %v5333
    %v5854 = vpack.c.b16 %v5342, %v5334
    %v5855 = vpack.c.b16 %v5343, %v5335
    %v5856 = vpack.c.b16 %v5344, %v5336
    %v5857 = vpack.c.b16 %v5345, %v5337
    %6370 = vmatprep.subr.bf16.mxu0 %v5403
    %6371 = vmatpush1.bf16.msra.mxu0 %v5402
    %6372 = vmatprep.subr.bf16.mxu0 %v5395
    %6373 = vmatpush1.bf16.msra.mxu0 %v5394
    %6374 = vmatprep.subr.bf16.mxu0 %v5387
    %6375 = vmatpush1.bf16.msra.mxu0 %v5386
    %6376 = vmatprep.subr.bf16.mxu0 %v5379
    %6377 = vmatpush1.bf16.msra.mxu0 %v5378
    %6378 = vmatprep.subr.bf16.mxu0 %v5371
    %6379 = vmatpush1.bf16.msra.mxu0 %v5370
    %6380 = vmatprep.subr.bf16.mxu0 %v5363
    %6381 = vmatpush1.bf16.msra.mxu0 %v5362
    %6382 = vmatprep.subr.bf16.mxu0 %v5355
    %6383 = vmatpush1.bf16.msra.mxu0 %v5354
    %6384 = vmatprep.subr.bf16.mxu0 %v5347
    %6385 = vmatpush1.bf16.msra.mxu0 %v5346
    %6386 = vmatprep.subr.bf16.mxu0 %v5467
    %6387 = vmatpush2.bf16.msra.mxu0 %v5466
    %6388 = vmatprep.subr.bf16.mxu0 %v5459
    %6389 = vmatpush2.bf16.msra.mxu0 %v5458
    %6390 = vmatprep.subr.bf16.mxu0 %v5451
    %6391 = vmatpush2.bf16.msra.mxu0 %v5450
    %6392 = vmatprep.subr.bf16.mxu0 %v5443
    %6393 = vmatpush2.bf16.msra.mxu0 %v5442
    %6394 = vmatprep.subr.bf16.mxu0 %v5435
    %6395 = vmatpush2.bf16.msra.mxu0 %v5434
    %6396 = vmatprep.subr.bf16.mxu0 %v5427
    %6397 = vmatpush2.bf16.msra.mxu0 %v5426
    %6398 = vmatprep.subr.bf16.mxu0 %v5419
    %6399 = vmatpush2.bf16.msra.mxu0 %v5418
    %6400 = vmatprep.subr.bf16.mxu0 %v5411
    %6401 = vmatpush2.bf16.msra.mxu0 %v5410
    %6402 = vmatprep.mubr.bf16.mxu0 %v3249
    %6403 = vmatmul.mubr.bf16.gmra.mxu0 %v3248
    %v6404 = vpop.f32.mrf.mxu0
    %v6405 = vadd.f32 %v3773, %v6404
    %v6406 = vpop.f32.mrf.mxu0
    %v6407 = vadd.f32 %v3777, %v6406
    %v6408 = vpop.f32.mrf.mxu0
    %v6409 = vadd.f32 %v3773, %v6408
    %v6410 = vpop.f32.mrf.mxu0
    %v6411 = vadd.f32 %v3777, %v6410
    %6412 = vdwg.mxu0
    %6413 = vmatprep.subr.bf16.mxu0 %v5531
    %6414 = vmatpush1.bf16.msra.mxu0 %v5530
    %6415 = vmatprep.subr.bf16.mxu0 %v5523
    %6416 = vmatpush1.bf16.msra.mxu0 %v5522
    %6417 = vmatprep.subr.bf16.mxu0 %v5515
    %6418 = vmatpush1.bf16.msra.mxu0 %v5514
    %6419 = vmatprep.subr.bf16.mxu0 %v5507
    %6420 = vmatpush1.bf16.msra.mxu0 %v5506
    %6421 = vmatprep.subr.bf16.mxu0 %v5499
    %6422 = vmatpush1.bf16.msra.mxu0 %v5498
    %6423 = vmatprep.subr.bf16.mxu0 %v5491
    %6424 = vmatpush1.bf16.msra.mxu0 %v5490
    %6425 = vmatprep.subr.bf16.mxu0 %v5483
    %6426 = vmatpush1.bf16.msra.mxu0 %v5482
    %6427 = vmatprep.subr.bf16.mxu0 %v5475
    %6428 = vmatpush1.bf16.msra.mxu0 %v5474
    %6429 = vmatprep.subr.bf16.mxu0 %v5595
    %6430 = vmatpush2.bf16.msra.mxu0 %v5594
    %6431 = vmatprep.subr.bf16.mxu0 %v5587
    %6432 = vmatpush2.bf16.msra.mxu0 %v5586
    %6433 = vmatprep.subr.bf16.mxu0 %v5579
    %6434 = vmatpush2.bf16.msra.mxu0 %v5578
    %6435 = vmatprep.subr.bf16.mxu0 %v5571
    %6436 = vmatpush2.bf16.msra.mxu0 %v5570
    %6437 = vmatprep.subr.bf16.mxu0 %v5563
    %6438 = vmatpush2.bf16.msra.mxu0 %v5562
    %6439 = vmatprep.subr.bf16.mxu0 %v5555
    %6440 = vmatpush2.bf16.msra.mxu0 %v5554
    %6441 = vmatprep.subr.bf16.mxu0 %v5547
    %6442 = vmatpush2.bf16.msra.mxu0 %v5546
    %6443 = vmatprep.subr.bf16.mxu0 %v5539
    %6444 = vmatpush2.bf16.msra.mxu0 %v5538
    %6445 = vmatprep.mubr.bf16.mxu0 %v3251
    %6446 = vmatmul.mubr.bf16.gmra.mxu0 %v3250
    %v6447 = vpop.f32.mrf.mxu0
    %v6448 = vadd.f32 %v6405, %v6447
    %v6449 = vpop.f32.mrf.mxu0
    %v6450 = vadd.f32 %v6407, %v6449
    %v6451 = vpop.f32.mrf.mxu0
    %v6452 = vadd.f32 %v6409, %v6451
    %v6453 = vpop.f32.mrf.mxu0
    %v6454 = vadd.f32 %v6411, %v6453
    %6455 = vdwg.mxu0
    %6456 = vmatprep.subr.bf16.mxu0 %v5659
    %6457 = vmatpush1.bf16.msra.mxu0 %v5658
    %6458 = vmatprep.subr.bf16.mxu0 %v5651
    %6459 = vmatpush1.bf16.msra.mxu0 %v5650
    %6460 = vmatprep.subr.bf16.mxu0 %v5643
    %6461 = vmatpush1.bf16.msra.mxu0 %v5642
    %6462 = vmatprep.subr.bf16.mxu0 %v5635
    %6463 = vmatpush1.bf16.msra.mxu0 %v5634
    %6464 = vmatprep.subr.bf16.mxu0 %v5627
    %6465 = vmatpush1.bf16.msra.mxu0 %v5626
    %6466 = vmatprep.subr.bf16.mxu0 %v5619
    %6467 = vmatpush1.bf16.msra.mxu0 %v5618
    %6468 = vmatprep.subr.bf16.mxu0 %v5611
    %6469 = vmatpush1.bf16.msra.mxu0 %v5610
    %6470 = vmatprep.subr.bf16.mxu0 %v5603
    %6471 = vmatpush1.bf16.msra.mxu0 %v5602
    %6472 = vmatprep.subr.bf16.mxu0 %v5723
    %6473 = vmatpush2.bf16.msra.mxu0 %v5722
    %6474 = vmatprep.subr.bf16.mxu0 %v5715
    %6475 = vmatpush2.bf16.msra.mxu0 %v5714
    %6476 = vmatprep.subr.bf16.mxu0 %v5707
    %6477 = vmatpush2.bf16.msra.mxu0 %v5706
    %6478 = vmatprep.subr.bf16.mxu0 %v5699
    %6479 = vmatpush2.bf16.msra.mxu0 %v5698
    %6480 = vmatprep.subr.bf16.mxu0 %v5691
    %6481 = vmatpush2.bf16.msra.mxu0 %v5690
    %6482 = vmatprep.subr.bf16.mxu0 %v5683
    %6483 = vmatpush2.bf16.msra.mxu0 %v5682
    %6484 = vmatprep.subr.bf16.mxu0 %v5675
    %6485 = vmatpush2.bf16.msra.mxu0 %v5674
    %6486 = vmatprep.subr.bf16.mxu0 %v5667
    %6487 = vmatpush2.bf16.msra.mxu0 %v5666
    %6488 = vmatprep.mubr.bf16.mxu0 %v3253
    %6489 = vmatmul.mubr.bf16.gmra.mxu0 %v3252
    %v6490 = vpop.f32.mrf.mxu0
    %v6491 = vadd.f32 %v6448, %v6490
    %v6492 = vpop.f32.mrf.mxu0
    %v6493 = vadd.f32 %v6450, %v6492
    %v6494 = vpop.f32.mrf.mxu0
    %v6495 = vadd.f32 %v6452, %v6494
    %v6496 = vpop.f32.mrf.mxu0
    %v6497 = vadd.f32 %v6454, %v6496
    %6498 = vdwg.mxu0
    %6499 = vmatprep.subr.bf16.mxu0 %v5787
    %6500 = vmatpush1.bf16.msra.mxu0 %v5786
    %6501 = vmatprep.subr.bf16.mxu0 %v5779
    %6502 = vmatpush1.bf16.msra.mxu0 %v5778
    %6503 = vmatprep.subr.bf16.mxu0 %v5771
    %6504 = vmatpush1.bf16.msra.mxu0 %v5770
    %6505 = vmatprep.subr.bf16.mxu0 %v5763
    %6506 = vmatpush1.bf16.msra.mxu0 %v5762
    %6507 = vmatprep.subr.bf16.mxu0 %v5755
    %6508 = vmatpush1.bf16.msra.mxu0 %v5754
    %6509 = vmatprep.subr.bf16.mxu0 %v5747
    %6510 = vmatpush1.bf16.msra.mxu0 %v5746
    %6511 = vmatprep.subr.bf16.mxu0 %v5739
    %6512 = vmatpush1.bf16.msra.mxu0 %v5738
    %6513 = vmatprep.subr.bf16.mxu0 %v5731
    %6514 = vmatpush1.bf16.msra.mxu0 %v5730
    %6515 = vmatprep.subr.bf16.mxu0 %v5851
    %6516 = vmatpush2.bf16.msra.mxu0 %v5850
    %6517 = vmatprep.subr.bf16.mxu0 %v5843
    %6518 = vmatpush2.bf16.msra.mxu0 %v5842
    %6519 = vmatprep.subr.bf16.mxu0 %v5835
    %6520 = vmatpush2.bf16.msra.mxu0 %v5834
    %6521 = vmatprep.subr.bf16.mxu0 %v5827
    %6522 = vmatpush2.bf16.msra.mxu0 %v5826
    %6523 = vmatprep.subr.bf16.mxu0 %v5819
    %6524 = vmatpush2.bf16.msra.mxu0 %v5818
    %6525 = vmatprep.subr.bf16.mxu0 %v5811
    %6526 = vmatpush2.bf16.msra.mxu0 %v5810
    %6527 = vmatprep.subr.bf16.mxu0 %v5803
    %6528 = vmatpush2.bf16.msra.mxu0 %v5802
    %6529 = vmatprep.subr.bf16.mxu0 %v5795
    %6530 = vmatpush2.bf16.msra.mxu0 %v5794
    %6531 = vmatprep.mubr.bf16.mxu0 %v3255
    %6532 = vmatmul.mubr.bf16.gmra.mxu0 %v3254
    %v6533 = vpop.f32.mrf.mxu0
    %v6534 = vadd.f32 %v6491, %v6533
    %v6535 = vpop.f32.mrf.mxu0
    %v6536 = vadd.f32 %v6493, %v6535
    %v6537 = vpop.f32.mrf.mxu0
    %v6538 = vadd.f32 %v6495, %v6537
    %v6539 = vpop.f32.mrf.mxu0
    %v6540 = vadd.f32 %v6497, %v6539
    %6541 = vdwg.mxu0
    %6542 = vmatprep.subr.bf16.mxu0 %v5405
    %6543 = vmatpush1.bf16.msra.mxu0 %v5404
    %6544 = vmatprep.subr.bf16.mxu0 %v5397
    %6545 = vmatpush1.bf16.msra.mxu0 %v5396
    %6546 = vmatprep.subr.bf16.mxu0 %v5389
    %6547 = vmatpush1.bf16.msra.mxu0 %v5388
    %6548 = vmatprep.subr.bf16.mxu0 %v5381
    %6549 = vmatpush1.bf16.msra.mxu0 %v5380
    %6550 = vmatprep.subr.bf16.mxu0 %v5373
    %6551 = vmatpush1.bf16.msra.mxu0 %v5372
    %6552 = vmatprep.subr.bf16.mxu0 %v5365
    %6553 = vmatpush1.bf16.msra.mxu0 %v5364
    %6554 = vmatprep.subr.bf16.mxu0 %v5357
    %6555 = vmatpush1.bf16.msra.mxu0 %v5356
    %6556 = vmatprep.subr.bf16.mxu0 %v5349
    %6557 = vmatpush1.bf16.msra.mxu0 %v5348
    %6558 = vmatprep.subr.bf16.mxu0 %v5469
    %6559 = vmatpush2.bf16.msra.mxu0 %v5468
    %6560 = vmatprep.subr.bf16.mxu0 %v5461
    %6561 = vmatpush2.bf16.msra.mxu0 %v5460
    %6562 = vmatprep.subr.bf16.mxu0 %v5453
    %6563 = vmatpush2.bf16.msra.mxu0 %v5452
    %6564 = vmatprep.subr.bf16.mxu0 %v5445
    %6565 = vmatpush2.bf16.msra.mxu0 %v5444
    %6566 = vmatprep.subr.bf16.mxu0 %v5437
    %6567 = vmatpush2.bf16.msra.mxu0 %v5436
    %6568 = vmatprep.subr.bf16.mxu0 %v5429
    %6569 = vmatpush2.bf16.msra.mxu0 %v5428
    %6570 = vmatprep.subr.bf16.mxu0 %v5421
    %6571 = vmatpush2.bf16.msra.mxu0 %v5420
    %6572 = vmatprep.subr.bf16.mxu0 %v5413
    %6573 = vmatpush2.bf16.msra.mxu0 %v5412
    %6574 = vmatprep.mubr.bf16.mxu0 %v3249
    %6575 = vmatmul.mubr.bf16.gmra.mxu0 %v3248
    %v6576 = vpop.f32.mrf.mxu0
    %v6577 = vadd.f32 %v3781, %v6576
    %v6578 = vpop.f32.mrf.mxu0
    %v6579 = vadd.f32 %v3785, %v6578
    %v6580 = vpop.f32.mrf.mxu0
    %v6581 = vadd.f32 %v3781, %v6580
    %v6582 = vpop.f32.mrf.mxu0
    %v6583 = vadd.f32 %v3785, %v6582
    %6584 = vdwg.mxu0
    %6585 = vmatprep.subr.bf16.mxu0 %v5533
    %6586 = vmatpush1.bf16.msra.mxu0 %v5532
    %6587 = vmatprep.subr.bf16.mxu0 %v5525
    %6588 = vmatpush1.bf16.msra.mxu0 %v5524
    %6589 = vmatprep.subr.bf16.mxu0 %v5517
    %6590 = vmatpush1.bf16.msra.mxu0 %v5516
    %6591 = vmatprep.subr.bf16.mxu0 %v5509
    %6592 = vmatpush1.bf16.msra.mxu0 %v5508
    %6593 = vmatprep.subr.bf16.mxu0 %v5501
    %6594 = vmatpush1.bf16.msra.mxu0 %v5500
    %6595 = vmatprep.subr.bf16.mxu0 %v5493
    %6596 = vmatpush1.bf16.msra.mxu0 %v5492
    %6597 = vmatprep.subr.bf16.mxu0 %v5485
    %6598 = vmatpush1.bf16.msra.mxu0 %v5484
    %6599 = vmatprep.subr.bf16.mxu0 %v5477
    %6600 = vmatpush1.bf16.msra.mxu0 %v5476
    %6601 = vmatprep.subr.bf16.mxu0 %v5597
    %6602 = vmatpush2.bf16.msra.mxu0 %v5596
    %6603 = vmatprep.subr.bf16.mxu0 %v5589
    %6604 = vmatpush2.bf16.msra.mxu0 %v5588
    %6605 = vmatprep.subr.bf16.mxu0 %v5581
    %6606 = vmatpush2.bf16.msra.mxu0 %v5580
    %6607 = vmatprep.subr.bf16.mxu0 %v5573
    %6608 = vmatpush2.bf16.msra.mxu0 %v5572
    %6609 = vmatprep.subr.bf16.mxu0 %v5565
    %6610 = vmatpush2.bf16.msra.mxu0 %v5564
    %6611 = vmatprep.subr.bf16.mxu0 %v5557
    %6612 = vmatpush2.bf16.msra.mxu0 %v5556
    %6613 = vmatprep.subr.bf16.mxu0 %v5549
    %6614 = vmatpush2.bf16.msra.mxu0 %v5548
    %6615 = vmatprep.subr.bf16.mxu0 %v5541
    %6616 = vmatpush2.bf16.msra.mxu0 %v5540
    %6617 = vmatprep.mubr.bf16.mxu0 %v3251
    %6618 = vmatmul.mubr.bf16.gmra.mxu0 %v3250
    %v6619 = vpop.f32.mrf.mxu0
    %v6620 = vadd.f32 %v6577, %v6619
    %v6621 = vpop.f32.mrf.mxu0
    %v6622 = vadd.f32 %v6579, %v6621
    %v6623 = vpop.f32.mrf.mxu0
    %v6624 = vadd.f32 %v6581, %v6623
    %v6625 = vpop.f32.mrf.mxu0
    %v6626 = vadd.f32 %v6583, %v6625
    %6627 = vdwg.mxu0
    %6628 = vmatprep.subr.bf16.mxu0 %v5661
    %6629 = vmatpush1.bf16.msra.mxu0 %v5660
    %6630 = vmatprep.subr.bf16.mxu0 %v5653
    %6631 = vmatpush1.bf16.msra.mxu0 %v5652
    %6632 = vmatprep.subr.bf16.mxu0 %v5645
    %6633 = vmatpush1.bf16.msra.mxu0 %v5644
    %6634 = vmatprep.subr.bf16.mxu0 %v5637
    %6635 = vmatpush1.bf16.msra.mxu0 %v5636
    %6636 = vmatprep.subr.bf16.mxu0 %v5629
    %6637 = vmatpush1.bf16.msra.mxu0 %v5628
    %6638 = vmatprep.subr.bf16.mxu0 %v5621
    %6639 = vmatpush1.bf16.msra.mxu0 %v5620
    %6640 = vmatprep.subr.bf16.mxu0 %v5613
    %6641 = vmatpush1.bf16.msra.mxu0 %v5612
    %6642 = vmatprep.subr.bf16.mxu0 %v5605
    %6643 = vmatpush1.bf16.msra.mxu0 %v5604
    %6644 = vmatprep.subr.bf16.mxu0 %v5725
    %6645 = vmatpush2.bf16.msra.mxu0 %v5724
    %6646 = vmatprep.subr.bf16.mxu0 %v5717
    %6647 = vmatpush2.bf16.msra.mxu0 %v5716
    %6648 = vmatprep.subr.bf16.mxu0 %v5709
    %6649 = vmatpush2.bf16.msra.mxu0 %v5708
    %6650 = vmatprep.subr.bf16.mxu0 %v5701
    %6651 = vmatpush2.bf16.msra.mxu0 %v5700
    %6652 = vmatprep.subr.bf16.mxu0 %v5693
    %6653 = vmatpush2.bf16.msra.mxu0 %v5692
    %6654 = vmatprep.subr.bf16.mxu0 %v5685
    %6655 = vmatpush2.bf16.msra.mxu0 %v5684
    %6656 = vmatprep.subr.bf16.mxu0 %v5677
    %6657 = vmatpush2.bf16.msra.mxu0 %v5676
    %6658 = vmatprep.subr.bf16.mxu0 %v5669
    %6659 = vmatpush2.bf16.msra.mxu0 %v5668
    %6660 = vmatprep.mubr.bf16.mxu0 %v3253
    %6661 = vmatmul.mubr.bf16.gmra.mxu0 %v3252
    %v6662 = vpop.f32.mrf.mxu0
    %v6663 = vadd.f32 %v6620, %v6662
    %v6664 = vpop.f32.mrf.mxu0
    %v6665 = vadd.f32 %v6622, %v6664
    %v6666 = vpop.f32.mrf.mxu0
    %v6667 = vadd.f32 %v6624, %v6666
    %v6668 = vpop.f32.mrf.mxu0
    %v6669 = vadd.f32 %v6626, %v6668
    %6670 = vdwg.mxu0
    %6671 = vmatprep.subr.bf16.mxu0 %v5789
    %6672 = vmatpush1.bf16.msra.mxu0 %v5788
    %6673 = vmatprep.subr.bf16.mxu0 %v5781
    %6674 = vmatpush1.bf16.msra.mxu0 %v5780
    %6675 = vmatprep.subr.bf16.mxu0 %v5773
    %6676 = vmatpush1.bf16.msra.mxu0 %v5772
    %6677 = vmatprep.subr.bf16.mxu0 %v5765
    %6678 = vmatpush1.bf16.msra.mxu0 %v5764
    %6679 = vmatprep.subr.bf16.mxu0 %v5757
    %6680 = vmatpush1.bf16.msra.mxu0 %v5756
    %6681 = vmatprep.subr.bf16.mxu0 %v5749
    %6682 = vmatpush1.bf16.msra.mxu0 %v5748
    %6683 = vmatprep.subr.bf16.mxu0 %v5741
    %6684 = vmatpush1.bf16.msra.mxu0 %v5740
    %6685 = vmatprep.subr.bf16.mxu0 %v5733
    %6686 = vmatpush1.bf16.msra.mxu0 %v5732
    %6687 = vmatprep.subr.bf16.mxu0 %v5853
    %6688 = vmatpush2.bf16.msra.mxu0 %v5852
    %6689 = vmatprep.subr.bf16.mxu0 %v5845
    %6690 = vmatpush2.bf16.msra.mxu0 %v5844
    %6691 = vmatprep.subr.bf16.mxu0 %v5837
    %6692 = vmatpush2.bf16.msra.mxu0 %v5836
    %6693 = vmatprep.subr.bf16.mxu0 %v5829
    %6694 = vmatpush2.bf16.msra.mxu0 %v5828
    %6695 = vmatprep.subr.bf16.mxu0 %v5821
    %6696 = vmatpush2.bf16.msra.mxu0 %v5820
    %6697 = vmatprep.subr.bf16.mxu0 %v5813
    %6698 = vmatpush2.bf16.msra.mxu0 %v5812
    %6699 = vmatprep.subr.bf16.mxu0 %v5805
    %6700 = vmatpush2.bf16.msra.mxu0 %v5804
    %6701 = vmatprep.subr.bf16.mxu0 %v5797
    %6702 = vmatpush2.bf16.msra.mxu0 %v5796
    %6703 = vmatprep.mubr.bf16.mxu0 %v3255
    %6704 = vmatmul.mubr.bf16.gmra.mxu0 %v3254
    %v6705 = vpop.f32.mrf.mxu0
    %v6706 = vadd.f32 %v6663, %v6705
    %v6707 = vpop.f32.mrf.mxu0
    %v6708 = vadd.f32 %v6665, %v6707
    %v6709 = vpop.f32.mrf.mxu0
    %v6710 = vadd.f32 %v6667, %v6709
    %v6711 = vpop.f32.mrf.mxu0
    %v6712 = vadd.f32 %v6669, %v6711
    %6713 = vdwg.mxu0
    %6714 = vmatprep.subr.bf16.mxu0 %v5407
    %6715 = vmatpush1.bf16.msra.mxu0 %v5406
    %6716 = vmatprep.subr.bf16.mxu0 %v5399
    %6717 = vmatpush1.bf16.msra.mxu0 %v5398
    %6718 = vmatprep.subr.bf16.mxu0 %v5391
    %6719 = vmatpush1.bf16.msra.mxu0 %v5390
    %6720 = vmatprep.subr.bf16.mxu0 %v5383
    %6721 = vmatpush1.bf16.msra.mxu0 %v5382
    %6722 = vmatprep.subr.bf16.mxu0 %v5375
    %6723 = vmatpush1.bf16.msra.mxu0 %v5374
    %6724 = vmatprep.subr.bf16.mxu0 %v5367
    %6725 = vmatpush1.bf16.msra.mxu0 %v5366
    %6726 = vmatprep.subr.bf16.mxu0 %v5359
    %6727 = vmatpush1.bf16.msra.mxu0 %v5358
    %6728 = vmatprep.subr.bf16.mxu0 %v5351
    %6729 = vmatpush1.bf16.msra.mxu0 %v5350
    %6730 = vmatprep.subr.bf16.mxu0 %v5471
    %6731 = vmatpush2.bf16.msra.mxu0 %v5470
    %6732 = vmatprep.subr.bf16.mxu0 %v5463
    %6733 = vmatpush2.bf16.msra.mxu0 %v5462
    %6734 = vmatprep.subr.bf16.mxu0 %v5455
    %6735 = vmatpush2.bf16.msra.mxu0 %v5454
    %6736 = vmatprep.subr.bf16.mxu0 %v5447
    %6737 = vmatpush2.bf16.msra.mxu0 %v5446
    %6738 = vmatprep.subr.bf16.mxu0 %v5439
    %6739 = vmatpush2.bf16.msra.mxu0 %v5438
    %6740 = vmatprep.subr.bf16.mxu0 %v5431
    %6741 = vmatpush2.bf16.msra.mxu0 %v5430
    %6742 = vmatprep.subr.bf16.mxu0 %v5423
    %6743 = vmatpush2.bf16.msra.mxu0 %v5422
    %6744 = vmatprep.subr.bf16.mxu0 %v5415
    %6745 = vmatpush2.bf16.msra.mxu0 %v5414
    %6746 = vmatprep.mubr.bf16.mxu0 %v3249
    %6747 = vmatmul.mubr.bf16.gmra.mxu0 %v3248
    %v6748 = vpop.f32.mrf.mxu0
    %v6749 = vadd.f32 %v3789, %v6748
    %v6750 = vpop.f32.mrf.mxu0
    %v6751 = vadd.f32 %v3793, %v6750
    %v6752 = vpop.f32.mrf.mxu0
    %v6753 = vadd.f32 %v3789, %v6752
    %v6754 = vpop.f32.mrf.mxu0
    %v6755 = vadd.f32 %v3793, %v6754
    %6756 = vdwg.mxu0
    %6757 = vmatprep.subr.bf16.mxu0 %v5535
    %6758 = vmatpush1.bf16.msra.mxu0 %v5534
    %6759 = vmatprep.subr.bf16.mxu0 %v5527
    %6760 = vmatpush1.bf16.msra.mxu0 %v5526
    %6761 = vmatprep.subr.bf16.mxu0 %v5519
    %6762 = vmatpush1.bf16.msra.mxu0 %v5518
    %6763 = vmatprep.subr.bf16.mxu0 %v5511
    %6764 = vmatpush1.bf16.msra.mxu0 %v5510
    %6765 = vmatprep.subr.bf16.mxu0 %v5503
    %6766 = vmatpush1.bf16.msra.mxu0 %v5502
    %6767 = vmatprep.subr.bf16.mxu0 %v5495
    %6768 = vmatpush1.bf16.msra.mxu0 %v5494
    %6769 = vmatprep.subr.bf16.mxu0 %v5487
    %6770 = vmatpush1.bf16.msra.mxu0 %v5486
    %6771 = vmatprep.subr.bf16.mxu0 %v5479
    %6772 = vmatpush1.bf16.msra.mxu0 %v5478
    %6773 = vmatprep.subr.bf16.mxu0 %v5599
    %6774 = vmatpush2.bf16.msra.mxu0 %v5598
    %6775 = vmatprep.subr.bf16.mxu0 %v5591
    %6776 = vmatpush2.bf16.msra.mxu0 %v5590
    %6777 = vmatprep.subr.bf16.mxu0 %v5583
    %6778 = vmatpush2.bf16.msra.mxu0 %v5582
    %6779 = vmatprep.subr.bf16.mxu0 %v5575
    %6780 = vmatpush2.bf16.msra.mxu0 %v5574
    %6781 = vmatprep.subr.bf16.mxu0 %v5567
    %6782 = vmatpush2.bf16.msra.mxu0 %v5566
    %6783 = vmatprep.subr.bf16.mxu0 %v5559
    %6784 = vmatpush2.bf16.msra.mxu0 %v5558
    %6785 = vmatprep.subr.bf16.mxu0 %v5551
    %6786 = vmatpush2.bf16.msra.mxu0 %v5550
    %6787 = vmatprep.subr.bf16.mxu0 %v5543
    %6788 = vmatpush2.bf16.msra.mxu0 %v5542
    %6789 = vmatprep.mubr.bf16.mxu0 %v3251
    %6790 = vmatmul.mubr.bf16.gmra.mxu0 %v3250
    %v6791 = vpop.f32.mrf.mxu0
    %v6792 = vadd.f32 %v6749, %v6791
    %v6793 = vpop.f32.mrf.mxu0
    %v6794 = vadd.f32 %v6751, %v6793
    %v6795 = vpop.f32.mrf.mxu0
    %v6796 = vadd.f32 %v6753, %v6795
    %v6797 = vpop.f32.mrf.mxu0
    %v6798 = vadd.f32 %v6755, %v6797
    %6799 = vdwg.mxu0
    %6800 = vmatprep.subr.bf16.mxu0 %v5663
    %6801 = vmatpush1.bf16.msra.mxu0 %v5662
    %6802 = vmatprep.subr.bf16.mxu0 %v5655
    %6803 = vmatpush1.bf16.msra.mxu0 %v5654
    %6804 = vmatprep.subr.bf16.mxu0 %v5647
    %6805 = vmatpush1.bf16.msra.mxu0 %v5646
    %6806 = vmatprep.subr.bf16.mxu0 %v5639
    %6807 = vmatpush1.bf16.msra.mxu0 %v5638
    %6808 = vmatprep.subr.bf16.mxu0 %v5631
    %6809 = vmatpush1.bf16.msra.mxu0 %v5630
    %6810 = vmatprep.subr.bf16.mxu0 %v5623
    %6811 = vmatpush1.bf16.msra.mxu0 %v5622
    %6812 = vmatprep.subr.bf16.mxu0 %v5615
    %6813 = vmatpush1.bf16.msra.mxu0 %v5614
    %6814 = vmatprep.subr.bf16.mxu0 %v5607
    %6815 = vmatpush1.bf16.msra.mxu0 %v5606
    %6816 = vmatprep.subr.bf16.mxu0 %v5727
    %6817 = vmatpush2.bf16.msra.mxu0 %v5726
    %6818 = vmatprep.subr.bf16.mxu0 %v5719
    %6819 = vmatpush2.bf16.msra.mxu0 %v5718
    %6820 = vmatprep.subr.bf16.mxu0 %v5711
    %6821 = vmatpush2.bf16.msra.mxu0 %v5710
    %6822 = vmatprep.subr.bf16.mxu0 %v5703
    %6823 = vmatpush2.bf16.msra.mxu0 %v5702
    %6824 = vmatprep.subr.bf16.mxu0 %v5695
    %6825 = vmatpush2.bf16.msra.mxu0 %v5694
    %6826 = vmatprep.subr.bf16.mxu0 %v5687
    %6827 = vmatpush2.bf16.msra.mxu0 %v5686
    %6828 = vmatprep.subr.bf16.mxu0 %v5679
    %6829 = vmatpush2.bf16.msra.mxu0 %v5678
    %6830 = vmatprep.subr.bf16.mxu0 %v5671
    %6831 = vmatpush2.bf16.msra.mxu0 %v5670
    %6832 = vmatprep.mubr.bf16.mxu0 %v3253
    %6833 = vmatmul.mubr.bf16.gmra.mxu0 %v3252
    %v6834 = vpop.f32.mrf.mxu0
    %v6835 = vadd.f32 %v6792, %v6834
    %v6836 = vpop.f32.mrf.mxu0
    %v6837 = vadd.f32 %v6794, %v6836
    %v6838 = vpop.f32.mrf.mxu0
    %v6839 = vadd.f32 %v6796, %v6838
    %v6840 = vpop.f32.mrf.mxu0
    %v6841 = vadd.f32 %v6798, %v6840
    %6842 = vdwg.mxu0
    %6843 = vmatprep.subr.bf16.mxu0 %v5791
    %6844 = vmatpush1.bf16.msra.mxu0 %v5790
    %6845 = vmatprep.subr.bf16.mxu0 %v5783
    %6846 = vmatpush1.bf16.msra.mxu0 %v5782
    %6847 = vmatprep.subr.bf16.mxu0 %v5775
    %6848 = vmatpush1.bf16.msra.mxu0 %v5774
    %6849 = vmatprep.subr.bf16.mxu0 %v5767
    %6850 = vmatpush1.bf16.msra.mxu0 %v5766
    %6851 = vmatprep.subr.bf16.mxu0 %v5759
    %6852 = vmatpush1.bf16.msra.mxu0 %v5758
    %6853 = vmatprep.subr.bf16.mxu0 %v5751
    %6854 = vmatpush1.bf16.msra.mxu0 %v5750
    %6855 = vmatprep.subr.bf16.mxu0 %v5743
    %6856 = vmatpush1.bf16.msra.mxu0 %v5742
    %6857 = vmatprep.subr.bf16.mxu0 %v5735
    %6858 = vmatpush1.bf16.msra.mxu0 %v5734
    %6859 = vmatprep.subr.bf16.mxu0 %v5855
    %6860 = vmatpush2.bf16.msra.mxu0 %v5854
    %6861 = vmatprep.subr.bf16.mxu0 %v5847
    %6862 = vmatpush2.bf16.msra.mxu0 %v5846
    %6863 = vmatprep.subr.bf16.mxu0 %v5839
    %6864 = vmatpush2.bf16.msra.mxu0 %v5838
    %6865 = vmatprep.subr.bf16.mxu0 %v5831
    %6866 = vmatpush2.bf16.msra.mxu0 %v5830
    %6867 = vmatprep.subr.bf16.mxu0 %v5823
    %6868 = vmatpush2.bf16.msra.mxu0 %v5822
    %6869 = vmatprep.subr.bf16.mxu0 %v5815
    %6870 = vmatpush2.bf16.msra.mxu0 %v5814
    %6871 = vmatprep.subr.bf16.mxu0 %v5807
    %6872 = vmatpush2.bf16.msra.mxu0 %v5806
    %6873 = vmatprep.subr.bf16.mxu0 %v5799
    %6874 = vmatpush2.bf16.msra.mxu0 %v5798
    %6875 = vmatprep.mubr.bf16.mxu0 %v3255
    %6876 = vmatmul.mubr.bf16.gmra.mxu0 %v3254
    %v6877 = vpop.f32.mrf.mxu0
    %v6878 = vadd.f32 %v6835, %v6877
    %v6879 = vpop.f32.mrf.mxu0
    %v6880 = vadd.f32 %v6837, %v6879
    %v6881 = vpop.f32.mrf.mxu0
    %v6882 = vadd.f32 %v6839, %v6881
    %v6883 = vpop.f32.mrf.mxu0
    %v6884 = vadd.f32 %v6841, %v6883
    %6885 = vdwg.mxu0
    %6886 = vmatprep.subr.bf16.mxu0 %v5409
    %6887 = vmatpush1.bf16.msra.mxu0 %v5408
    %6888 = vmatprep.subr.bf16.mxu0 %v5401
    %6889 = vmatpush1.bf16.msra.mxu0 %v5400
    %6890 = vmatprep.subr.bf16.mxu0 %v5393
    %6891 = vmatpush1.bf16.msra.mxu0 %v5392
    %6892 = vmatprep.subr.bf16.mxu0 %v5385
    %6893 = vmatpush1.bf16.msra.mxu0 %v5384
    %6894 = vmatprep.subr.bf16.mxu0 %v5377
    %6895 = vmatpush1.bf16.msra.mxu0 %v5376
    %6896 = vmatprep.subr.bf16.mxu0 %v5369
    %6897 = vmatpush1.bf16.msra.mxu0 %v5368
    %6898 = vmatprep.subr.bf16.mxu0 %v5361
    %6899 = vmatpush1.bf16.msra.mxu0 %v5360
    %6900 = vmatprep.subr.bf16.mxu0 %v5353
    %6901 = vmatpush1.bf16.msra.mxu0 %v5352
    %6902 = vmatprep.subr.bf16.mxu0 %v5473
    %6903 = vmatpush2.bf16.msra.mxu0 %v5472
    %6904 = vmatprep.subr.bf16.mxu0 %v5465
    %6905 = vmatpush2.bf16.msra.mxu0 %v5464
    %6906 = vmatprep.subr.bf16.mxu0 %v5457
    %6907 = vmatpush2.bf16.msra.mxu0 %v5456
    %6908 = vmatprep.subr.bf16.mxu0 %v5449
    %6909 = vmatpush2.bf16.msra.mxu0 %v5448
    %6910 = vmatprep.subr.bf16.mxu0 %v5441
    %6911 = vmatpush2.bf16.msra.mxu0 %v5440
    %6912 = vmatprep.subr.bf16.mxu0 %v5433
    %6913 = vmatpush2.bf16.msra.mxu0 %v5432
    %6914 = vmatprep.subr.bf16.mxu0 %v5425
    %6915 = vmatpush2.bf16.msra.mxu0 %v5424
    %6916 = vmatprep.subr.bf16.mxu0 %v5417
    %6917 = vmatpush2.bf16.msra.mxu0 %v5416
    %6918 = vmatprep.mubr.bf16.mxu0 %v3249
    %6919 = vmatmul.mubr.bf16.gmra.mxu0 %v3248
    %v6920 = vpop.f32.mrf.mxu0
    %v6921 = vadd.f32 %v3797, %v6920
    %v6922 = vpop.f32.mrf.mxu0
    %v6923 = vadd.f32 %v3801, %v6922
    %v6924 = vpop.f32.mrf.mxu0
    %v6925 = vadd.f32 %v3797, %v6924
    %v6926 = vpop.f32.mrf.mxu0
    %v6927 = vadd.f32 %v3801, %v6926
    %6928 = vdwg.mxu0
    %6929 = vmatprep.subr.bf16.mxu0 %v5537
    %6930 = vmatpush1.bf16.msra.mxu0 %v5536
    %6931 = vmatprep.subr.bf16.mxu0 %v5529
    %6932 = vmatpush1.bf16.msra.mxu0 %v5528
    %6933 = vmatprep.subr.bf16.mxu0 %v5521
    %6934 = vmatpush1.bf16.msra.mxu0 %v5520
    %6935 = vmatprep.subr.bf16.mxu0 %v5513
    %6936 = vmatpush1.bf16.msra.mxu0 %v5512
    %6937 = vmatprep.subr.bf16.mxu0 %v5505
    %6938 = vmatpush1.bf16.msra.mxu0 %v5504
    %6939 = vmatprep.subr.bf16.mxu0 %v5497
    %6940 = vmatpush1.bf16.msra.mxu0 %v5496
    %6941 = vmatprep.subr.bf16.mxu0 %v5489
    %6942 = vmatpush1.bf16.msra.mxu0 %v5488
    %6943 = vmatprep.subr.bf16.mxu0 %v5481
    %6944 = vmatpush1.bf16.msra.mxu0 %v5480
    %6945 = vmatprep.subr.bf16.mxu0 %v5601
    %6946 = vmatpush2.bf16.msra.mxu0 %v5600
    %6947 = vmatprep.subr.bf16.mxu0 %v5593
    %6948 = vmatpush2.bf16.msra.mxu0 %v5592
    %6949 = vmatprep.subr.bf16.mxu0 %v5585
    %6950 = vmatpush2.bf16.msra.mxu0 %v5584
    %6951 = vmatprep.subr.bf16.mxu0 %v5577
    %6952 = vmatpush2.bf16.msra.mxu0 %v5576
    %6953 = vmatprep.subr.bf16.mxu0 %v5569
    %6954 = vmatpush2.bf16.msra.mxu0 %v5568
    %6955 = vmatprep.subr.bf16.mxu0 %v5561
    %6956 = vmatpush2.bf16.msra.mxu0 %v5560
    %6957 = vmatprep.subr.bf16.mxu0 %v5553
    %6958 = vmatpush2.bf16.msra.mxu0 %v5552
    %6959 = vmatprep.subr.bf16.mxu0 %v5545
    %6960 = vmatpush2.bf16.msra.mxu0 %v5544
    %6961 = vmatprep.mubr.bf16.mxu0 %v3251
    %6962 = vmatmul.mubr.bf16.gmra.mxu0 %v3250
    %v6963 = vpop.f32.mrf.mxu0
    %v6964 = vadd.f32 %v6921, %v6963
    %v6965 = vpop.f32.mrf.mxu0
    %v6966 = vadd.f32 %v6923, %v6965
    %v6967 = vpop.f32.mrf.mxu0
    %v6968 = vadd.f32 %v6925, %v6967
    %v6969 = vpop.f32.mrf.mxu0
    %v6970 = vadd.f32 %v6927, %v6969
    %6971 = vdwg.mxu0
    %6972 = vmatprep.subr.bf16.mxu0 %v5665
    %6973 = vmatpush1.bf16.msra.mxu0 %v5664
    %6974 = vmatprep.subr.bf16.mxu0 %v5657
    %6975 = vmatpush1.bf16.msra.mxu0 %v5656
    %6976 = vmatprep.subr.bf16.mxu0 %v5649
    %6977 = vmatpush1.bf16.msra.mxu0 %v5648
    %6978 = vmatprep.subr.bf16.mxu0 %v5641
    %6979 = vmatpush1.bf16.msra.mxu0 %v5640
    %6980 = vmatprep.subr.bf16.mxu0 %v5633
    %6981 = vmatpush1.bf16.msra.mxu0 %v5632
    %6982 = vmatprep.subr.bf16.mxu0 %v5625
    %6983 = vmatpush1.bf16.msra.mxu0 %v5624
    %6984 = vmatprep.subr.bf16.mxu0 %v5617
    %6985 = vmatpush1.bf16.msra.mxu0 %v5616
    %6986 = vmatprep.subr.bf16.mxu0 %v5609
    %6987 = vmatpush1.bf16.msra.mxu0 %v5608
    %6988 = vmatprep.subr.bf16.mxu0 %v5729
    %6989 = vmatpush2.bf16.msra.mxu0 %v5728
    %6990 = vmatprep.subr.bf16.mxu0 %v5721
    %6991 = vmatpush2.bf16.msra.mxu0 %v5720
    %6992 = vmatprep.subr.bf16.mxu0 %v5713
    %6993 = vmatpush2.bf16.msra.mxu0 %v5712
    %6994 = vmatprep.subr.bf16.mxu0 %v5705
    %6995 = vmatpush2.bf16.msra.mxu0 %v5704
    %6996 = vmatprep.subr.bf16.mxu0 %v5697
    %6997 = vmatpush2.bf16.msra.mxu0 %v5696
    %6998 = vmatprep.subr.bf16.mxu0 %v5689
    %6999 = vmatpush2.bf16.msra.mxu0 %v5688
    %7000 = vmatprep.subr.bf16.mxu0 %v5681
    %7001 = vmatpush2.bf16.msra.mxu0 %v5680
    %7002 = vmatprep.subr.bf16.mxu0 %v5673
    %7003 = vmatpush2.bf16.msra.mxu0 %v5672
    %7004 = vmatprep.mubr.bf16.mxu0 %v3253
    %7005 = vmatmul.mubr.bf16.gmra.mxu0 %v3252
    %v7006 = vpop.f32.mrf.mxu0
    %v7007 = vadd.f32 %v6964, %v7006
    %v7008 = vpop.f32.mrf.mxu0
    %v7009 = vadd.f32 %v6966, %v7008
    %v7010 = vpop.f32.mrf.mxu0
    %v7011 = vadd.f32 %v6968, %v7010
    %v7012 = vpop.f32.mrf.mxu0
    %v7013 = vadd.f32 %v6970, %v7012
    %7014 = vdwg.mxu0
    %7015 = vmatprep.subr.bf16.mxu0 %v5793
    %7016 = vmatpush1.bf16.msra.mxu0 %v5792
    %7017 = vmatprep.subr.bf16.mxu0 %v5785
    %7018 = vmatpush1.bf16.msra.mxu0 %v5784
    %7019 = vmatprep.subr.bf16.mxu0 %v5777
    %7020 = vmatpush1.bf16.msra.mxu0 %v5776
    %7021 = vmatprep.subr.bf16.mxu0 %v5769
    %7022 = vmatpush1.bf16.msra.mxu0 %v5768
    %7023 = vmatprep.subr.bf16.mxu0 %v5761
    %7024 = vmatpush1.bf16.msra.mxu0 %v5760
    %7025 = vmatprep.subr.bf16.mxu0 %v5753
    %7026 = vmatpush1.bf16.msra.mxu0 %v5752
    %7027 = vmatprep.subr.bf16.mxu0 %v5745
    %7028 = vmatpush1.bf16.msra.mxu0 %v5744
    %7029 = vmatprep.subr.bf16.mxu0 %v5737
    %7030 = vmatpush1.bf16.msra.mxu0 %v5736
    %7031 = vmatprep.subr.bf16.mxu0 %v5857
    %7032 = vmatpush2.bf16.msra.mxu0 %v5856
    %7033 = vmatprep.subr.bf16.mxu0 %v5849
    %7034 = vmatpush2.bf16.msra.mxu0 %v5848
    %7035 = vmatprep.subr.bf16.mxu0 %v5841
    %7036 = vmatpush2.bf16.msra.mxu0 %v5840
    %7037 = vmatprep.subr.bf16.mxu0 %v5833
    %7038 = vmatpush2.bf16.msra.mxu0 %v5832
    %7039 = vmatprep.subr.bf16.mxu0 %v5825
    %7040 = vmatpush2.bf16.msra.mxu0 %v5824
    %7041 = vmatprep.subr.bf16.mxu0 %v5817
    %7042 = vmatpush2.bf16.msra.mxu0 %v5816
    %7043 = vmatprep.subr.bf16.mxu0 %v5809
    %7044 = vmatpush2.bf16.msra.mxu0 %v5808
    %7045 = vmatprep.subr.bf16.mxu0 %v5801
    %7046 = vmatpush2.bf16.msra.mxu0 %v5800
    %7047 = vmatprep.mubr.bf16.mxu0 %v3255
    %7048 = vmatmul.mubr.bf16.gmra.mxu0 %v3254
    %v7049 = vpop.f32.mrf.mxu0
    %v7050 = vadd.f32 %v7007, %v7049
    %v7051 = vpop.f32.mrf.mxu0
    %v7052 = vadd.f32 %v7009, %v7051
    %v7053 = vpop.f32.mrf.mxu0
    %v7054 = vadd.f32 %v7011, %v7053
    %v7055 = vpop.f32.mrf.mxu0
    %v7056 = vadd.f32 %v7013, %v7055
    %7057 = vdwg.mxu0
    %v7058 = vmax.f32 %v6534, 0.0
    %v7059 = vmax.f32 %v6536, 0.0
    %v7060 = vmax.f32 %v6706, 0.0
    %v7061 = vmax.f32 %v6708, 0.0
    %v7062 = vmax.f32 %v6878, 0.0
    %v7063 = vmax.f32 %v6880, 0.0
    %v7064 = vmax.f32 %v7050, 0.0
    %v7065 = vmax.f32 %v7052, 0.0
    %v7066 = vmax.f32 %v6538, 0.0
    %v7067 = vmax.f32 %v6540, 0.0
    %v7068 = vmax.f32 %v6710, 0.0
    %v7069 = vmax.f32 %v6712, 0.0
    %v7070 = vmax.f32 %v6882, 0.0
    %v7071 = vmax.f32 %v6884, 0.0
    %v7072 = vmax.f32 %v7054, 0.0
    %v7073 = vmax.f32 %v7056, 0.0
    %v7074 = vpack.c.bf16 %v7066, %v7058
    %v7075 = vpack.c.bf16 %v7067, %v7059
    %v7076 = vpack.c.bf16 %v7068, %v7060
    %v7077 = vpack.c.bf16 %v7069, %v7061
    %v7078 = vpack.c.bf16 %v7070, %v7062
    %v7079 = vpack.c.bf16 %v7071, %v7063
    %v7080 = vpack.c.bf16 %v7072, %v7064
    %v7081 = vpack.c.bf16 %v7073, %v7065
    %v7082 = vld [vmem:[#allocation9] sm:$0xf]
    %v7083 = vld [vmem:[#allocation9 + $0x4] sm:$0xf]
    %v7084 = vld [vmem:[#allocation9 + $0x8] sm:$0xf]
    %v7085 = vld [vmem:[#allocation9 + $0xc] sm:$0xf]
    %v7086 = vld [vmem:[#allocation9 + $0x10] sm:$0xf]
    %v7087 = vld [vmem:[#allocation9 + $0x14] sm:$0xf]
    %v7088 = vld [vmem:[#allocation9 + $0x18] sm:$0xf]
    %v7089 = vld [vmem:[#allocation9 + $0x1c] sm:$0xf]
    %v7090 = vld [vmem:[#allocation9 + $0x20] sm:$0xf]
    %v7091 = vld [vmem:[#allocation9 + $0x24] sm:$0xf]
    %v7092 = vld [vmem:[#allocation9 + $0x28] sm:$0xf]
    %v7093 = vld [vmem:[#allocation9 + $0x2c] sm:$0xf]
    %v7094 = vld [vmem:[#allocation9 + $0x30] sm:$0xf]
    %v7095 = vld [vmem:[#allocation9 + $0x34] sm:$0xf]
    %v7096 = vld [vmem:[#allocation9 + $0x38] sm:$0xf]
    %v7097 = vld [vmem:[#allocation9 + $0x3c] sm:$0xf]
    %v7098 = vld [vmem:[#allocation9 + $0x40] sm:$0xf]
    %v7099 = vld [vmem:[#allocation9 + $0x44] sm:$0xf]
    %v7100 = vld [vmem:[#allocation9 + $0x48] sm:$0xf]
    %v7101 = vld [vmem:[#allocation9 + $0x4c] sm:$0xf]
    %v7102 = vld [vmem:[#allocation9 + $0x50] sm:$0xf]
    %v7103 = vld [vmem:[#allocation9 + $0x54] sm:$0xf]
    %v7104 = vld [vmem:[#allocation9 + $0x58] sm:$0xf]
    %v7105 = vld [vmem:[#allocation9 + $0x5c] sm:$0xf]
    %v7106 = vld [vmem:[#allocation9 + $0x60] sm:$0xf]
    %v7107 = vld [vmem:[#allocation9 + $0x64] sm:$0xf]
    %v7108 = vld [vmem:[#allocation9 + $0x68] sm:$0xf]
    %v7109 = vld [vmem:[#allocation9 + $0x6c] sm:$0xf]
    %v7110 = vld [vmem:[#allocation9 + $0x70] sm:$0xf]
    %v7111 = vld [vmem:[#allocation9 + $0x74] sm:$0xf]
    %v7112 = vld [vmem:[#allocation9 + $0x78] sm:$0xf]
    %v7113 = vld [vmem:[#allocation9 + $0x7c] sm:$0xf]
    %v7114 = vld [vmem:[#allocation9 + $0x80] sm:$0xf]
    %v7115 = vld [vmem:[#allocation9 + $0x84] sm:$0xf]
    %v7116 = vld [vmem:[#allocation9 + $0x88] sm:$0xf]
    %v7117 = vld [vmem:[#allocation9 + $0x8c] sm:$0xf]
    %v7118 = vld [vmem:[#allocation9 + $0x90] sm:$0xf]
    %v7119 = vld [vmem:[#allocation9 + $0x94] sm:$0xf]
    %v7120 = vld [vmem:[#allocation9 + $0x98] sm:$0xf]
    %v7121 = vld [vmem:[#allocation9 + $0x9c] sm:$0xf]
    %v7122 = vld [vmem:[#allocation9 + $0xa0] sm:$0xf]
    %v7123 = vld [vmem:[#allocation9 + $0xa4] sm:$0xf]
    %v7124 = vld [vmem:[#allocation9 + $0xa8] sm:$0xf]
    %v7125 = vld [vmem:[#allocation9 + $0xac] sm:$0xf]
    %v7126 = vld [vmem:[#allocation9 + $0xb0] sm:$0xf]
    %v7127 = vld [vmem:[#allocation9 + $0xb4] sm:$0xf]
    %v7128 = vld [vmem:[#allocation9 + $0xb8] sm:$0xf]
    %v7129 = vld [vmem:[#allocation9 + $0xbc] sm:$0xf]
    %v7130 = vld [vmem:[#allocation9 + $0xc0] sm:$0xf]
    %v7131 = vld [vmem:[#allocation9 + $0xc4] sm:$0xf]
    %v7132 = vld [vmem:[#allocation9 + $0xc8] sm:$0xf]
    %v7133 = vld [vmem:[#allocation9 + $0xcc] sm:$0xf]
    %v7134 = vld [vmem:[#allocation9 + $0xd0] sm:$0xf]
    %v7135 = vld [vmem:[#allocation9 + $0xd4] sm:$0xf]
    %v7136 = vld [vmem:[#allocation9 + $0xd8] sm:$0xf]
    %v7137 = vld [vmem:[#allocation9 + $0xdc] sm:$0xf]
    %v7138 = vld [vmem:[#allocation9 + $0xe0] sm:$0xf]
    %v7139 = vld [vmem:[#allocation9 + $0xe4] sm:$0xf]
    %v7140 = vld [vmem:[#allocation9 + $0xe8] sm:$0xf]
    %v7141 = vld [vmem:[#allocation9 + $0xec] sm:$0xf]
    %v7142 = vld [vmem:[#allocation9 + $0xf0] sm:$0xf]
    %v7143 = vld [vmem:[#allocation9 + $0xf4] sm:$0xf]
    %v7144 = vld [vmem:[#allocation9 + $0xf8] sm:$0xf]
    %v7145 = vld [vmem:[#allocation9 + $0xfc] sm:$0xf]
    %v7146 = vld [vmem:[#allocation9 + $0x100] sm:$0xf]
    %v7147 = vld [vmem:[#allocation9 + $0x104] sm:$0xf]
    %v7148 = vld [vmem:[#allocation9 + $0x108] sm:$0xf]
    %v7149 = vld [vmem:[#allocation9 + $0x10c] sm:$0xf]
    %v7150 = vld [vmem:[#allocation9 + $0x110] sm:$0xf]
    %v7151 = vld [vmem:[#allocation9 + $0x114] sm:$0xf]
    %v7152 = vld [vmem:[#allocation9 + $0x118] sm:$0xf]
    %v7153 = vld [vmem:[#allocation9 + $0x11c] sm:$0xf]
    %v7154 = vld [vmem:[#allocation9 + $0x120] sm:$0xf]
    %v7155 = vld [vmem:[#allocation9 + $0x124] sm:$0xf]
    %v7156 = vld [vmem:[#allocation9 + $0x128] sm:$0xf]
    %v7157 = vld [vmem:[#allocation9 + $0x12c] sm:$0xf]
    %v7158 = vld [vmem:[#allocation9 + $0x130] sm:$0xf]
    %v7159 = vld [vmem:[#allocation9 + $0x134] sm:$0xf]
    %v7160 = vld [vmem:[#allocation9 + $0x138] sm:$0xf]
    %v7161 = vld [vmem:[#allocation9 + $0x13c] sm:$0xf]
    %v7162 = vld [vmem:[#allocation9 + $0x140] sm:$0xf]
    %v7163 = vld [vmem:[#allocation9 + $0x144] sm:$0xf]
    %v7164 = vld [vmem:[#allocation9 + $0x148] sm:$0xf]
    %v7165 = vld [vmem:[#allocation9 + $0x14c] sm:$0xf]
    %v7166 = vld [vmem:[#allocation9 + $0x150] sm:$0xf]
    %v7167 = vld [vmem:[#allocation9 + $0x154] sm:$0xf]
    %v7168 = vld [vmem:[#allocation9 + $0x158] sm:$0xf]
    %v7169 = vld [vmem:[#allocation9 + $0x15c] sm:$0xf]
    %v7170 = vld [vmem:[#allocation9 + $0x160] sm:$0xf]
    %v7171 = vld [vmem:[#allocation9 + $0x164] sm:$0xf]
    %v7172 = vld [vmem:[#allocation9 + $0x168] sm:$0xf]
    %v7173 = vld [vmem:[#allocation9 + $0x16c] sm:$0xf]
    %v7174 = vld [vmem:[#allocation9 + $0x170] sm:$0xf]
    %v7175 = vld [vmem:[#allocation9 + $0x174] sm:$0xf]
    %v7176 = vld [vmem:[#allocation9 + $0x178] sm:$0xf]
    %v7177 = vld [vmem:[#allocation9 + $0x17c] sm:$0xf]
    %v7178 = vld [vmem:[#allocation9 + $0x180] sm:$0xf]
    %v7179 = vld [vmem:[#allocation9 + $0x184] sm:$0xf]
    %v7180 = vld [vmem:[#allocation9 + $0x188] sm:$0xf]
    %v7181 = vld [vmem:[#allocation9 + $0x18c] sm:$0xf]
    %v7182 = vld [vmem:[#allocation9 + $0x190] sm:$0xf]
    %v7183 = vld [vmem:[#allocation9 + $0x194] sm:$0xf]
    %v7184 = vld [vmem:[#allocation9 + $0x198] sm:$0xf]
    %v7185 = vld [vmem:[#allocation9 + $0x19c] sm:$0xf]
    %v7186 = vld [vmem:[#allocation9 + $0x1a0] sm:$0xf]
    %v7187 = vld [vmem:[#allocation9 + $0x1a4] sm:$0xf]
    %v7188 = vld [vmem:[#allocation9 + $0x1a8] sm:$0xf]
    %v7189 = vld [vmem:[#allocation9 + $0x1ac] sm:$0xf]
    %v7190 = vld [vmem:[#allocation9 + $0x1b0] sm:$0xf]
    %v7191 = vld [vmem:[#allocation9 + $0x1b4] sm:$0xf]
    %v7192 = vld [vmem:[#allocation9 + $0x1b8] sm:$0xf]
    %v7193 = vld [vmem:[#allocation9 + $0x1bc] sm:$0xf]
    %v7194 = vld [vmem:[#allocation9 + $0x1c0] sm:$0xf]
    %v7195 = vld [vmem:[#allocation9 + $0x1c4] sm:$0xf]
    %v7196 = vld [vmem:[#allocation9 + $0x1c8] sm:$0xf]
    %v7197 = vld [vmem:[#allocation9 + $0x1cc] sm:$0xf]
    %v7198 = vld [vmem:[#allocation9 + $0x1d0] sm:$0xf]
    %v7199 = vld [vmem:[#allocation9 + $0x1d4] sm:$0xf]
    %v7200 = vld [vmem:[#allocation9 + $0x1d8] sm:$0xf]
    %v7201 = vld [vmem:[#allocation9 + $0x1dc] sm:$0xf]
    %v7202 = vld [vmem:[#allocation9 + $0x1e0] sm:$0xf]
    %v7203 = vld [vmem:[#allocation9 + $0x1e4] sm:$0xf]
    %v7204 = vld [vmem:[#allocation9 + $0x1e8] sm:$0xf]
    %v7205 = vld [vmem:[#allocation9 + $0x1ec] sm:$0xf]
    %v7206 = vld [vmem:[#allocation9 + $0x1f0] sm:$0xf]
    %v7207 = vld [vmem:[#allocation9 + $0x1f4] sm:$0xf]
    %v7208 = vld [vmem:[#allocation9 + $0x1f8] sm:$0xf]
    %v7209 = vld [vmem:[#allocation9 + $0x1fc] sm:$0xf]
    %v7210 = vld [vmem:[#allocation10] sm:$0x1]
    %v7212 = vlaneseq
    %v7213 = vshrl.u32 %v7212, 7
    %v7214 = vsub.s32 0, %v7213
    %v7215 = vrot.slane %v7210, %v7214
    %v7345 = vunpack.c.l.b16 %v7082
    %v7346 = vunpack.c.l.b16 %v7083
    %v7347 = vunpack.c.l.b16 %v7084
    %v7348 = vunpack.c.l.b16 %v7085
    %v7349 = vunpack.c.l.b16 %v7086
    %v7350 = vunpack.c.l.b16 %v7087
    %v7351 = vunpack.c.l.b16 %v7088
    %v7352 = vunpack.c.l.b16 %v7089
    %v7353 = vunpack.c.l.b16 %v7090
    %v7354 = vunpack.c.l.b16 %v7091
    %v7355 = vunpack.c.l.b16 %v7092
    %v7356 = vunpack.c.l.b16 %v7093
    %v7357 = vunpack.c.l.b16 %v7094
    %v7358 = vunpack.c.l.b16 %v7095
    %v7359 = vunpack.c.l.b16 %v7096
    %v7360 = vunpack.c.l.b16 %v7097
    %v7361 = vunpack.c.l.b16 %v7098
    %v7362 = vunpack.c.l.b16 %v7099
    %v7363 = vunpack.c.l.b16 %v7100
    %v7364 = vunpack.c.l.b16 %v7101
    %v7365 = vunpack.c.l.b16 %v7102
    %v7366 = vunpack.c.l.b16 %v7103
    %v7367 = vunpack.c.l.b16 %v7104
    %v7368 = vunpack.c.l.b16 %v7105
    %v7369 = vunpack.c.l.b16 %v7106
    %v7370 = vunpack.c.l.b16 %v7107
    %v7371 = vunpack.c.l.b16 %v7108
    %v7372 = vunpack.c.l.b16 %v7109
    %v7373 = vunpack.c.l.b16 %v7110
    %v7374 = vunpack.c.l.b16 %v7111
    %v7375 = vunpack.c.l.b16 %v7112
    %v7376 = vunpack.c.l.b16 %v7113
    %v7377 = vunpack.c.l.b16 %v7114
    %v7378 = vunpack.c.l.b16 %v7115
    %v7379 = vunpack.c.l.b16 %v7116
    %v7380 = vunpack.c.l.b16 %v7117
    %v7381 = vunpack.c.l.b16 %v7118
    %v7382 = vunpack.c.l.b16 %v7119
    %v7383 = vunpack.c.l.b16 %v7120
    %v7384 = vunpack.c.l.b16 %v7121
    %v7385 = vunpack.c.l.b16 %v7122
    %v7386 = vunpack.c.l.b16 %v7123
    %v7387 = vunpack.c.l.b16 %v7124
    %v7388 = vunpack.c.l.b16 %v7125
    %v7389 = vunpack.c.l.b16 %v7126
    %v7390 = vunpack.c.l.b16 %v7127
    %v7391 = vunpack.c.l.b16 %v7128
    %v7392 = vunpack.c.l.b16 %v7129
    %v7393 = vunpack.c.l.b16 %v7130
    %v7394 = vunpack.c.l.b16 %v7131
    %v7395 = vunpack.c.l.b16 %v7132
    %v7396 = vunpack.c.l.b16 %v7133
    %v7397 = vunpack.c.l.b16 %v7134
    %v7398 = vunpack.c.l.b16 %v7135
    %v7399 = vunpack.c.l.b16 %v7136
    %v7400 = vunpack.c.l.b16 %v7137
    %v7401 = vunpack.c.l.b16 %v7138
    %v7402 = vunpack.c.l.b16 %v7139
    %v7403 = vunpack.c.l.b16 %v7140
    %v7404 = vunpack.c.l.b16 %v7141
    %v7405 = vunpack.c.l.b16 %v7142
    %v7406 = vunpack.c.l.b16 %v7143
    %v7407 = vunpack.c.l.b16 %v7144
    %v7408 = vunpack.c.l.b16 %v7145
    %v7409 = vunpack.c.l.b16 %v7146
    %v7410 = vunpack.c.l.b16 %v7147
    %v7411 = vunpack.c.l.b16 %v7148
    %v7412 = vunpack.c.l.b16 %v7149
    %v7413 = vunpack.c.l.b16 %v7150
    %v7414 = vunpack.c.l.b16 %v7151
    %v7415 = vunpack.c.l.b16 %v7152
    %v7416 = vunpack.c.l.b16 %v7153
    %v7417 = vunpack.c.l.b16 %v7154
    %v7418 = vunpack.c.l.b16 %v7155
    %v7419 = vunpack.c.l.b16 %v7156
    %v7420 = vunpack.c.l.b16 %v7157
    %v7421 = vunpack.c.l.b16 %v7158
    %v7422 = vunpack.c.l.b16 %v7159
    %v7423 = vunpack.c.l.b16 %v7160
    %v7424 = vunpack.c.l.b16 %v7161
    %v7425 = vunpack.c.l.b16 %v7162
    %v7426 = vunpack.c.l.b16 %v7163
    %v7427 = vunpack.c.l.b16 %v7164
    %v7428 = vunpack.c.l.b16 %v7165
    %v7429 = vunpack.c.l.b16 %v7166
    %v7430 = vunpack.c.l.b16 %v7167
    %v7431 = vunpack.c.l.b16 %v7168
    %v7432 = vunpack.c.l.b16 %v7169
    %v7433 = vunpack.c.l.b16 %v7170
    %v7434 = vunpack.c.l.b16 %v7171
    %v7435 = vunpack.c.l.b16 %v7172
    %v7436 = vunpack.c.l.b16 %v7173
    %v7437 = vunpack.c.l.b16 %v7174
    %v7438 = vunpack.c.l.b16 %v7175
    %v7439 = vunpack.c.l.b16 %v7176
    %v7440 = vunpack.c.l.b16 %v7177
    %v7441 = vunpack.c.l.b16 %v7178
    %v7442 = vunpack.c.l.b16 %v7179
    %v7443 = vunpack.c.l.b16 %v7180
    %v7444 = vunpack.c.l.b16 %v7181
    %v7445 = vunpack.c.l.b16 %v7182
    %v7446 = vunpack.c.l.b16 %v7183
    %v7447 = vunpack.c.l.b16 %v7184
    %v7448 = vunpack.c.l.b16 %v7185
    %v7449 = vunpack.c.l.b16 %v7186
    %v7450 = vunpack.c.l.b16 %v7187
    %v7451 = vunpack.c.l.b16 %v7188
    %v7452 = vunpack.c.l.b16 %v7189
    %v7453 = vunpack.c.l.b16 %v7190
    %v7454 = vunpack.c.l.b16 %v7191
    %v7455 = vunpack.c.l.b16 %v7192
    %v7456 = vunpack.c.l.b16 %v7193
    %v7457 = vunpack.c.l.b16 %v7194
    %v7458 = vunpack.c.l.b16 %v7195
    %v7459 = vunpack.c.l.b16 %v7196
    %v7460 = vunpack.c.l.b16 %v7197
    %v7461 = vunpack.c.l.b16 %v7198
    %v7462 = vunpack.c.l.b16 %v7199
    %v7463 = vunpack.c.l.b16 %v7200
    %v7464 = vunpack.c.l.b16 %v7201
    %v7465 = vunpack.c.l.b16 %v7202
    %v7466 = vunpack.c.l.b16 %v7203
    %v7467 = vunpack.c.l.b16 %v7204
    %v7468 = vunpack.c.l.b16 %v7205
    %v7469 = vunpack.c.l.b16 %v7206
    %v7470 = vunpack.c.l.b16 %v7207
    %v7471 = vunpack.c.l.b16 %v7208
    %v7472 = vunpack.c.l.b16 %v7209
    %v7473 = vpack.c.b16 %v7346, %v7345
    %v7474 = vpack.c.b16 %v7348, %v7347
    %v7475 = vpack.c.b16 %v7350, %v7349
    %v7476 = vpack.c.b16 %v7352, %v7351
    %v7477 = vpack.c.b16 %v7354, %v7353
    %v7478 = vpack.c.b16 %v7356, %v7355
    %v7479 = vpack.c.b16 %v7358, %v7357
    %v7480 = vpack.c.b16 %v7360, %v7359
    %v7481 = vpack.c.b16 %v7362, %v7361
    %v7482 = vpack.c.b16 %v7364, %v7363
    %v7483 = vpack.c.b16 %v7366, %v7365
    %v7484 = vpack.c.b16 %v7368, %v7367
    %v7485 = vpack.c.b16 %v7370, %v7369
    %v7486 = vpack.c.b16 %v7372, %v7371
    %v7487 = vpack.c.b16 %v7374, %v7373
    %v7488 = vpack.c.b16 %v7376, %v7375
    %v7489 = vpack.c.b16 %v7378, %v7377
    %v7490 = vpack.c.b16 %v7380, %v7379
    %v7491 = vpack.c.b16 %v7382, %v7381
    %v7492 = vpack.c.b16 %v7384, %v7383
    %v7493 = vpack.c.b16 %v7386, %v7385
    %v7494 = vpack.c.b16 %v7388, %v7387
    %v7495 = vpack.c.b16 %v7390, %v7389
    %v7496 = vpack.c.b16 %v7392, %v7391
    %v7497 = vpack.c.b16 %v7394, %v7393
    %v7498 = vpack.c.b16 %v7396, %v7395
    %v7499 = vpack.c.b16 %v7398, %v7397
    %v7500 = vpack.c.b16 %v7400, %v7399
    %v7501 = vpack.c.b16 %v7402, %v7401
    %v7502 = vpack.c.b16 %v7404, %v7403
    %v7503 = vpack.c.b16 %v7406, %v7405
    %v7504 = vpack.c.b16 %v7408, %v7407
    %v7505 = vpack.c.b16 %v7410, %v7409
    %v7506 = vpack.c.b16 %v7412, %v7411
    %v7507 = vpack.c.b16 %v7414, %v7413
    %v7508 = vpack.c.b16 %v7416, %v7415
    %v7509 = vpack.c.b16 %v7418, %v7417
    %v7510 = vpack.c.b16 %v7420, %v7419
    %v7511 = vpack.c.b16 %v7422, %v7421
    %v7512 = vpack.c.b16 %v7424, %v7423
    %v7513 = vpack.c.b16 %v7426, %v7425
    %v7514 = vpack.c.b16 %v7428, %v7427
    %v7515 = vpack.c.b16 %v7430, %v7429
    %v7516 = vpack.c.b16 %v7432, %v7431
    %v7517 = vpack.c.b16 %v7434, %v7433
    %v7518 = vpack.c.b16 %v7436, %v7435
    %v7519 = vpack.c.b16 %v7438, %v7437
    %v7520 = vpack.c.b16 %v7440, %v7439
    %v7521 = vpack.c.b16 %v7442, %v7441
    %v7522 = vpack.c.b16 %v7444, %v7443
    %v7523 = vpack.c.b16 %v7446, %v7445
    %v7524 = vpack.c.b16 %v7448, %v7447
    %v7525 = vpack.c.b16 %v7450, %v7449
    %v7526 = vpack.c.b16 %v7452, %v7451
    %v7527 = vpack.c.b16 %v7454, %v7453
    %v7528 = vpack.c.b16 %v7456, %v7455
    %v7529 = vpack.c.b16 %v7458, %v7457
    %v7530 = vpack.c.b16 %v7460, %v7459
    %v7531 = vpack.c.b16 %v7462, %v7461
    %v7532 = vpack.c.b16 %v7464, %v7463
    %v7533 = vpack.c.b16 %v7466, %v7465
    %v7534 = vpack.c.b16 %v7468, %v7467
    %v7535 = vpack.c.b16 %v7470, %v7469
    %v7536 = vpack.c.b16 %v7472, %v7471
    %7601 = vmatprep.subr.bf16.mxu0 0
    %7602 = vmatpush1.bf16.msra.mxu0 %v7480
    %7603 = vmatprep.subr.bf16.mxu0 0
    %7604 = vmatpush1.bf16.msra.mxu0 %v7479
    %7605 = vmatprep.subr.bf16.mxu0 0
    %7606 = vmatpush1.bf16.msra.mxu0 %v7478
    %7607 = vmatprep.subr.bf16.mxu0 0
    %7608 = vmatpush1.bf16.msra.mxu0 %v7477
    %7609 = vmatprep.subr.bf16.mxu0 0
    %7610 = vmatpush1.bf16.msra.mxu0 %v7476
    %7611 = vmatprep.subr.bf16.mxu0 0
    %7612 = vmatpush1.bf16.msra.mxu0 %v7475
    %7613 = vmatprep.subr.bf16.mxu0 0
    %7614 = vmatpush1.bf16.msra.mxu0 %v7474
    %7615 = vmatprep.subr.bf16.mxu0 0
    %7616 = vmatpush1.bf16.msra.mxu0 %v7473
    %7617 = vmatprep.subr.bf16.mxu0 0
    %7618 = vmatpush2.bf16.msra.mxu0 %v7488
    %7619 = vmatprep.subr.bf16.mxu0 0
    %7620 = vmatpush2.bf16.msra.mxu0 %v7487
    %7621 = vmatprep.subr.bf16.mxu0 0
    %7622 = vmatpush2.bf16.msra.mxu0 %v7486
    %7623 = vmatprep.subr.bf16.mxu0 0
    %7624 = vmatpush2.bf16.msra.mxu0 %v7485
    %7625 = vmatprep.subr.bf16.mxu0 0
    %7626 = vmatpush2.bf16.msra.mxu0 %v7484
    %7627 = vmatprep.subr.bf16.mxu0 0
    %7628 = vmatpush2.bf16.msra.mxu0 %v7483
    %7629 = vmatprep.subr.bf16.mxu0 0
    %7630 = vmatpush2.bf16.msra.mxu0 %v7482
    %7631 = vmatprep.subr.bf16.mxu0 0
    %7632 = vmatpush2.bf16.msra.mxu0 %v7481
    %7633 = vmatprep.mubr.bf16.mxu0 %v7075
    %7634 = vmatmul.mubr.bf16.gmra.mxu0 %v7074
    %v7635 = vpop.f32.mrf.mxu0
    %v7636 = vadd.f32 %v7215, %v7635
    %v7637 = vpop.f32.mrf.mxu0
    %v7638 = vpop.f32.mrf.mxu0
    %v7639 = vadd.f32 %v7215, %v7638
    %v7640 = vpop.f32.mrf.mxu0
    %7641 = vdwg.mxu0
    %7642 = vmatprep.subr.bf16.mxu0 0
    %7643 = vmatpush1.bf16.msra.mxu0 %v7496
    %7644 = vmatprep.subr.bf16.mxu0 0
    %7645 = vmatpush1.bf16.msra.mxu0 %v7495
    %7646 = vmatprep.subr.bf16.mxu0 0
    %7647 = vmatpush1.bf16.msra.mxu0 %v7494
    %7648 = vmatprep.subr.bf16.mxu0 0
    %7649 = vmatpush1.bf16.msra.mxu0 %v7493
    %7650 = vmatprep.subr.bf16.mxu0 0
    %7651 = vmatpush1.bf16.msra.mxu0 %v7492
    %7652 = vmatprep.subr.bf16.mxu0 0
    %7653 = vmatpush1.bf16.msra.mxu0 %v7491
    %7654 = vmatprep.subr.bf16.mxu0 0
    %7655 = vmatpush1.bf16.msra.mxu0 %v7490
    %7656 = vmatprep.subr.bf16.mxu0 0
    %7657 = vmatpush1.bf16.msra.mxu0 %v7489
    %7658 = vmatprep.subr.bf16.mxu0 0
    %7659 = vmatpush2.bf16.msra.mxu0 %v7504
    %7660 = vmatprep.subr.bf16.mxu0 0
    %7661 = vmatpush2.bf16.msra.mxu0 %v7503
    %7662 = vmatprep.subr.bf16.mxu0 0
    %7663 = vmatpush2.bf16.msra.mxu0 %v7502
    %7664 = vmatprep.subr.bf16.mxu0 0
    %7665 = vmatpush2.bf16.msra.mxu0 %v7501
    %7666 = vmatprep.subr.bf16.mxu0 0
    %7667 = vmatpush2.bf16.msra.mxu0 %v7500
    %7668 = vmatprep.subr.bf16.mxu0 0
    %7669 = vmatpush2.bf16.msra.mxu0 %v7499
    %7670 = vmatprep.subr.bf16.mxu0 0
    %7671 = vmatpush2.bf16.msra.mxu0 %v7498
    %7672 = vmatprep.subr.bf16.mxu0 0
    %7673 = vmatpush2.bf16.msra.mxu0 %v7497
    %7674 = vmatprep.mubr.bf16.mxu0 %v7077
    %7675 = vmatmul.mubr.bf16.gmra.mxu0 %v7076
    %v7676 = vpop.f32.mrf.mxu0
    %v7677 = vadd.f32 %v7636, %v7676
    %v7678 = vpop.f32.mrf.mxu0
    %v7679 = vpop.f32.mrf.mxu0
    %v7680 = vadd.f32 %v7639, %v7679
    %v7681 = vpop.f32.mrf.mxu0
    %7682 = vdwg.mxu0
    %7683 = vmatprep.subr.bf16.mxu0 0
    %7684 = vmatpush1.bf16.msra.mxu0 %v7512
    %7685 = vmatprep.subr.bf16.mxu0 0
    %7686 = vmatpush1.bf16.msra.mxu0 %v7511
    %7687 = vmatprep.subr.bf16.mxu0 0
    %7688 = vmatpush1.bf16.msra.mxu0 %v7510
    %7689 = vmatprep.subr.bf16.mxu0 0
    %7690 = vmatpush1.bf16.msra.mxu0 %v7509
    %7691 = vmatprep.subr.bf16.mxu0 0
    %7692 = vmatpush1.bf16.msra.mxu0 %v7508
    %7693 = vmatprep.subr.bf16.mxu0 0
    %7694 = vmatpush1.bf16.msra.mxu0 %v7507
    %7695 = vmatprep.subr.bf16.mxu0 0
    %7696 = vmatpush1.bf16.msra.mxu0 %v7506
    %7697 = vmatprep.subr.bf16.mxu0 0
    %7698 = vmatpush1.bf16.msra.mxu0 %v7505
    %7699 = vmatprep.subr.bf16.mxu0 0
    %7700 = vmatpush2.bf16.msra.mxu0 %v7520
    %7701 = vmatprep.subr.bf16.mxu0 0
    %7702 = vmatpush2.bf16.msra.mxu0 %v7519
    %7703 = vmatprep.subr.bf16.mxu0 0
    %7704 = vmatpush2.bf16.msra.mxu0 %v7518
    %7705 = vmatprep.subr.bf16.mxu0 0
    %7706 = vmatpush2.bf16.msra.mxu0 %v7517
    %7707 = vmatprep.subr.bf16.mxu0 0
    %7708 = vmatpush2.bf16.msra.mxu0 %v7516
    %7709 = vmatprep.subr.bf16.mxu0 0
    %7710 = vmatpush2.bf16.msra.mxu0 %v7515
    %7711 = vmatprep.subr.bf16.mxu0 0
    %7712 = vmatpush2.bf16.msra.mxu0 %v7514
    %7713 = vmatprep.subr.bf16.mxu0 0
    %7714 = vmatpush2.bf16.msra.mxu0 %v7513
    %7715 = vmatprep.mubr.bf16.mxu0 %v7079
    %7716 = vmatmul.mubr.bf16.gmra.mxu0 %v7078
    %v7717 = vpop.f32.mrf.mxu0
    %v7718 = vadd.f32 %v7677, %v7717
    %v7719 = vpop.f32.mrf.mxu0
    %v7720 = vpop.f32.mrf.mxu0
    %v7721 = vadd.f32 %v7680, %v7720
    %v7722 = vpop.f32.mrf.mxu0
    %7723 = vdwg.mxu0
    %7724 = vmatprep.subr.bf16.mxu0 0
    %7725 = vmatpush1.bf16.msra.mxu0 %v7528
    %7726 = vmatprep.subr.bf16.mxu0 0
    %7727 = vmatpush1.bf16.msra.mxu0 %v7527
    %7728 = vmatprep.subr.bf16.mxu0 0
    %7729 = vmatpush1.bf16.msra.mxu0 %v7526
    %7730 = vmatprep.subr.bf16.mxu0 0
    %7731 = vmatpush1.bf16.msra.mxu0 %v7525
    %7732 = vmatprep.subr.bf16.mxu0 0
    %7733 = vmatpush1.bf16.msra.mxu0 %v7524
    %7734 = vmatprep.subr.bf16.mxu0 0
    %7735 = vmatpush1.bf16.msra.mxu0 %v7523
    %7736 = vmatprep.subr.bf16.mxu0 0
    %7737 = vmatpush1.bf16.msra.mxu0 %v7522
    %7738 = vmatprep.subr.bf16.mxu0 0
    %7739 = vmatpush1.bf16.msra.mxu0 %v7521
    %7740 = vmatprep.subr.bf16.mxu0 0
    %7741 = vmatpush2.bf16.msra.mxu0 %v7536
    %7742 = vmatprep.subr.bf16.mxu0 0
    %7743 = vmatpush2.bf16.msra.mxu0 %v7535
    %7744 = vmatprep.subr.bf16.mxu0 0
    %7745 = vmatpush2.bf16.msra.mxu0 %v7534
    %7746 = vmatprep.subr.bf16.mxu0 0
    %7747 = vmatpush2.bf16.msra.mxu0 %v7533
    %7748 = vmatprep.subr.bf16.mxu0 0
    %7749 = vmatpush2.bf16.msra.mxu0 %v7532
    %7750 = vmatprep.subr.bf16.mxu0 0
    %7751 = vmatpush2.bf16.msra.mxu0 %v7531
    %7752 = vmatprep.subr.bf16.mxu0 0
    %7753 = vmatpush2.bf16.msra.mxu0 %v7530
    %7754 = vmatprep.subr.bf16.mxu0 0
    %7755 = vmatpush2.bf16.msra.mxu0 %v7529
    %7756 = vmatprep.mubr.bf16.mxu0 %v7081
    %7757 = vmatmul.mubr.bf16.gmra.mxu0 %v7080
    %v7758 = vpop.f32.mrf.mxu0
    %v7759 = vadd.f32 %v7718, %v7758
    %v7760 = vpop.f32.mrf.mxu0
    %v7761 = vpop.f32.mrf.mxu0
    %v7762 = vadd.f32 %v7721, %v7761
    %v7763 = vpop.f32.mrf.mxu0
    %7764 = vdwg.mxu0
    %v7765 = vmax.f32 %v7759, 0.0
    %v7766 = vmax.f32 %v7762, 0.0
    %7767 = vst [vmem:[%s7] sm:$0xff] %v7765
    %7768 = vst [vmem:[%s7 + $0x8] sm:$0xff] %v7766
    // Predicated region
    $region54: #{fcnet_forward.1} parent=1 // pred_check
      _
    $region55: #{fcnet_forward.1} parent=1 // pred_check_branch
      %7770 = sbr.rel (0) target = $region57
    $region56: #{fcnet_forward.1} parent=1 // pred_region
      _
    $region57: #{fcnet_forward.1} parent=1 // pred_fallthru
      _
    // Predicated region
    $region58: #{fcnet_forward.1} parent=1 // pred_check
      _
    $region59: #{fcnet_forward.1} parent=1 // pred_check_branch
      %7772 = sbr.rel (0) target = $region61
    $region60: #{fcnet_forward.1} parent=1 // pred_region
      _
    $region61: #{fcnet_forward.1} parent=1 // pred_fallthru
      _
    %7773 = vsyncpa [#allocation3], 1
    %7774 = vsyncpa [#allocation5], 1
    %7775 = vsyncpa [#allocation8], 1
    %7776 = vsyncpa [#allocation11], 1

</llo_original>
